<compile_context>
chip_gen: v7x
topology: tpu7x:2x2x1
jax: 0.10.0
libtpu: 0.0.40
codegen_flags: <defaults>
</compile_context>

<pallas_src>
import functools

import jax
import jax.numpy as jnp
from jax.experimental import pallas as pl
from jax.experimental.pallas import tpu as pltpu


def _round_up(x, m):
    return ((x + m - 1) // m) * m


def _nbytes(shape, itemsize):
    n = 1
    for s in shape:
        n *= s
    return n * itemsize


# ----------------------------- Pallas kernel --------------------------------
def multvae_kernel(
    x_ref, eps_ref,
    w_e1_ref, b_e1_ref, w_e2_ref, b_e2_ref,
    w_heads_ref, b_heads_ref,
    w_d1_ref, b_d1_ref, w_d2_ref, b_d2_ref, w_d3_ref, b_d3_ref,
    recon_ref, mu_ref, logvar_ref,
    h1_acc_ref, z_ref, d_hid_ref,
    *, nin_tiles, latent_dim,
):
    f32 = jnp.float32
    bf16 = jnp.bfloat16
    n = pl.program_id(1)

    # ---- phase 1: encoder layer-1 reduction over item tiles ----------------
    @pl.when(n == 0)
    def _():
        h1_acc_ref[...] = jnp.zeros_like(h1_acc_ref)

    @pl.when(n < nin_tiles)
    def _():
        h1_acc_ref[...] += jnp.dot(
            x_ref[...], w_e1_ref[...], preferred_element_type=f32)

    # ---- epilogue (once per batch tile), part 1: encoder tail + reparam ----
    # Split in two pl.when blocks staged through z_ref so the [tb, H1/H2] f32
    # live chain ends here instead of spanning the whole epilogue (spill
    # control when tb is 256-512).
    @pl.when(n == nin_tiles - 1)
    def _():
        h1 = jnp.tanh(h1_acc_ref[...] + b_e1_ref[...])
        # eval-mode dropout == identity
        h2 = jnp.tanh(
            jnp.dot(h1.astype(bf16), w_e2_ref[...],
                    preferred_element_type=f32) + b_e2_ref[...])
        # Fused mu|logvar head: one [H2, 2L] matmul; L is a multiple of 128 so
        # the lane-axis split below is lane-aligned.
        heads = jnp.dot(h2.astype(bf16), w_heads_ref[...],
                        preferred_element_type=f32) + b_heads_ref[...]
        mu = heads[:, :latent_dim]
        logvar = heads[:, latent_dim:]
        std = jnp.exp(0.5 * logvar)
        z_ref[...] = mu + eps_ref[...] * std
        mu_ref[...] = mu
        logvar_ref[...] = logvar

    # ---- epilogue part 2: decoder hidden layers -----------------------------
    @pl.when(n == nin_tiles - 1)
    def _():
        d = jnp.tanh(
            jnp.dot(z_ref[...].astype(bf16), w_d1_ref[...],
                    preferred_element_type=f32) + b_d1_ref[...])
        d = jnp.tanh(
            jnp.dot(d.astype(bf16), w_d2_ref[...],
                    preferred_element_type=f32) + b_d2_ref[...])
        d_hid_ref[...] = d.astype(bf16)

    # ---- phase 2: decoder output, one lane-dense item tile per step --------
    # NOTE: recon block (b, 0) stays live-but-unwritten through the reduction
    # phases and is fully written at n == nin_tiles, before its block index
    # changes — rely on Pallas writing output blocks back only on block-index
    # change / at the end.
    @pl.when(n >= nin_tiles)
    def _():
        recon_ref[...] = (
            jnp.dot(d_hid_ref[...], w_d3_ref[...],
                    preferred_element_type=f32) + b_d3_ref[...]
        ).astype(recon_ref.dtype)


# ----------------------- one-time parameter preparation ----------------------
def prepare_multvae_params(params, *, num_items, tn=2048):
    """Hoisted out of the per-call path: pad to item-tile multiples, cast
    matmul operands to bf16, fuse the mu|logvar heads. Run once, offline."""
    f32, bf16 = jnp.float32, jnp.bfloat16
    tn_eff = min(tn, _round_up(num_items, 128))
    N_pad = _round_up(num_items, tn_eff)
    prep = {
        "w_e1": jnp.pad(params["w_e1"].astype(bf16),
                        ((0, N_pad - num_items), (0, 0))),
        "b_e1": params["b_e1"].astype(f32),
        "w_e2": params["w_e2"].astype(bf16),
        "b_e2": params["b_e2"].astype(f32),
        "w_heads": jnp.concatenate([params["w_mu"], params["w_lv"]],
                                   axis=1).astype(bf16),
        "b_heads": jnp.concatenate([params["b_mu"], params["b_lv"]],
                                   axis=1).astype(f32),
        "w_d1": params["w_d1"].astype(bf16),
        "b_d1": params["b_d1"].astype(f32),
        "w_d2": params["w_d2"].astype(bf16),
        "b_d2": params["b_d2"].astype(f32),
        "w_d3": jnp.pad(params["w_d3"].astype(bf16),
                        ((0, 0), (0, N_pad - num_items))),
        "b_d3": jnp.pad(params["b_d3"].astype(f32),
                        ((0, 0), (0, N_pad - num_items))),
    }
    return prep


# ----------------------------- JAX wrapper -----------------------------------
@functools.partial(jax.jit, static_argnames=("tb", "tn"))
def multvae_forward(x, eps, prep, *, tb=256, tn=2048):
    """x: [B, num_items] f32, eps: [B, latent_dim] f32, prep: prepared params.

    tb: batch tile (multiple of 8; 256 fills the 256-wide MXU on v6e/v7x).
    tn: item tile (multiple of 128; lane-dense recon / weight slabs). Must
        match the tn used in prepare_multvae_params.
    Returns (recon [B, N] bf16, mu [B, L] f32, logvar [B, L] f32).
    """
    B, N = x.shape
    L = eps.shape[1]
    H1 = prep["w_e1"].shape[1]
    H2 = prep["w_e2"].shape[1]

    f32, bf16 = jnp.float32, jnp.bfloat16

    assert tb % 8 == 0 and tn % 128 == 0, "tb must be %8, tn must be %128"
    assert L % 128 == 0 and H1 % 128 == 0 and H2 % 128 == 0, (
        "latent_dim / hidden_dims must be multiples of 128 (pad offline)")

    # --- item tiling (must match prepare_multvae_params) ---------------------
    tn_eff = min(tn, _round_up(N, 128))
    N_pad = _round_up(N, tn_eff)
    assert prep["w_e1"].shape[0] == N_pad, (
        "prep was built with a different tn / num_items")
    nin_tiles = N_pad // tn_eff
    nout_tiles = N_pad // tn_eff
    nin_m1 = nin_tiles - 1

    # --- batch tiling: as large as requested, but keep >= 2 tiles when the
    # batch allows it so the "parallel" axis can shard across v7x's two TCs.
    tb_eff = min(tb, _round_up(B, 8))
    if _round_up(B, tb_eff) // tb_eff < 2 and B > 8:
        tb_eff = _round_up((B + 1) // 2, 8)
    B_pad = _round_up(B, tb_eff)

    # --- per-call inputs (bf16 MXU operand for x; eps stays f32) -------------
    x_p = jnp.pad(x.astype(bf16), ((0, B_pad - B), (0, N_pad - N)))
    eps_p = jnp.pad(eps.astype(f32), ((0, B_pad - B), (0, 0)))

    def const_spec(shape):
        # Block index never changes -> DMA'd once, stays resident in VMEM.
        return pl.BlockSpec(shape, lambda b, n: (0, 0))

    in_specs = [
        # x: streamed by (batch tile, item tile); frozen at the last item tile
        # during the output phase so it is not re-DMA'd.
        pl.BlockSpec((tb_eff, tn_eff),
                     lambda b, n: (b, jnp.minimum(n, nin_m1))),
        pl.BlockSpec((tb_eff, L), lambda b, n: (b, 0)),             # eps
        pl.BlockSpec((tn_eff, H1),
                     lambda b, n: (jnp.minimum(n, nin_m1), 0)),     # w_e1
        const_spec((1, H1)),                                        # b_e1
        const_spec((H1, H2)),                                       # w_e2
        const_spec((1, H2)),                                        # b_e2
        const_spec((H2, 2 * L)),                                    # w_heads
        const_spec((1, 2 * L)),                                     # b_heads
        const_spec((L, H2)),                                        # w_d1
        const_spec((1, H2)),                                        # b_d1
        const_spec((H2, H1)),                                       # w_d2
        const_spec((1, H1)),                                        # b_d2
        pl.BlockSpec((H1, tn_eff),
                     lambda b, n: (0, jnp.maximum(n - nin_tiles, 0))),  # w_d3
        pl.BlockSpec((1, tn_eff),
                     lambda b, n: (0, jnp.maximum(n - nin_tiles, 0))),  # b_d3
    ]
    out_specs = (
        pl.BlockSpec((tb_eff, tn_eff),
                     lambda b, n: (b, jnp.maximum(n - nin_tiles, 0))),  # recon
        pl.BlockSpec((tb_eff, L), lambda b, n: (b, 0)),                 # mu
        pl.BlockSpec((tb_eff, L), lambda b, n: (b, 0)),                 # logvar
    )

    # --- explicit scoped-VMEM budget (double-buffered streamed tiles +
    # resident constants + scratch), with headroom; clamped to the smallest
    # physical VMEM (v7x: 64 MiB) and above v5e's 16 MiB default.
    streamed = 2 * (
        2 * _nbytes((tb_eff, tn_eff), 2)        # x + recon tiles (bf16)
        + _nbytes((tn_eff, H1), 2)              # w_e1 tile (bf16)
        + _nbytes((H1, tn_eff), 2)              # w_d3 tile (bf16)
        + _nbytes((1, tn_eff), 4)               # b_d3 tile (f32)
        + 3 * _nbytes((tb_eff, L), 4))          # eps, mu, logvar (f32)
    consts = 2 * (
        _nbytes((H1, H2), 2) + _nbytes((H2, 2 * L), 2)
        + _nbytes((L, H2), 2) + _nbytes((H2, H1), 2)
        + _nbytes((1, H1), 4) * 2 + _nbytes((1, H2), 4) * 2
        + _nbytes((1, 2 * L), 4))
    scratch = (_nbytes((tb_eff, H1), 4) + _nbytes((tb_eff, H1), 2)
               + _nbytes((tb_eff, L), 4))
    vmem_limit = int(min(max(2 * (streamed + consts + scratch), 32 << 20),
                         64 << 20))

    recon, mu, logvar = pl.pallas_call(
        functools.partial(multvae_kernel, nin_tiles=nin_tiles, latent_dim=L),
        out_shape=(
            jax.ShapeDtypeStruct((B_pad, N_pad), bf16),   # recon in bf16
            jax.ShapeDtypeStruct((B_pad, L), f32),
            jax.ShapeDtypeStruct((B_pad, L), f32),
        ),
        grid_spec=pltpu.PrefetchScalarGridSpec(
            num_scalar_prefetch=0,
            grid=(B_pad // tb_eff, nin_tiles + nout_tiles),
            in_specs=in_specs,
            out_specs=out_specs,
            scratch_shapes=[
                pltpu.VMEM((tb_eff, H1), f32),    # encoder layer-1 accumulator
                pltpu.VMEM((tb_eff, L), f32),     # z staging (epilogue split)
                pltpu.VMEM((tb_eff, H1), bf16),   # decoder hidden (MXU input)
            ],
        ),
        compiler_params=pltpu.CompilerParams(
            dimension_semantics=("parallel", "arbitrary"),
            vmem_limit_bytes=vmem_limit),
    )(x_p, eps_p,
      prep["w_e1"], prep["b_e1"], prep["w_e2"], prep["b_e2"],
      prep["w_heads"], prep["b_heads"],
      prep["w_d1"], prep["b_d1"], prep["w_d2"], prep["b_d2"],
      prep["w_d3"], prep["b_d3"])

    # Avoid an extra full-size HBM pass when shapes are already tile-aligned.
    if B_pad != B or N_pad != N:
        recon = recon[:B, :N]
        mu = mu[:B]
        logvar = logvar[:B]
    return recon, mu, logvar


# ----------------------------- parameter init --------------------------------
def _linear_params(key, fan_in, fan_out):
    """PyTorch-style uniform init U(-1/sqrt(fan_in), 1/sqrt(fan_in)).
    Stored as W:[fan_in, fan_out] (pre-transposed for x @ W), b:[1, fan_out]."""
    kw, kb = jax.random.split(key)
    bound = 1.0 / jnp.sqrt(jnp.float32(fan_in))
    w = jax.random.uniform(kw, (fan_in, fan_out), jnp.float32, -bound, bound)
    b = jax.random.uniform(kb, (1, fan_out), jnp.float32, -bound, bound)
    return w, b


def init_multvae_params(key, num_items, hidden_dims, latent_dim):
    keys = jax.random.split(key, 7)
    h1, h2 = hidden_dims
    p = {}
    p["w_e1"], p["b_e1"] = _linear_params(keys[0], num_items, h1)
    p["w_e2"], p["b_e2"] = _linear_params(keys[1], h1, h2)
    p["w_mu"], p["b_mu"] = _linear_params(keys[2], h2, latent_dim)
    p["w_lv"], p["b_lv"] = _linear_params(keys[3], h2, latent_dim)
    p["w_d1"], p["b_d1"] = _linear_params(keys[4], latent_dim, h2)
    p["w_d2"], p["b_d2"] = _linear_params(keys[5], h2, h1)
    p["w_d3"], p["b_d3"] = _linear_params(keys[6], h1, num_items)
    return p


# ----------------------------- pure-JAX reference -----------------------------
@jax.jit
def multvae_reference(x, eps, params):
    """Same numerics as the kernel (bf16 MXU inputs, f32 accumulation)."""
    f32, bf16 = jnp.float32, jnp.bfloat16

    def lin(a, w, b):
        return jnp.dot(a.astype(bf16), w.astype(bf16),
                       preferred_element_type=f32) + b.astype(f32)

    h = jnp.tanh(lin(x, params["w_e1"], params["b_e1"]))
    h = jnp.tanh(lin(h, params["w_e2"], params["b_e2"]))
    mu = lin(h, params["w_mu"], params["b_mu"])
    logvar = lin(h, params["w_lv"], params["b_lv"])
    z = mu + eps * jnp.exp(0.5 * logvar)
    d = jnp.tanh(lin(z, params["w_d1"], params["b_d1"]))
    d = jnp.tanh(lin(d, params["w_d2"], params["b_d2"]))
    recon = lin(d, params["w_d3"], params["b_d3"])
    return recon, mu, logvar


# ----------------------------- main -------------------------------------------
if __name__ == "__main__":
    # Small (but MXU-friendly) shapes consistent with the module:
    #   num_items=1024, hidden_dims=[256, 128], latent_dim=128, batch=256.
    # tn=512 -> 2 reduction + 2 output phases; default tb=256 is reduced to 128
    # automatically so the "parallel" batch axis has 2 tiles (v7x megacore).
    num_items = 1024
    hidden_dims = [256, 128]
    latent_dim = 128
    batch = 256
    tn = 512

    key = jax.random.PRNGKey(0)
    k_params, k_x, k_eps = jax.random.split(key, 3)

    params = init_multvae_params(k_params, num_items, hidden_dims, latent_dim)
    prep = prepare_multvae_params(params, num_items=num_items, tn=tn)

    # Binary-ish implicit-feedback input (bag-of-items).
    x = (jax.random.uniform(k_x, (batch, num_items)) < 0.1).astype(jnp.float32)
    eps = jax.random.normal(k_eps, (batch, latent_dim), jnp.float32)

    recon, mu, logvar = multvae_forward(x, eps, prep, tn=tn)
    jax.block_until_ready((recon, mu, logvar))

    assert recon.shape == (batch, num_items)
    assert mu.shape == (batch, latent_dim)
    assert logvar.shape == (batch, latent_dim)
    assert bool(jnp.all(jnp.isfinite(recon)))
    assert bool(jnp.all(jnp.isfinite(mu)))
    assert bool(jnp.all(jnp.isfinite(logvar)))

    recon_r, mu_r, logvar_r = multvae_reference(x, eps, params)
    assert bool(jnp.allclose(recon.astype(jnp.float32), recon_r,
                             atol=3e-2, rtol=3e-2))
    assert bool(jnp.allclose(mu, mu_r, atol=2e-2, rtol=2e-2))
    assert bool(jnp.allclose(logvar, logvar_r, atol=2e-2, rtol=2e-2))

    print("KERNEL_OK")
</pallas_src>

<mosaic_0001>
module attributes {stable_mosaic.version = 11 : i64} {
  func.func @multvae_kernel(%arg0: i32, %arg1: i32, %arg2: memref<128x512xbf16, #tpu.memory_space<vmem>>, %arg3: memref<128x128xf32, #tpu.memory_space<vmem>>, %arg4: memref<512x256xbf16, #tpu.memory_space<vmem>>, %arg5: memref<1x256xf32, #tpu.memory_space<vmem>>, %arg6: memref<256x128xbf16, #tpu.memory_space<vmem>>, %arg7: memref<1x128xf32, #tpu.memory_space<vmem>>, %arg8: memref<128x256xbf16, #tpu.memory_space<vmem>>, %arg9: memref<1x256xf32, #tpu.memory_space<vmem>>, %arg10: memref<128x128xbf16, #tpu.memory_space<vmem>>, %arg11: memref<1x128xf32, #tpu.memory_space<vmem>>, %arg12: memref<128x256xbf16, #tpu.memory_space<vmem>>, %arg13: memref<1x256xf32, #tpu.memory_space<vmem>>, %arg14: memref<256x512xbf16, #tpu.memory_space<vmem>>, %arg15: memref<1x512xf32, #tpu.memory_space<vmem>>, %arg16: memref<128x512xbf16, #tpu.memory_space<vmem>>, %arg17: memref<128x128xf32, #tpu.memory_space<vmem>>, %arg18: memref<128x128xf32, #tpu.memory_space<vmem>>, %arg19: memref<128x256xf32, #tpu.memory_space<vmem>>, %arg20: memref<128x128xf32, #tpu.memory_space<vmem>>, %arg21: memref<128x256xbf16, #tpu.memory_space<vmem>>) attributes {dimension_semantics = [#tpu.dimension_semantics<parallel>, #tpu.dimension_semantics<arbitrary>], iteration_bounds = array<i64: 2, 4>, scalar_prefetch = 0 : i64, scratch_operands = 3 : i64, tpu.core_type = #tpu.core_type<tc>, window_params = [{transform_indices = @transform_0, window_bounds = array<i64: 128, 512>}, {transform_indices = @transform_1, window_bounds = array<i64: 128, 128>}, {transform_indices = @transform_2, window_bounds = array<i64: 512, 256>}, {pipeline_mode = #tpu.pipeline_mode<synchronous>, transform_indices = @transform_3, window_bounds = array<i64: 1, 256>}, {pipeline_mode = #tpu.pipeline_mode<synchronous>, transform_indices = @transform_4, window_bounds = array<i64: 256, 128>}, {pipeline_mode = #tpu.pipeline_mode<synchronous>, transform_indices = @transform_5, window_bounds = array<i64: 1, 128>}, {pipeline_mode = #tpu.pipeline_mode<synchronous>, transform_indices = @transform_6, window_bounds = array<i64: 128, 256>}, {pipeline_mode = #tpu.pipeline_mode<synchronous>, transform_indices = @transform_7, window_bounds = array<i64: 1, 256>}, {pipeline_mode = #tpu.pipeline_mode<synchronous>, transform_indices = @transform_8, window_bounds = array<i64: 128, 128>}, {pipeline_mode = #tpu.pipeline_mode<synchronous>, transform_indices = @transform_9, window_bounds = array<i64: 1, 128>}, {pipeline_mode = #tpu.pipeline_mode<synchronous>, transform_indices = @transform_10, window_bounds = array<i64: 128, 256>}, {pipeline_mode = #tpu.pipeline_mode<synchronous>, transform_indices = @transform_11, window_bounds = array<i64: 1, 256>}, {transform_indices = @transform_12, window_bounds = array<i64: 256, 512>}, {transform_indices = @transform_13, window_bounds = array<i64: 1, 512>}, {transform_indices = @transform_14, window_bounds = array<i64: 128, 512>}, {transform_indices = @transform_15, window_bounds = array<i64: 128, 128>}, {transform_indices = @transform_16, window_bounds = array<i64: 128, 128>}]} {
    %c0_i32 = arith.constant 0 : i32
    %0 = arith.cmpi eq, %arg1, %c0_i32 : i32
    %1 = arith.extui %0 : i1 to i32
    %c0_i32_0 = arith.constant 0 : i32
    %2 = arith.cmpi ne, %1, %c0_i32_0 : i32
    scf.if %2 {
      %cst = arith.constant 0.000000e+00 : f32
      %15 = vector.broadcast %cst : f32 to vector<128x256xf32>
      %c0 = arith.constant 0 : index
      %c0_7 = arith.constant 0 : index
      %16 = vector.load %arg19[%c0, %c0_7] : memref<128x256xf32, #tpu.memory_space<vmem>>, vector<128x256xf32>
      tpu.vector_store %arg19[%c0, %c0_7], %15 {strides = array<i32>} : memref<128x256xf32, #tpu.memory_space<vmem>>, vector<128x256xf32>,
    } else {
    }
    %c2_i32 = arith.constant 2 : i32
    %3 = arith.cmpi slt, %arg1, %c2_i32 : i32
    %4 = arith.extui %3 : i1 to i32
    %c0_i32_1 = arith.constant 0 : i32
    %5 = arith.cmpi ne, %4, %c0_i32_1 : i32
    scf.if %5 {
      %c0 = arith.constant 0 : index
      %c0_7 = arith.constant 0 : index
      %15 = vector.load %arg19[%c0, %c0_7] : memref<128x256xf32, #tpu.memory_space<vmem>>, vector<128x256xf32>
      %c0_8 = arith.constant 0 : index
      %c0_9 = arith.constant 0 : index
      %16 = vector.load %arg2[%c0_8, %c0_9] : memref<128x512xbf16, #tpu.memory_space<vmem>>, vector<128x512xbf16>
      %c0_10 = arith.constant 0 : index
      %c0_11 = arith.constant 0 : index
      %17 = vector.load %arg4[%c0_10, %c0_11] : memref<512x256xbf16, #tpu.memory_space<vmem>>, vector<512x256xbf16>
      %cst = arith.constant dense<0.000000e+00> : vector<128x256xf32>
      %18 = tpu.matmul %16, %17, %cst {dimension_numbers = #tpu.dot_dimension_numbers<[1], [0], [0], [1], [0, 0, 1, 1], [], []>} : vector<128x512xbf16>, vector<512x256xbf16>, vector<128x256xf32> -> vector<128x256xf32>
      %19 = arith.addf %15, %18 : vector<128x256xf32>
      %c0_12 = arith.constant 0 : index
      %c0_13 = arith.constant 0 : index
      %20 = vector.load %arg19[%c0_12, %c0_13] : memref<128x256xf32, #tpu.memory_space<vmem>>, vector<128x256xf32>
      tpu.vector_store %arg19[%c0_12, %c0_13], %19 {strides = array<i32>} : memref<128x256xf32, #tpu.memory_space<vmem>>, vector<128x256xf32>,
    } else {
    }
    %c1_i32 = arith.constant 1 : i32
    %6 = arith.cmpi eq, %arg1, %c1_i32 : i32
    %7 = arith.extui %6 : i1 to i32
    %c0_i32_2 = arith.constant 0 : i32
    %8 = arith.cmpi ne, %7, %c0_i32_2 : i32
    scf.if %8 {
      %c0 = arith.constant 0 : index
      %c0_7 = arith.constant 0 : index
      %15 = vector.load %arg19[%c0, %c0_7] : memref<128x256xf32, #tpu.memory_space<vmem>>, vector<128x256xf32>
      %c0_8 = arith.constant 0 : index
      %c0_9 = arith.constant 0 : index
      %16 = vector.load %arg5[%c0_8, %c0_9] : memref<1x256xf32, #tpu.memory_space<vmem>>, vector<1x256xf32>
      %17 = vector.broadcast %16 : vector<1x256xf32> to vector<128x256xf32>
      %18 = arith.addf %15, %17 : vector<128x256xf32>
      %19 = math.tanh %18 : vector<128x256xf32>
      %20 = arith.truncf %19 : vector<128x256xf32> to vector<128x256xbf16>
      %c0_10 = arith.constant 0 : index
      %c0_11 = arith.constant 0 : index
      %21 = vector.load %arg6[%c0_10, %c0_11] : memref<256x128xbf16, #tpu.memory_space<vmem>>, vector<256x128xbf16>
      %cst = arith.constant dense<0.000000e+00> : vector<128x128xf32>
      %22 = tpu.matmul %20, %21, %cst {dimension_numbers = #tpu.dot_dimension_numbers<[1], [0], [0], [1], [0, 0, 1, 1], [], []>} : vector<128x256xbf16>, vector<256x128xbf16>, vector<128x128xf32> -> vector<128x128xf32>
      %c0_12 = arith.constant 0 : index
      %c0_13 = arith.constant 0 : index
      %23 = vector.load %arg7[%c0_12, %c0_13] : memref<1x128xf32, #tpu.memory_space<vmem>>, vector<1x128xf32>
      %24 = vector.broadcast %23 : vector<1x128xf32> to vector<128x128xf32>
      %25 = arith.addf %22, %24 : vector<128x128xf32>
      %26 = math.tanh %25 : vector<128x128xf32>
      %27 = arith.truncf %26 : vector<128x128xf32> to vector<128x128xbf16>
      %c0_14 = arith.constant 0 : index
      %c0_15 = arith.constant 0 : index
      %28 = vector.load %arg8[%c0_14, %c0_15] : memref<128x256xbf16, #tpu.memory_space<vmem>>, vector<128x256xbf16>
      %cst_16 = arith.constant dense<0.000000e+00> : vector<128x256xf32>
      %29 = tpu.matmul %27, %28, %cst_16 {dimension_numbers = #tpu.dot_dimension_numbers<[1], [0], [0], [1], [0, 0, 1, 1], [], []>} : vector<128x128xbf16>, vector<128x256xbf16>, vector<128x256xf32> -> vector<128x256xf32>
      %c0_17 = arith.constant 0 : index
      %c0_18 = arith.constant 0 : index
      %30 = vector.load %arg9[%c0_17, %c0_18] : memref<1x256xf32, #tpu.memory_space<vmem>>, vector<1x256xf32>
      %31 = vector.broadcast %30 : vector<1x256xf32> to vector<128x256xf32>
      %32 = arith.addf %29, %31 : vector<128x256xf32>
      %33 = vector.extract_strided_slice %32 {offsets = [0, 0], sizes = [128, 128], strides = [1, 1]} : vector<128x256xf32> to vector<128x128xf32>
      %34 = vector.extract_strided_slice %32 {offsets = [0, 128], sizes = [128, 128], strides = [1, 1]} : vector<128x256xf32> to vector<128x128xf32>
      %cst_19 = arith.constant 5.000000e-01 : f32
      %35 = vector.broadcast %cst_19 : f32 to vector<128x128xf32>
      %36 = arith.mulf %35, %34 : vector<128x128xf32>
      %37 = math.exp %36 : vector<128x128xf32>
      %c0_20 = arith.constant 0 : index
      %c0_21 = arith.constant 0 : index
      %38 = vector.load %arg3[%c0_20, %c0_21] : memref<128x128xf32, #tpu.memory_space<vmem>>, vector<128x128xf32>
      %39 = arith.mulf %38, %37 : vector<128x128xf32>
      %40 = arith.addf %33, %39 : vector<128x128xf32>
      %c0_22 = arith.constant 0 : index
      %c0_23 = arith.constant 0 : index
      %41 = vector.load %arg20[%c0_22, %c0_23] : memref<128x128xf32, #tpu.memory_space<vmem>>, vector<128x128xf32>
      tpu.vector_store %arg20[%c0_22, %c0_23], %40 {strides = array<i32>} : memref<128x128xf32, #tpu.memory_space<vmem>>, vector<128x128xf32>,
      %c0_24 = arith.constant 0 : index
      %c0_25 = arith.constant 0 : index
      %42 = vector.load %arg17[%c0_24, %c0_25] : memref<128x128xf32, #tpu.memory_space<vmem>>, vector<128x128xf32>
      tpu.vector_store %arg17[%c0_24, %c0_25], %33 {strides = array<i32>} : memref<128x128xf32, #tpu.memory_space<vmem>>, vector<128x128xf32>,
      %c0_26 = arith.constant 0 : index
      %c0_27 = arith.constant 0 : index
      %43 = vector.load %arg18[%c0_26, %c0_27] : memref<128x128xf32, #tpu.memory_space<vmem>>, vector<128x128xf32>
      tpu.vector_store %arg18[%c0_26, %c0_27], %34 {strides = array<i32>} : memref<128x128xf32, #tpu.memory_space<vmem>>, vector<128x128xf32>,
    } else {
    }
    %c1_i32_3 = arith.constant 1 : i32
    %9 = arith.cmpi eq, %arg1, %c1_i32_3 : i32
    %10 = arith.extui %9 : i1 to i32
    %c0_i32_4 = arith.constant 0 : i32
    %11 = arith.cmpi ne, %10, %c0_i32_4 : i32
    scf.if %11 {
      %c0 = arith.constant 0 : index
      %c0_7 = arith.constant 0 : index
      %15 = vector.load %arg20[%c0, %c0_7] : memref<128x128xf32, #tpu.memory_space<vmem>>, vector<128x128xf32>
      %16 = arith.truncf %15 : vector<128x128xf32> to vector<128x128xbf16>
      %c0_8 = arith.constant 0 : index
      %c0_9 = arith.constant 0 : index
      %17 = vector.load %arg10[%c0_8, %c0_9] : memref<128x128xbf16, #tpu.memory_space<vmem>>, vector<128x128xbf16>
      %cst = arith.constant dense<0.000000e+00> : vector<128x128xf32>
      %18 = tpu.matmul %16, %17, %cst {dimension_numbers = #tpu.dot_dimension_numbers<[1], [0], [0], [1], [0, 0, 1, 1], [], []>} : vector<128x128xbf16>, vector<128x128xbf16>, vector<128x128xf32> -> vector<128x128xf32>
      %c0_10 = arith.constant 0 : index
      %c0_11 = arith.constant 0 : index
      %19 = vector.load %arg11[%c0_10, %c0_11] : memref<1x128xf32, #tpu.memory_space<vmem>>, vector<1x128xf32>
      %20 = vector.broadcast %19 : vector<1x128xf32> to vector<128x128xf32>
      %21 = arith.addf %18, %20 : vector<128x128xf32>
      %22 = math.tanh %21 : vector<128x128xf32>
      %23 = arith.truncf %22 : vector<128x128xf32> to vector<128x128xbf16>
      %c0_12 = arith.constant 0 : index
      %c0_13 = arith.constant 0 : index
      %24 = vector.load %arg12[%c0_12, %c0_13] : memref<128x256xbf16, #tpu.memory_space<vmem>>, vector<128x256xbf16>
      %cst_14 = arith.constant dense<0.000000e+00> : vector<128x256xf32>
      %25 = tpu.matmul %23, %24, %cst_14 {dimension_numbers = #tpu.dot_dimension_numbers<[1], [0], [0], [1], [0, 0, 1, 1], [], []>} : vector<128x128xbf16>, vector<128x256xbf16>, vector<128x256xf32> -> vector<128x256xf32>
      %c0_15 = arith.constant 0 : index
      %c0_16 = arith.constant 0 : index
      %26 = vector.load %arg13[%c0_15, %c0_16] : memref<1x256xf32, #tpu.memory_space<vmem>>, vector<1x256xf32>
      %27 = vector.broadcast %26 : vector<1x256xf32> to vector<128x256xf32>
      %28 = arith.addf %25, %27 : vector<128x256xf32>
      %29 = math.tanh %28 : vector<128x256xf32>
      %30 = arith.truncf %29 : vector<128x256xf32> to vector<128x256xbf16>
      %c0_17 = arith.constant 0 : index
      %c0_18 = arith.constant 0 : index
      %31 = vector.load %arg21[%c0_17, %c0_18] : memref<128x256xbf16, #tpu.memory_space<vmem>>, vector<128x256xbf16>
      tpu.vector_store %arg21[%c0_17, %c0_18], %30 {strides = array<i32>} : memref<128x256xbf16, #tpu.memory_space<vmem>>, vector<128x256xbf16>,
    } else {
    }
    %c2_i32_5 = arith.constant 2 : i32
    %12 = arith.cmpi sge, %arg1, %c2_i32_5 : i32
    %13 = arith.extui %12 : i1 to i32
    %c0_i32_6 = arith.constant 0 : i32
    %14 = arith.cmpi ne, %13, %c0_i32_6 : i32
    scf.if %14 {
      %c0 = arith.constant 0 : index
      %c0_7 = arith.constant 0 : index
      %15 = vector.load %arg21[%c0, %c0_7] : memref<128x256xbf16, #tpu.memory_space<vmem>>, vector<128x256xbf16>
      %c0_8 = arith.constant 0 : index
      %c0_9 = arith.constant 0 : index
      %16 = vector.load %arg14[%c0_8, %c0_9] : memref<256x512xbf16, #tpu.memory_space<vmem>>, vector<256x512xbf16>
      %cst = arith.constant dense<0.000000e+00> : vector<128x512xf32>
      %17 = tpu.matmul %15, %16, %cst {dimension_numbers = #tpu.dot_dimension_numbers<[1], [0], [0], [1], [0, 0, 1, 1], [], []>} : vector<128x256xbf16>, vector<256x512xbf16>, vector<128x512xf32> -> vector<128x512xf32>
      %c0_10 = arith.constant 0 : index
      %c0_11 = arith.constant 0 : index
      %18 = vector.load %arg15[%c0_10, %c0_11] : memref<1x512xf32, #tpu.memory_space<vmem>>, vector<1x512xf32>
      %19 = vector.broadcast %18 : vector<1x512xf32> to vector<128x512xf32>
      %20 = arith.addf %17, %19 : vector<128x512xf32>
      %21 = arith.truncf %20 : vector<128x512xf32> to vector<128x512xbf16>
      %c0_12 = arith.constant 0 : index
      %c0_13 = arith.constant 0 : index
      %22 = vector.load %arg16[%c0_12, %c0_13] : memref<128x512xbf16, #tpu.memory_space<vmem>>, vector<128x512xbf16>
      tpu.vector_store %arg16[%c0_12, %c0_13], %21 {strides = array<i32>} : memref<128x512xbf16, #tpu.memory_space<vmem>>, vector<128x512xbf16>,
    } else {
    }
    return
  }
  func.func @transform_0(%arg0: i32, %arg1: i32) -> (i32, i32) {
    %c1_i32 = arith.constant 1 : i32
    %0 = arith.minsi %arg1, %c1_i32 : i32
    %c0_i32 = arith.constant 0 : i32
    return %arg0, %0 : i32, i32
  }
  func.func @transform_1(%arg0: i32, %arg1: i32) -> (i32, i32) {
    %c0_i32 = arith.constant 0 : i32
    %c0_i32_0 = arith.constant 0 : i32
    return %arg0, %c0_i32 : i32, i32
  }
  func.func @transform_2(%arg0: i32, %arg1: i32) -> (i32, i32) {
    %c1_i32 = arith.constant 1 : i32
    %0 = arith.minsi %arg1, %c1_i32 : i32
    %c0_i32 = arith.constant 0 : i32
    %c0_i32_0 = arith.constant 0 : i32
    return %0, %c0_i32 : i32, i32
  }
  func.func @transform_3(%arg0: i32, %arg1: i32) -> (i32, i32) {
    %c0_i32 = arith.constant 0 : i32
    %c0_i32_0 = arith.constant 0 : i32
    %c0_i32_1 = arith.constant 0 : i32
    return %c0_i32, %c0_i32_0 : i32, i32
  }
  func.func @transform_4(%arg0: i32, %arg1: i32) -> (i32, i32) {
    %c0_i32 = arith.constant 0 : i32
    %c0_i32_0 = arith.constant 0 : i32
    %c0_i32_1 = arith.constant 0 : i32
    return %c0_i32, %c0_i32_0 : i32, i32
  }
  func.func @transform_5(%arg0: i32, %arg1: i32) -> (i32, i32) {
    %c0_i32 = arith.constant 0 : i32
    %c0_i32_0 = arith.constant 0 : i32
    %c0_i32_1 = arith.constant 0 : i32
    return %c0_i32, %c0_i32_0 : i32, i32
  }
  func.func @transform_6(%arg0: i32, %arg1: i32) -> (i32, i32) {
    %c0_i32 = arith.constant 0 : i32
    %c0_i32_0 = arith.constant 0 : i32
    %c0_i32_1 = arith.constant 0 : i32
    return %c0_i32, %c0_i32_0 : i32, i32
  }
  func.func @transform_7(%arg0: i32, %arg1: i32) -> (i32, i32) {
    %c0_i32 = arith.constant 0 : i32
    %c0_i32_0 = arith.constant 0 : i32
    %c0_i32_1 = arith.constant 0 : i32
    return %c0_i32, %c0_i32_0 : i32, i32
  }
  func.func @transform_8(%arg0: i32, %arg1: i32) -> (i32, i32) {
    %c0_i32 = arith.constant 0 : i32
    %c0_i32_0 = arith.constant 0 : i32
    %c0_i32_1 = arith.constant 0 : i32
    return %c0_i32, %c0_i32_0 : i32, i32
  }
  func.func @transform_9(%arg0: i32, %arg1: i32) -> (i32, i32) {
    %c0_i32 = arith.constant 0 : i32
    %c0_i32_0 = arith.constant 0 : i32
    %c0_i32_1 = arith.constant 0 : i32
    return %c0_i32, %c0_i32_0 : i32, i32
  }
  func.func @transform_10(%arg0: i32, %arg1: i32) -> (i32, i32) {
    %c0_i32 = arith.constant 0 : i32
    %c0_i32_0 = arith.constant 0 : i32
    %c0_i32_1 = arith.constant 0 : i32
    return %c0_i32, %c0_i32_0 : i32, i32
  }
  func.func @transform_11(%arg0: i32, %arg1: i32) -> (i32, i32) {
    %c0_i32 = arith.constant 0 : i32
    %c0_i32_0 = arith.constant 0 : i32
    %c0_i32_1 = arith.constant 0 : i32
    return %c0_i32, %c0_i32_0 : i32, i32
  }
  func.func @transform_12(%arg0: i32, %arg1: i32) -> (i32, i32) {
    %c2_i32 = arith.constant 2 : i32
    %0 = arith.subi %arg1, %c2_i32 : i32
    %c0_i32 = arith.constant 0 : i32
    %1 = arith.maxsi %0, %c0_i32 : i32
    %c0_i32_0 = arith.constant 0 : i32
    %c0_i32_1 = arith.constant 0 : i32
    return %c0_i32_0, %1 : i32, i32
  }
  func.func @transform_13(%arg0: i32, %arg1: i32) -> (i32, i32) {
    %c2_i32 = arith.constant 2 : i32
    %0 = arith.subi %arg1, %c2_i32 : i32
    %c0_i32 = arith.constant 0 : i32
    %1 = arith.maxsi %0, %c0_i32 : i32
    %c0_i32_0 = arith.constant 0 : i32
    %c0_i32_1 = arith.constant 0 : i32
    return %c0_i32_0, %1 : i32, i32
  }
  func.func @transform_14(%arg0: i32, %arg1: i32) -> (i32, i32) {
    %c2_i32 = arith.constant 2 : i32
    %0 = arith.subi %arg1, %c2_i32 : i32
    %c0_i32 = arith.constant 0 : i32
    %1 = arith.maxsi %0, %c0_i32 : i32
    %c0_i32_0 = arith.constant 0 : i32
    return %arg0, %1 : i32, i32
  }
  func.func @transform_15(%arg0: i32, %arg1: i32) -> (i32, i32) {
    %c0_i32 = arith.constant 0 : i32
    %c0_i32_0 = arith.constant 0 : i32
    return %arg0, %c0_i32 : i32, i32
  }
  func.func @transform_16(%arg0: i32, %arg1: i32) -> (i32, i32) {
    %c0_i32 = arith.constant 0 : i32
    %c0_i32_0 = arith.constant 0 : i32
    return %arg0, %c0_i32 : i32, i32
  }
}

</mosaic_0001>

<llo_original>
// kernel: multvae_forward.1
$region0: #{multvae_forward.1}
  #allocation0 [shape = 'u32[]', space=smem, size = 0x4, offset = 0x4, fixed_abs, tag = 'smem constant byte address 0x4 - core index']
  #allocation1 [shape = 'u32[144,128]{1,0:T(1,128)}', space=vmem, size = 0x12000, scoped, tag = 'internal scratch']
  #allocation2 [shape = 'f32[128,256]{1,0:T(8,128)}', space=vmem, size = 0x20000, scoped, tag = 'scratch operand']
  #allocation3 [shape = 'f32[128,128]{1,0:T(8,128)}', space=vmem, size = 0x10000, scoped, tag = 'scratch operand']
  #allocation4 [shape = 'bf16[128,256]{1,0:T(16,128)(2,1)}', space=vmem, size = 0x10000, scoped, tag = 'scratch operand']
  %s0 = inlined_call_operand.vmem [shape: bf16[256,1024], index: 0, kind: input, shape index: {}]
  %s1 = inlined_call_operand.vmem [shape: f32[256,128], index: 1, kind: input, shape index: {}]
  %s2 = inlined_call_operand.vmem [shape: bf16[1024,256], index: 2, kind: input, shape index: {}]
  %s3 = inlined_call_operand.vmem [shape: f32[1,256], index: 3, kind: input, shape index: {}]
  %s4 = inlined_call_operand.vmem [shape: bf16[256,128], index: 4, kind: input, shape index: {}]
  %s5 = inlined_call_operand.vmem [shape: f32[1,128], index: 5, kind: input, shape index: {}]
  %s6 = inlined_call_operand.vmem [shape: bf16[128,256], index: 6, kind: input, shape index: {}]
  %s7 = inlined_call_operand.vmem [shape: f32[1,256], index: 7, kind: input, shape index: {}]
  %s8 = inlined_call_operand.vmem [shape: bf16[128,128], index: 8, kind: input, shape index: {}]
  %s9 = inlined_call_operand.vmem [shape: f32[1,128], index: 9, kind: input, shape index: {}]
  %s10 = inlined_call_operand.vmem [shape: bf16[128,256], index: 10, kind: input, shape index: {}]
  %s11 = inlined_call_operand.vmem [shape: f32[1,256], index: 11, kind: input, shape index: {}]
  %s12 = inlined_call_operand.vmem [shape: bf16[256,1024], index: 12, kind: input, shape index: {}]
  %s13 = inlined_call_operand.vmem [shape: f32[1,1024], index: 13, kind: input, shape index: {}]
  %s14 = inlined_call_operand.hbm [shape: bf16[256,1024], index: 14, kind: output, shape index: {0}]
  %s15 = inlined_call_operand.hbm [shape: f32[256,128], index: 15, kind: output, shape index: {1}]
  %s16 = inlined_call_operand.hbm [shape: f32[256,128], index: 16, kind: output, shape index: {2}]
  %17 = xla_tuple %s14, %s15, %s16
  %s18 = sld [smem:[#allocation0]]
  $region167: #{multvae_forward.1} parent=0
    _
  %s20 = ssub.s32 1, %s18
  %s21 = scalar_select 0, %s20, %s18
  $region1: #{multvae_forward.1} parent=0
    #allocation5 [shape = 'u8[262144]{0}', space=vmem, size = 0x40000, scoped, tag = 'input window, operand 0']
    #allocation6 [shape = 'u8[524288]{0}', space=vmem, size = 0x80000, scoped, tag = 'input window, operand 12']
    #allocation7 [shape = 'u8[262144]{0}', space=vmem, size = 0x40000, scoped, tag = 'output window, operand 0']
    #allocation8 [shape = 's32[2]{0}', space=sflag, size = 0x8, scoped, tag = 'scoped memory for multvae_forward.1']
    #allocation9 [shape = 'u8[131072]{0}', space=vmem, size = 0x20000, scoped, tag = 'output window, operand 1']
    #allocation10 [shape = 's32[2]{0}', space=sflag, size = 0x8, scoped, tag = 'scoped memory for multvae_forward.1']
    #allocation11 [shape = 'u8[131072]{0}', space=vmem, size = 0x20000, scoped, tag = 'output window, operand 2']
    %22 = vsyncpa [#allocation8], 0
    %s23 = scalar_lea.sflag [#allocation8], 1
    %24 = vsyncpa %s23, 0
    %25 = vsyncpa [#allocation10], 0
    %s26 = scalar_lea.sflag [#allocation10], 1
    %27 = vsyncpa %s26, 0
    loop: start=0, step=1, limit=10
    $region2: #{multvae_forward.1} parent=1 // loop_pre_header
      _
    $region3: #{multvae_forward.1} parent=1 // loop_header
      %s29 = sphi 0, %s33
      %p30 = scmp.ge.s32.totalorder %s29, 10
      %s36 = sphi 0, %s48
      %s37 = sphi 0, %s44
      %s38 = sphi 0, %s36
      %s39 = sphi 0, %s37
      %s40 = sphi 0, %s38
      %s41 = sphi 0, %s39
      %s57 = sphi 0, %s59
      %s60 = sphi 0, %s57
      %s61 = sphi 0, %s60
      %s77 = sphi 0, %s61
      %s83 = sphi 0, %s85
      %s86 = sphi 0, %s83
      %s87 = sphi 0, %s86
      %s103 = sphi 0, %s87
      %s113 = sphi 0, %s115
      %s116 = sphi 0, %s113
      %s117 = sphi 0, %s116
      %s133 = sphi 0, %s117
      %s137 = sphi 0, %s137
      %s139 = sphi 0, %s137
      %s140 = sphi 0, %s139
      %s154 = sphi 0, %s140
      %s158 = sphi 0, %s158
      %s160 = sphi 0, %s158
      %s161 = sphi 0, %s160
      %s175 = sphi 0, %s161
      %s179 = sphi 0, %s179
      %s181 = sphi 0, %s179
      %s182 = sphi 0, %s181
      %s196 = sphi 0, %s182
      %s200 = sphi 0, %s200
      %s202 = sphi 0, %s200
      %s203 = sphi 0, %s202
      %s217 = sphi 0, %s203
      %s221 = sphi 0, %s221
      %s223 = sphi 0, %s221
      %s224 = sphi 0, %s223
      %s238 = sphi 0, %s224
      %s242 = sphi 0, %s242
      %s244 = sphi 0, %s242
      %s245 = sphi 0, %s244
      %s259 = sphi 0, %s245
      %s263 = sphi 0, %s263
      %s265 = sphi 0, %s263
      %s266 = sphi 0, %s265
      %s280 = sphi 0, %s266
      %s284 = sphi 0, %s284
      %s286 = sphi 0, %s284
      %s287 = sphi 0, %s286
      %s301 = sphi 0, %s287
      %s305 = sphi 0, %s305
      %s307 = sphi 0, %s305
      %s308 = sphi 0, %s307
      %s322 = sphi 0, %s308
      %s334 = sphi 0, %s336
      %s337 = sphi 0, %s334
      %s338 = sphi 0, %s337
      %s354 = sphi 0, %s338
      %s366 = sphi 0, %s368
      %s369 = sphi 0, %s366
      %s370 = sphi 0, %s369
      %s386 = sphi 0, %s370
      %s400 = sphi 0, %s402
      %s403 = sphi 0, %s400
      %s404 = sphi 0, %s403
      %s420 = sphi 0, %s404
      %s426 = sphi 0, %s428
      %s429 = sphi 0, %s426
      %s430 = sphi 0, %s429
      %s446 = sphi 0, %s430
      %s452 = sphi 0, %s454
      %s455 = sphi 0, %s452
      %s456 = sphi 0, %s455
      %s472 = sphi 0, %s456
    $region4: #{multvae_forward.1} parent=1 // loop_header_branch
      %32 = sbr.rel (%p30) target = $region8
    $region5: #{multvae_forward.1} parent=1 // loop_body
      %s34 = ssub.s32 %s29, 1
      %s35 = ssub.s32 %s29, 2
      %s42 = sadd.s32 1, %s37
      %p43 = scmp.ge.s32.totalorder %s42, 4
      %s44 = scalar_select %p43, 0, %s42
      %s45 = sadd.s32 1, %s36
      %s46 = scalar_select %p43, %s45, %s36
      %p47 = scmp.ge.s32.totalorder %s46, 2
      %s48 = scalar_select %p47, 0, %s46
      %p49 = scmp.lt.s32.totalorder %s37, 1
      %s50 = scalar_select %p49, %s37, 1
      %p51 = scmp.lt.s32.totalorder %s44, 1
      %s52 = scalar_select %p51, %s44, 1
      %s53 = ssub.s32 %s36, %s48
      %s54 = ssub.s32 %s50, %s52
      %s55 = sor.u32 %s53, %s54
      %p56 = scmp.eq.s32.totalorder %s55, 0
      %s58 = sadd.s32 %s57, 1
      %s59 = scalar_select %p56, %s57, %s58
      %p62 = pneg %p56
      %p63 = scmp.eq.s32.totalorder %s29, 7
      %p64 = por %p62, %p63
      %p65 = scmp.ne.s32.totalorder %s57, %s60
      %p66 = scmp.eq.s32.totalorder %s29, 0
      %p67 = por %p65, %p66
      %p68 = scmp.ne.s32.totalorder %s57, %s60
      %p69 = scmp.eq.s32.totalorder %s34, 7
      %p70 = por %p68, %p69
      %p71 = scmp.ne.s32.totalorder %s60, %s61
      %p72 = scmp.eq.s32.totalorder %s34, 0
      %p73 = por %p71, %p72
      %p74 = scmp.ne.s32.totalorder %s60, %s61
      %p75 = scmp.eq.s32.totalorder %s35, 7
      %p76 = por %p74, %p75
      %p78 = scmp.ne.s32.totalorder %s61, %s77
      %p79 = scmp.eq.s32.totalorder %s35, 0
      %p80 = por %p78, %p79
      %s81 = ssub.s32 %s36, %s48
      %p82 = scmp.eq.s32.totalorder %s81, 0
      %s84 = sadd.s32 %s83, 1
      %s85 = scalar_select %p82, %s83, %s84
      %p88 = pneg %p82
      %p89 = scmp.eq.s32.totalorder %s29, 7
      %p90 = por %p88, %p89
      %p91 = scmp.ne.s32.totalorder %s83, %s86
      %p92 = scmp.eq.s32.totalorder %s29, 0
      %p93 = por %p91, %p92
      %p94 = scmp.ne.s32.totalorder %s83, %s86
      %p95 = scmp.eq.s32.totalorder %s34, 7
      %p96 = por %p94, %p95
      %p97 = scmp.ne.s32.totalorder %s86, %s87
      %p98 = scmp.eq.s32.totalorder %s34, 0
      %p99 = por %p97, %p98
      %p100 = scmp.ne.s32.totalorder %s86, %s87
      %p101 = scmp.eq.s32.totalorder %s35, 7
      %p102 = por %p100, %p101
      %p104 = scmp.ne.s32.totalorder %s87, %s103
      %p105 = scmp.eq.s32.totalorder %s35, 0
      %p106 = por %p104, %p105
      %p107 = scmp.lt.s32.totalorder %s37, 1
      %s108 = scalar_select %p107, %s37, 1
      %p109 = scmp.lt.s32.totalorder %s44, 1
      %s110 = scalar_select %p109, %s44, 1
      %s111 = ssub.s32 %s108, %s110
      %p112 = scmp.eq.s32.totalorder %s111, 0
      %s114 = sadd.s32 %s113, 1
      %s115 = scalar_select %p112, %s113, %s114
      %p118 = pneg %p112
      %p119 = scmp.eq.s32.totalorder %s29, 7
      %p120 = por %p118, %p119
      %p121 = scmp.ne.s32.totalorder %s113, %s116
      %p122 = scmp.eq.s32.totalorder %s29, 0
      %p123 = por %p121, %p122
      %p124 = scmp.ne.s32.totalorder %s113, %s116
      %p125 = scmp.eq.s32.totalorder %s34, 7
      %p126 = por %p124, %p125
      %p127 = scmp.ne.s32.totalorder %s116, %s117
      %p128 = scmp.eq.s32.totalorder %s34, 0
      %p129 = por %p127, %p128
      %p130 = scmp.ne.s32.totalorder %s116, %s117
      %p131 = scmp.eq.s32.totalorder %s35, 7
      %p132 = por %p130, %p131
      %p134 = scmp.ne.s32.totalorder %s117, %s133
      %p135 = scmp.eq.s32.totalorder %s35, 0
      %p136 = por %p134, %p135
      %s138 = sadd.s32 %s137, 1
      %p141 = scmp.eq.s32.totalorder %s29, 7
      %p142 = scmp.ne.s32.totalorder %s137, %s139
      %p143 = scmp.eq.s32.totalorder %s29, 0
      %p144 = por %p142, %p143
      %p145 = scmp.ne.s32.totalorder %s137, %s139
      %p146 = scmp.eq.s32.totalorder %s34, 7
      %p147 = por %p145, %p146
      %p148 = scmp.ne.s32.totalorder %s139, %s140
      %p149 = scmp.eq.s32.totalorder %s34, 0
      %p150 = por %p148, %p149
      %p151 = scmp.ne.s32.totalorder %s139, %s140
      %p152 = scmp.eq.s32.totalorder %s35, 7
      %p153 = por %p151, %p152
      %p155 = scmp.ne.s32.totalorder %s140, %s154
      %p156 = scmp.eq.s32.totalorder %s35, 0
      %p157 = por %p155, %p156
      %s159 = sadd.s32 %s158, 1
      %p162 = scmp.eq.s32.totalorder %s29, 7
      %p163 = scmp.ne.s32.totalorder %s158, %s160
      %p164 = scmp.eq.s32.totalorder %s29, 0
      %p165 = por %p163, %p164
      %p166 = scmp.ne.s32.totalorder %s158, %s160
      %p167 = scmp.eq.s32.totalorder %s34, 7
      %p168 = por %p166, %p167
      %p169 = scmp.ne.s32.totalorder %s160, %s161
      %p170 = scmp.eq.s32.totalorder %s34, 0
      %p171 = por %p169, %p170
      %p172 = scmp.ne.s32.totalorder %s160, %s161
      %p173 = scmp.eq.s32.totalorder %s35, 7
      %p174 = por %p172, %p173
      %p176 = scmp.ne.s32.totalorder %s161, %s175
      %p177 = scmp.eq.s32.totalorder %s35, 0
      %p178 = por %p176, %p177
      %s180 = sadd.s32 %s179, 1
      %p183 = scmp.eq.s32.totalorder %s29, 7
      %p184 = scmp.ne.s32.totalorder %s179, %s181
      %p185 = scmp.eq.s32.totalorder %s29, 0
      %p186 = por %p184, %p185
      %p187 = scmp.ne.s32.totalorder %s179, %s181
      %p188 = scmp.eq.s32.totalorder %s34, 7
      %p189 = por %p187, %p188
      %p190 = scmp.ne.s32.totalorder %s181, %s182
      %p191 = scmp.eq.s32.totalorder %s34, 0
      %p192 = por %p190, %p191
      %p193 = scmp.ne.s32.totalorder %s181, %s182
      %p194 = scmp.eq.s32.totalorder %s35, 7
      %p195 = por %p193, %p194
      %p197 = scmp.ne.s32.totalorder %s182, %s196
      %p198 = scmp.eq.s32.totalorder %s35, 0
      %p199 = por %p197, %p198
      %s201 = sadd.s32 %s200, 1
      %p204 = scmp.eq.s32.totalorder %s29, 7
      %p205 = scmp.ne.s32.totalorder %s200, %s202
      %p206 = scmp.eq.s32.totalorder %s29, 0
      %p207 = por %p205, %p206
      %p208 = scmp.ne.s32.totalorder %s200, %s202
      %p209 = scmp.eq.s32.totalorder %s34, 7
      %p210 = por %p208, %p209
      %p211 = scmp.ne.s32.totalorder %s202, %s203
      %p212 = scmp.eq.s32.totalorder %s34, 0
      %p213 = por %p211, %p212
      %p214 = scmp.ne.s32.totalorder %s202, %s203
      %p215 = scmp.eq.s32.totalorder %s35, 7
      %p216 = por %p214, %p215
      %p218 = scmp.ne.s32.totalorder %s203, %s217
      %p219 = scmp.eq.s32.totalorder %s35, 0
      %p220 = por %p218, %p219
      %s222 = sadd.s32 %s221, 1
      %p225 = scmp.eq.s32.totalorder %s29, 7
      %p226 = scmp.ne.s32.totalorder %s221, %s223
      %p227 = scmp.eq.s32.totalorder %s29, 0
      %p228 = por %p226, %p227
      %p229 = scmp.ne.s32.totalorder %s221, %s223
      %p230 = scmp.eq.s32.totalorder %s34, 7
      %p231 = por %p229, %p230
      %p232 = scmp.ne.s32.totalorder %s223, %s224
      %p233 = scmp.eq.s32.totalorder %s34, 0
      %p234 = por %p232, %p233
      %p235 = scmp.ne.s32.totalorder %s223, %s224
      %p236 = scmp.eq.s32.totalorder %s35, 7
      %p237 = por %p235, %p236
      %p239 = scmp.ne.s32.totalorder %s224, %s238
      %p240 = scmp.eq.s32.totalorder %s35, 0
      %p241 = por %p239, %p240
      %s243 = sadd.s32 %s242, 1
      %p246 = scmp.eq.s32.totalorder %s29, 7
      %p247 = scmp.ne.s32.totalorder %s242, %s244
      %p248 = scmp.eq.s32.totalorder %s29, 0
      %p249 = por %p247, %p248
      %p250 = scmp.ne.s32.totalorder %s242, %s244
      %p251 = scmp.eq.s32.totalorder %s34, 7
      %p252 = por %p250, %p251
      %p253 = scmp.ne.s32.totalorder %s244, %s245
      %p254 = scmp.eq.s32.totalorder %s34, 0
      %p255 = por %p253, %p254
      %p256 = scmp.ne.s32.totalorder %s244, %s245
      %p257 = scmp.eq.s32.totalorder %s35, 7
      %p258 = por %p256, %p257
      %p260 = scmp.ne.s32.totalorder %s245, %s259
      %p261 = scmp.eq.s32.totalorder %s35, 0
      %p262 = por %p260, %p261
      %s264 = sadd.s32 %s263, 1
      %p267 = scmp.eq.s32.totalorder %s29, 7
      %p268 = scmp.ne.s32.totalorder %s263, %s265
      %p269 = scmp.eq.s32.totalorder %s29, 0
      %p270 = por %p268, %p269
      %p271 = scmp.ne.s32.totalorder %s263, %s265
      %p272 = scmp.eq.s32.totalorder %s34, 7
      %p273 = por %p271, %p272
      %p274 = scmp.ne.s32.totalorder %s265, %s266
      %p275 = scmp.eq.s32.totalorder %s34, 0
      %p276 = por %p274, %p275
      %p277 = scmp.ne.s32.totalorder %s265, %s266
      %p278 = scmp.eq.s32.totalorder %s35, 7
      %p279 = por %p277, %p278
      %p281 = scmp.ne.s32.totalorder %s266, %s280
      %p282 = scmp.eq.s32.totalorder %s35, 0
      %p283 = por %p281, %p282
      %s285 = sadd.s32 %s284, 1
      %p288 = scmp.eq.s32.totalorder %s29, 7
      %p289 = scmp.ne.s32.totalorder %s284, %s286
      %p290 = scmp.eq.s32.totalorder %s29, 0
      %p291 = por %p289, %p290
      %p292 = scmp.ne.s32.totalorder %s284, %s286
      %p293 = scmp.eq.s32.totalorder %s34, 7
      %p294 = por %p292, %p293
      %p295 = scmp.ne.s32.totalorder %s286, %s287
      %p296 = scmp.eq.s32.totalorder %s34, 0
      %p297 = por %p295, %p296
      %p298 = scmp.ne.s32.totalorder %s286, %s287
      %p299 = scmp.eq.s32.totalorder %s35, 7
      %p300 = por %p298, %p299
      %p302 = scmp.ne.s32.totalorder %s287, %s301
      %p303 = scmp.eq.s32.totalorder %s35, 0
      %p304 = por %p302, %p303
      %s306 = sadd.s32 %s305, 1
      %p309 = scmp.eq.s32.totalorder %s29, 7
      %p310 = scmp.ne.s32.totalorder %s305, %s307
      %p311 = scmp.eq.s32.totalorder %s29, 0
      %p312 = por %p310, %p311
      %p313 = scmp.ne.s32.totalorder %s305, %s307
      %p314 = scmp.eq.s32.totalorder %s34, 7
      %p315 = por %p313, %p314
      %p316 = scmp.ne.s32.totalorder %s307, %s308
      %p317 = scmp.eq.s32.totalorder %s34, 0
      %p318 = por %p316, %p317
      %p319 = scmp.ne.s32.totalorder %s307, %s308
      %p320 = scmp.eq.s32.totalorder %s35, 7
      %p321 = por %p319, %p320
      %p323 = scmp.ne.s32.totalorder %s308, %s322
      %p324 = scmp.eq.s32.totalorder %s35, 0
      %p325 = por %p323, %p324
      %s326 = ssub.s32 %s37, 2
      %p327 = scmp.gt.s32.totalorder %s326, 0
      %s328 = scalar_select %p327, %s326, 0
      %s329 = ssub.s32 %s44, 2
      %p330 = scmp.gt.s32.totalorder %s329, 0
      %s331 = scalar_select %p330, %s329, 0
      %s332 = ssub.s32 %s328, %s331
      %p333 = scmp.eq.s32.totalorder %s332, 0
      %s335 = sadd.s32 %s334, 1
      %s336 = scalar_select %p333, %s334, %s335
      %p339 = pneg %p333
      %p340 = scmp.eq.s32.totalorder %s29, 7
      %p341 = por %p339, %p340
      %p342 = scmp.ne.s32.totalorder %s334, %s337
      %p343 = scmp.eq.s32.totalorder %s29, 0
      %p344 = por %p342, %p343
      %p345 = scmp.ne.s32.totalorder %s334, %s337
      %p346 = scmp.eq.s32.totalorder %s34, 7
      %p347 = por %p345, %p346
      %p348 = scmp.ne.s32.totalorder %s337, %s338
      %p349 = scmp.eq.s32.totalorder %s34, 0
      %p350 = por %p348, %p349
      %p351 = scmp.ne.s32.totalorder %s337, %s338
      %p352 = scmp.eq.s32.totalorder %s35, 7
      %p353 = por %p351, %p352
      %p355 = scmp.ne.s32.totalorder %s338, %s354
      %p356 = scmp.eq.s32.totalorder %s35, 0
      %p357 = por %p355, %p356
      %s358 = ssub.s32 %s37, 2
      %p359 = scmp.gt.s32.totalorder %s358, 0
      %s360 = scalar_select %p359, %s358, 0
      %s361 = ssub.s32 %s44, 2
      %p362 = scmp.gt.s32.totalorder %s361, 0
      %s363 = scalar_select %p362, %s361, 0
      %s364 = ssub.s32 %s360, %s363
      %p365 = scmp.eq.s32.totalorder %s364, 0
      %s367 = sadd.s32 %s366, 1
      %s368 = scalar_select %p365, %s366, %s367
      %p371 = pneg %p365
      %p372 = scmp.eq.s32.totalorder %s29, 7
      %p373 = por %p371, %p372
      %p374 = scmp.ne.s32.totalorder %s366, %s369
      %p375 = scmp.eq.s32.totalorder %s29, 0
      %p376 = por %p374, %p375
      %p377 = scmp.ne.s32.totalorder %s366, %s369
      %p378 = scmp.eq.s32.totalorder %s34, 7
      %p379 = por %p377, %p378
      %p380 = scmp.ne.s32.totalorder %s369, %s370
      %p381 = scmp.eq.s32.totalorder %s34, 0
      %p382 = por %p380, %p381
      %p383 = scmp.ne.s32.totalorder %s369, %s370
      %p384 = scmp.eq.s32.totalorder %s35, 7
      %p385 = por %p383, %p384
      %p387 = scmp.ne.s32.totalorder %s370, %s386
      %p388 = scmp.eq.s32.totalorder %s35, 0
      %p389 = por %p387, %p388
      %s390 = ssub.s32 %s37, 2
      %p391 = scmp.gt.s32.totalorder %s390, 0
      %s392 = scalar_select %p391, %s390, 0
      %s393 = ssub.s32 %s44, 2
      %p394 = scmp.gt.s32.totalorder %s393, 0
      %s395 = scalar_select %p394, %s393, 0
      %s396 = ssub.s32 %s36, %s48
      %s397 = ssub.s32 %s392, %s395
      %s398 = sor.u32 %s396, %s397
      %p399 = scmp.eq.s32.totalorder %s398, 0
      %s401 = sadd.s32 %s400, 1
      %s402 = scalar_select %p399, %s400, %s401
      %p405 = pneg %p399
      %p406 = scmp.eq.s32.totalorder %s29, 7
      %p407 = por %p405, %p406
      %p408 = scmp.ne.s32.totalorder %s400, %s403
      %p409 = scmp.eq.s32.totalorder %s29, 0
      %p410 = por %p408, %p409
      %p411 = scmp.ne.s32.totalorder %s400, %s403
      %p412 = scmp.eq.s32.totalorder %s34, 7
      %p413 = por %p411, %p412
      %p414 = scmp.ne.s32.totalorder %s403, %s404
      %p415 = scmp.eq.s32.totalorder %s34, 0
      %p416 = por %p414, %p415
      %p417 = scmp.ne.s32.totalorder %s403, %s404
      %p418 = scmp.eq.s32.totalorder %s35, 7
      %p419 = por %p417, %p418
      %p421 = scmp.ne.s32.totalorder %s404, %s420
      %p422 = scmp.eq.s32.totalorder %s35, 0
      %p423 = por %p421, %p422
      %s424 = ssub.s32 %s36, %s48
      %p425 = scmp.eq.s32.totalorder %s424, 0
      %s427 = sadd.s32 %s426, 1
      %s428 = scalar_select %p425, %s426, %s427
      %p431 = pneg %p425
      %p432 = scmp.eq.s32.totalorder %s29, 7
      %p433 = por %p431, %p432
      %p434 = scmp.ne.s32.totalorder %s426, %s429
      %p435 = scmp.eq.s32.totalorder %s29, 0
      %p436 = por %p434, %p435
      %p437 = scmp.ne.s32.totalorder %s426, %s429
      %p438 = scmp.eq.s32.totalorder %s34, 7
      %p439 = por %p437, %p438
      %p440 = scmp.ne.s32.totalorder %s429, %s430
      %p441 = scmp.eq.s32.totalorder %s34, 0
      %p442 = por %p440, %p441
      %p443 = scmp.ne.s32.totalorder %s429, %s430
      %p444 = scmp.eq.s32.totalorder %s35, 7
      %p445 = por %p443, %p444
      %p447 = scmp.ne.s32.totalorder %s430, %s446
      %p448 = scmp.eq.s32.totalorder %s35, 0
      %p449 = por %p447, %p448
      %s450 = ssub.s32 %s36, %s48
      %p451 = scmp.eq.s32.totalorder %s450, 0
      %s453 = sadd.s32 %s452, 1
      %s454 = scalar_select %p451, %s452, %s453
      %p457 = pneg %p451
      %p458 = scmp.eq.s32.totalorder %s29, 7
      %p459 = por %p457, %p458
      %p460 = scmp.ne.s32.totalorder %s452, %s455
      %p461 = scmp.eq.s32.totalorder %s29, 0
      %p462 = por %p460, %p461
      %p463 = scmp.ne.s32.totalorder %s452, %s455
      %p464 = scmp.eq.s32.totalorder %s34, 7
      %p465 = por %p463, %p464
      %p466 = scmp.ne.s32.totalorder %s455, %s456
      %p467 = scmp.eq.s32.totalorder %s34, 0
      %p468 = por %p466, %p467
      %p469 = scmp.ne.s32.totalorder %s455, %s456
      %p470 = scmp.eq.s32.totalorder %s35, 7
      %p471 = por %p469, %p470
      %p473 = scmp.ne.s32.totalorder %s456, %s472
      %p474 = scmp.eq.s32.totalorder %s35, 0
      %p475 = por %p473, %p474
      %p476 = scmp.le.s32.totalorder 1, %s29
      %p477 = scmp.lt.s32.totalorder %s29, 9
      %p478 = pnand %p476, %p477
      %p479 = pneg %p478
      // Predicated region
      $region9: #{multvae_forward.1} parent=5 // pred_check
        _
      $region10: #{multvae_forward.1} parent=5 // pred_check_branch
        %481 = sbr.rel (%p478) target = $region12
      $region11: #{multvae_forward.1} parent=5 // pred_region
        %s482 = ssub.s32 %s29, 1
        // Predicated region
        $region13: #{multvae_forward.1} parent=11 // pred_check
          %p483 = pneg %p150
        $region14: #{multvae_forward.1} parent=11 // pred_check_branch
          %485 = sbr.rel (%p483) target = $region16
        $region15: #{multvae_forward.1} parent=11 // pred_region
          _
        $region16: #{multvae_forward.1} parent=11 // pred_fallthru
          _
        // Predicated region
        $region17: #{multvae_forward.1} parent=11 // pred_check
          %p486 = pneg %p171
        $region18: #{multvae_forward.1} parent=11 // pred_check_branch
          %488 = sbr.rel (%p486) target = $region20
        $region19: #{multvae_forward.1} parent=11 // pred_region
          _
        $region20: #{multvae_forward.1} parent=11 // pred_fallthru
          _
        // Predicated region
        $region21: #{multvae_forward.1} parent=11 // pred_check
          %p489 = pneg %p192
        $region22: #{multvae_forward.1} parent=11 // pred_check_branch
          %491 = sbr.rel (%p489) target = $region24
        $region23: #{multvae_forward.1} parent=11 // pred_region
          _
        $region24: #{multvae_forward.1} parent=11 // pred_fallthru
          _
        // Predicated region
        $region25: #{multvae_forward.1} parent=11 // pred_check
          %p492 = pneg %p213
        $region26: #{multvae_forward.1} parent=11 // pred_check_branch
          %494 = sbr.rel (%p492) target = $region28
        $region27: #{multvae_forward.1} parent=11 // pred_region
          _
        $region28: #{multvae_forward.1} parent=11 // pred_fallthru
          _
        // Predicated region
        $region29: #{multvae_forward.1} parent=11 // pred_check
          %p495 = pneg %p234
        $region30: #{multvae_forward.1} parent=11 // pred_check_branch
          %497 = sbr.rel (%p495) target = $region32
        $region31: #{multvae_forward.1} parent=11 // pred_region
          _
        $region32: #{multvae_forward.1} parent=11 // pred_fallthru
          _
        // Predicated region
        $region33: #{multvae_forward.1} parent=11 // pred_check
          %p498 = pneg %p255
        $region34: #{multvae_forward.1} parent=11 // pred_check_branch
          %500 = sbr.rel (%p498) target = $region36
        $region35: #{multvae_forward.1} parent=11 // pred_region
          _
        $region36: #{multvae_forward.1} parent=11 // pred_fallthru
          _
        // Predicated region
        $region37: #{multvae_forward.1} parent=11 // pred_check
          %p501 = pneg %p276
        $region38: #{multvae_forward.1} parent=11 // pred_check_branch
          %503 = sbr.rel (%p501) target = $region40
        $region39: #{multvae_forward.1} parent=11 // pred_region
          _
        $region40: #{multvae_forward.1} parent=11 // pred_fallthru
          _
        // Predicated region
        $region41: #{multvae_forward.1} parent=11 // pred_check
          %p504 = pneg %p297
        $region42: #{multvae_forward.1} parent=11 // pred_check_branch
          %506 = sbr.rel (%p504) target = $region44
        $region43: #{multvae_forward.1} parent=11 // pred_region
          _
        $region44: #{multvae_forward.1} parent=11 // pred_fallthru
          _
        // Predicated region
        $region45: #{multvae_forward.1} parent=11 // pred_check
          %p507 = pneg %p318
        $region46: #{multvae_forward.1} parent=11 // pred_check_branch
          %509 = sbr.rel (%p507) target = $region48
        $region47: #{multvae_forward.1} parent=11 // pred_region
          _
        $region48: #{multvae_forward.1} parent=11 // pred_fallthru
          _
      $region12: #{multvae_forward.1} parent=5 // pred_fallthru
        _
      %p510 = scmp.lt.s32.totalorder %s29, 8
      // Predicated region
      $region49: #{multvae_forward.1} parent=5 // pred_check
        %p511 = pneg %p510
      $region50: #{multvae_forward.1} parent=5 // pred_check_branch
        %513 = sbr.rel (%p511) target = $region52
      $region51: #{multvae_forward.1} parent=5 // pred_region
        // Predicated region
        $region53: #{multvae_forward.1} parent=51 // pred_check
          %p514 = pneg %p67
        $region54: #{multvae_forward.1} parent=51 // pred_check_branch
          %516 = sbr.rel (%p514) target = $region56
        $region55: #{multvae_forward.1} parent=51 // pred_region
          %s517 = sand.u32 %s57, 1
          %s518 = sand.u32 %s57, 1
          %s519 = smul.addr %s518, 256
          %s520 = scalar_lea.vmem [#allocation5], %s519
          %p521 = scmp.lt.s32.totalorder %s37, 1
          %s522 = scalar_select %p521, %s37, 1
          %s523 = smul.u32 16, %s36
          %s524 = smul.u32 4, %s522
          %s525 = smul.addr %s523, 8
          %s526 = sadd.s32 %s524, %s525
          %s527 = smul.addr %s526, 4
          %s528 = scalar_lea.vmem %s0, %s527
          // Predicated region
          $region57: #{multvae_forward.1} parent=55 // pred_check
            _
          $region58: #{multvae_forward.1} parent=55 // pred_check_branch
            %530 = sbr.rel (0) target = $region60
          $region59: #{multvae_forward.1} parent=55 // pred_region
            // Predicated region
            $region61: #{multvae_forward.1} parent=59 // pred_check
              _
            $region62: #{multvae_forward.1} parent=59 // pred_check_branch
              %532 = sbr.rel (0) target = $region64
            $region63: #{multvae_forward.1} parent=59 // pred_region
              loop: start=0, step=1, limit=1
              $region65: #{multvae_forward.1} parent=63 // loop_pre_header
                _
              $region66: #{multvae_forward.1} parent=63 // loop_header
                %s534 = sphi 0, %s538
                %p535 = scmp.ge.s32.totalorder %s534, 1
                %s539 = sphi %s528, %s528
                %s540 = sphi %s520, %s520
              $region67: #{multvae_forward.1} parent=63 // loop_header_branch
                %537 = sbr.rel (%p535) target = $region71
              $region68: #{multvae_forward.1} parent=63 // loop_body
                %v541 = vld [vmem:[%s539] sm:$0xff]
                %542 = vst [vmem:[%s540] sm:$0xff] %v541
                %v543 = vld [vmem:[%s539 + $0x8] sm:$0xff]
                %544 = vst [vmem:[%s540 + $0x8] sm:$0xff] %v543
                %v545 = vld [vmem:[%s539 + $0x20] sm:$0xff]
                %546 = vst [vmem:[%s540 + $0x10] sm:$0xff] %v545
                %v547 = vld [vmem:[%s539 + $0x28] sm:$0xff]
                %548 = vst [vmem:[%s540 + $0x18] sm:$0xff] %v547
                %v549 = vld [vmem:[%s539 + $0x40] sm:$0xff]
                %550 = vst [vmem:[%s540 + $0x20] sm:$0xff] %v549
                %v551 = vld [vmem:[%s539 + $0x48] sm:$0xff]
                %552 = vst [vmem:[%s540 + $0x28] sm:$0xff] %v551
                %v553 = vld [vmem:[%s539 + $0x60] sm:$0xff]
                %554 = vst [vmem:[%s540 + $0x30] sm:$0xff] %v553
                %v555 = vld [vmem:[%s539 + $0x68] sm:$0xff]
                %556 = vst [vmem:[%s540 + $0x38] sm:$0xff] %v555
                %v557 = vld [vmem:[%s539 + $0x80] sm:$0xff]
                %558 = vst [vmem:[%s540 + $0x40] sm:$0xff] %v557
                %v559 = vld [vmem:[%s539 + $0x88] sm:$0xff]
                %560 = vst [vmem:[%s540 + $0x48] sm:$0xff] %v559
                %v561 = vld [vmem:[%s539 + $0xa0] sm:$0xff]
                %562 = vst [vmem:[%s540 + $0x50] sm:$0xff] %v561
                %v563 = vld [vmem:[%s539 + $0xa8] sm:$0xff]
                %564 = vst [vmem:[%s540 + $0x58] sm:$0xff] %v563
                %v565 = vld [vmem:[%s539 + $0xc0] sm:$0xff]
                %566 = vst [vmem:[%s540 + $0x60] sm:$0xff] %v565
                %v567 = vld [vmem:[%s539 + $0xc8] sm:$0xff]
                %568 = vst [vmem:[%s540 + $0x68] sm:$0xff] %v567
                %v569 = vld [vmem:[%s539 + $0xe0] sm:$0xff]
                %570 = vst [vmem:[%s540 + $0x70] sm:$0xff] %v569
                %v571 = vld [vmem:[%s539 + $0xe8] sm:$0xff]
                %572 = vst [vmem:[%s540 + $0x78] sm:$0xff] %v571
                %v573 = vld [vmem:[%s539 + $0x100] sm:$0xff]
                %574 = vst [vmem:[%s540 + $0x80] sm:$0xff] %v573
                %v575 = vld [vmem:[%s539 + $0x108] sm:$0xff]
                %576 = vst [vmem:[%s540 + $0x88] sm:$0xff] %v575
                %v577 = vld [vmem:[%s539 + $0x120] sm:$0xff]
                %578 = vst [vmem:[%s540 + $0x90] sm:$0xff] %v577
                %v579 = vld [vmem:[%s539 + $0x128] sm:$0xff]
                %580 = vst [vmem:[%s540 + $0x98] sm:$0xff] %v579
                %v581 = vld [vmem:[%s539 + $0x140] sm:$0xff]
                %582 = vst [vmem:[%s540 + $0xa0] sm:$0xff] %v581
                %v583 = vld [vmem:[%s539 + $0x148] sm:$0xff]
                %584 = vst [vmem:[%s540 + $0xa8] sm:$0xff] %v583
                %v585 = vld [vmem:[%s539 + $0x160] sm:$0xff]
                %586 = vst [vmem:[%s540 + $0xb0] sm:$0xff] %v585
                %v587 = vld [vmem:[%s539 + $0x168] sm:$0xff]
                %588 = vst [vmem:[%s540 + $0xb8] sm:$0xff] %v587
                %v589 = vld [vmem:[%s539 + $0x180] sm:$0xff]
                %590 = vst [vmem:[%s540 + $0xc0] sm:$0xff] %v589
                %v591 = vld [vmem:[%s539 + $0x188] sm:$0xff]
                %592 = vst [vmem:[%s540 + $0xc8] sm:$0xff] %v591
                %v593 = vld [vmem:[%s539 + $0x1a0] sm:$0xff]
                %594 = vst [vmem:[%s540 + $0xd0] sm:$0xff] %v593
                %v595 = vld [vmem:[%s539 + $0x1a8] sm:$0xff]
                %596 = vst [vmem:[%s540 + $0xd8] sm:$0xff] %v595
                %v597 = vld [vmem:[%s539 + $0x1c0] sm:$0xff]
                %598 = vst [vmem:[%s540 + $0xe0] sm:$0xff] %v597
                %v599 = vld [vmem:[%s539 + $0x1c8] sm:$0xff]
                %600 = vst [vmem:[%s540 + $0xe8] sm:$0xff] %v599
                %v601 = vld [vmem:[%s539 + $0x1e0] sm:$0xff]
                %602 = vst [vmem:[%s540 + $0xf0] sm:$0xff] %v601
                %v603 = vld [vmem:[%s539 + $0x1e8] sm:$0xff]
                %604 = vst [vmem:[%s540 + $0xf8] sm:$0xff] %v603
              $region69: #{multvae_forward.1} parent=63 // loop_footer
                %s538 = sadd.s32 1, %s534
              $region70: #{multvae_forward.1} parent=63 // loop_footer_branch
                %533 = sbr.rel target = $region66
              $region71: #{multvae_forward.1} parent=63 // loop_exit
                _
            $region64: #{multvae_forward.1} parent=59 // pred_fallthru
              _
            // Predicated region
            $region72: #{multvae_forward.1} parent=59 // pred_check
              _
            $region73: #{multvae_forward.1} parent=59 // pred_check_branch
              %606 = sbr.rel target = $region75
            $region74: #{multvae_forward.1} parent=59 // pred_region
              _
            $region75: #{multvae_forward.1} parent=59 // pred_fallthru
              _
          $region60: #{multvae_forward.1} parent=55 // pred_fallthru
            _
          %607 = vnop
        $region56: #{multvae_forward.1} parent=51 // pred_fallthru
          _
        // Predicated region
        $region76: #{multvae_forward.1} parent=51 // pred_check
          %p608 = pneg %p93
        $region77: #{multvae_forward.1} parent=51 // pred_check_branch
          %610 = sbr.rel (%p608) target = $region79
        $region78: #{multvae_forward.1} parent=51 // pred_region
          %s611 = smul.u32 16, %s36
          %p612 = scmp.lt.s32.totalorder %s611, 31
          %s613 = scalar_select %p612, %s611, 31
          %s614 = smul.addr %s613, 8
          %s615 = scalar_lea.vmem %s1, %s614
          %s616 = smul.u32 16, %s36
        $region79: #{multvae_forward.1} parent=51 // pred_fallthru
          _
        // Predicated region
        $region80: #{multvae_forward.1} parent=51 // pred_check
          %p617 = pneg %p123
        $region81: #{multvae_forward.1} parent=51 // pred_check_branch
          %619 = sbr.rel (%p617) target = $region83
        $region82: #{multvae_forward.1} parent=51 // pred_region
          %p620 = scmp.lt.s32.totalorder %s37, 1
          %s621 = scalar_select %p620, %s37, 1
          %s622 = smul.u32 64, %s621
          %p623 = scmp.lt.s32.totalorder %s622, 127
          %s624 = scalar_select %p623, %s622, 127
          %s625 = smul.addr %s624, 2
          %s626 = smul.addr %s625, 4
          %s627 = scalar_lea.vmem %s2, %s626
          %p628 = scmp.lt.s32.totalorder %s37, 1
          %s629 = scalar_select %p628, %s37, 1
          %s630 = smul.u32 64, %s629
        $region83: #{multvae_forward.1} parent=51 // pred_fallthru
          _
        // Predicated region
        $region84: #{multvae_forward.1} parent=51 // pred_check
          %p631 = pneg %p344
        $region85: #{multvae_forward.1} parent=51 // pred_check_branch
          %633 = sbr.rel (%p631) target = $region87
        $region86: #{multvae_forward.1} parent=51 // pred_region
          %s634 = sand.u32 %s334, 1
          %s635 = sand.u32 %s334, 1
          %s636 = smul.addr %s635, 512
          %s637 = scalar_lea.vmem [#allocation6], %s636
          %s638 = ssub.s32 %s37, 2
          %p639 = scmp.gt.s32.totalorder %s638, 0
          %s640 = scalar_select %p639, %s638, 0
          %s641 = smul.u32 4, %s640
          %s642 = smul.addr %s641, 4
          %s643 = scalar_lea.vmem %s12, %s642
          // Predicated region
          $region88: #{multvae_forward.1} parent=86 // pred_check
            _
          $region89: #{multvae_forward.1} parent=86 // pred_check_branch
            %645 = sbr.rel (0) target = $region91
          $region90: #{multvae_forward.1} parent=86 // pred_region
            // Predicated region
            $region92: #{multvae_forward.1} parent=90 // pred_check
              _
            $region93: #{multvae_forward.1} parent=90 // pred_check_branch
              %647 = sbr.rel (0) target = $region95
            $region94: #{multvae_forward.1} parent=90 // pred_region
              loop: start=0, step=1, limit=1
              $region96: #{multvae_forward.1} parent=94 // loop_pre_header
                _
              $region97: #{multvae_forward.1} parent=94 // loop_header
                %s649 = sphi 0, %s653
                %p650 = scmp.ge.s32.totalorder %s649, 1
                %s654 = sphi %s643, %s643
                %s655 = sphi %s637, %s637
              $region98: #{multvae_forward.1} parent=94 // loop_header_branch
                %652 = sbr.rel (%p650) target = $region102
              $region99: #{multvae_forward.1} parent=94 // loop_body
                %v656 = vld [vmem:[%s654] sm:$0xff]
                %657 = vst [vmem:[%s655] sm:$0xff] %v656
                %v658 = vld [vmem:[%s654 + $0x8] sm:$0xff]
                %659 = vst [vmem:[%s655 + $0x8] sm:$0xff] %v658
                %v660 = vld [vmem:[%s654 + $0x20] sm:$0xff]
                %661 = vst [vmem:[%s655 + $0x10] sm:$0xff] %v660
                %v662 = vld [vmem:[%s654 + $0x28] sm:$0xff]
                %663 = vst [vmem:[%s655 + $0x18] sm:$0xff] %v662
                %v664 = vld [vmem:[%s654 + $0x40] sm:$0xff]
                %665 = vst [vmem:[%s655 + $0x20] sm:$0xff] %v664
                %v666 = vld [vmem:[%s654 + $0x48] sm:$0xff]
                %667 = vst [vmem:[%s655 + $0x28] sm:$0xff] %v666
                %v668 = vld [vmem:[%s654 + $0x60] sm:$0xff]
                %669 = vst [vmem:[%s655 + $0x30] sm:$0xff] %v668
                %v670 = vld [vmem:[%s654 + $0x68] sm:$0xff]
                %671 = vst [vmem:[%s655 + $0x38] sm:$0xff] %v670
                %v672 = vld [vmem:[%s654 + $0x80] sm:$0xff]
                %673 = vst [vmem:[%s655 + $0x40] sm:$0xff] %v672
                %v674 = vld [vmem:[%s654 + $0x88] sm:$0xff]
                %675 = vst [vmem:[%s655 + $0x48] sm:$0xff] %v674
                %v676 = vld [vmem:[%s654 + $0xa0] sm:$0xff]
                %677 = vst [vmem:[%s655 + $0x50] sm:$0xff] %v676
                %v678 = vld [vmem:[%s654 + $0xa8] sm:$0xff]
                %679 = vst [vmem:[%s655 + $0x58] sm:$0xff] %v678
                %v680 = vld [vmem:[%s654 + $0xc0] sm:$0xff]
                %681 = vst [vmem:[%s655 + $0x60] sm:$0xff] %v680
                %v682 = vld [vmem:[%s654 + $0xc8] sm:$0xff]
                %683 = vst [vmem:[%s655 + $0x68] sm:$0xff] %v682
                %v684 = vld [vmem:[%s654 + $0xe0] sm:$0xff]
                %685 = vst [vmem:[%s655 + $0x70] sm:$0xff] %v684
                %v686 = vld [vmem:[%s654 + $0xe8] sm:$0xff]
                %687 = vst [vmem:[%s655 + $0x78] sm:$0xff] %v686
                %v688 = vld [vmem:[%s654 + $0x100] sm:$0xff]
                %689 = vst [vmem:[%s655 + $0x80] sm:$0xff] %v688
                %v690 = vld [vmem:[%s654 + $0x108] sm:$0xff]
                %691 = vst [vmem:[%s655 + $0x88] sm:$0xff] %v690
                %v692 = vld [vmem:[%s654 + $0x120] sm:$0xff]
                %693 = vst [vmem:[%s655 + $0x90] sm:$0xff] %v692
                %v694 = vld [vmem:[%s654 + $0x128] sm:$0xff]
                %695 = vst [vmem:[%s655 + $0x98] sm:$0xff] %v694
                %v696 = vld [vmem:[%s654 + $0x140] sm:$0xff]
                %697 = vst [vmem:[%s655 + $0xa0] sm:$0xff] %v696
                %v698 = vld [vmem:[%s654 + $0x148] sm:$0xff]
                %699 = vst [vmem:[%s655 + $0xa8] sm:$0xff] %v698
                %v700 = vld [vmem:[%s654 + $0x160] sm:$0xff]
                %701 = vst [vmem:[%s655 + $0xb0] sm:$0xff] %v700
                %v702 = vld [vmem:[%s654 + $0x168] sm:$0xff]
                %703 = vst [vmem:[%s655 + $0xb8] sm:$0xff] %v702
                %v704 = vld [vmem:[%s654 + $0x180] sm:$0xff]
                %705 = vst [vmem:[%s655 + $0xc0] sm:$0xff] %v704
                %v706 = vld [vmem:[%s654 + $0x188] sm:$0xff]
                %707 = vst [vmem:[%s655 + $0xc8] sm:$0xff] %v706
                %v708 = vld [vmem:[%s654 + $0x1a0] sm:$0xff]
                %709 = vst [vmem:[%s655 + $0xd0] sm:$0xff] %v708
                %v710 = vld [vmem:[%s654 + $0x1a8] sm:$0xff]
                %711 = vst [vmem:[%s655 + $0xd8] sm:$0xff] %v710
                %v712 = vld [vmem:[%s654 + $0x1c0] sm:$0xff]
                %713 = vst [vmem:[%s655 + $0xe0] sm:$0xff] %v712
                %v714 = vld [vmem:[%s654 + $0x1c8] sm:$0xff]
                %715 = vst [vmem:[%s655 + $0xe8] sm:$0xff] %v714
                %v716 = vld [vmem:[%s654 + $0x1e0] sm:$0xff]
                %717 = vst [vmem:[%s655 + $0xf0] sm:$0xff] %v716
                %v718 = vld [vmem:[%s654 + $0x1e8] sm:$0xff]
                %719 = vst [vmem:[%s655 + $0xf8] sm:$0xff] %v718
                %v720 = vld [vmem:[%s654 + $0x200] sm:$0xff]
                %721 = vst [vmem:[%s655 + $0x100] sm:$0xff] %v720
                %v722 = vld [vmem:[%s654 + $0x208] sm:$0xff]
                %723 = vst [vmem:[%s655 + $0x108] sm:$0xff] %v722
                %v724 = vld [vmem:[%s654 + $0x220] sm:$0xff]
                %725 = vst [vmem:[%s655 + $0x110] sm:$0xff] %v724
                %v726 = vld [vmem:[%s654 + $0x228] sm:$0xff]
                %727 = vst [vmem:[%s655 + $0x118] sm:$0xff] %v726
                %v728 = vld [vmem:[%s654 + $0x240] sm:$0xff]
                %729 = vst [vmem:[%s655 + $0x120] sm:$0xff] %v728
                %v730 = vld [vmem:[%s654 + $0x248] sm:$0xff]
                %731 = vst [vmem:[%s655 + $0x128] sm:$0xff] %v730
                %v732 = vld [vmem:[%s654 + $0x260] sm:$0xff]
                %733 = vst [vmem:[%s655 + $0x130] sm:$0xff] %v732
                %v734 = vld [vmem:[%s654 + $0x268] sm:$0xff]
                %735 = vst [vmem:[%s655 + $0x138] sm:$0xff] %v734
                %v736 = vld [vmem:[%s654 + $0x280] sm:$0xff]
                %737 = vst [vmem:[%s655 + $0x140] sm:$0xff] %v736
                %v738 = vld [vmem:[%s654 + $0x288] sm:$0xff]
                %739 = vst [vmem:[%s655 + $0x148] sm:$0xff] %v738
                %v740 = vld [vmem:[%s654 + $0x2a0] sm:$0xff]
                %741 = vst [vmem:[%s655 + $0x150] sm:$0xff] %v740
                %v742 = vld [vmem:[%s654 + $0x2a8] sm:$0xff]
                %743 = vst [vmem:[%s655 + $0x158] sm:$0xff] %v742
                %v744 = vld [vmem:[%s654 + $0x2c0] sm:$0xff]
                %745 = vst [vmem:[%s655 + $0x160] sm:$0xff] %v744
                %v746 = vld [vmem:[%s654 + $0x2c8] sm:$0xff]
                %747 = vst [vmem:[%s655 + $0x168] sm:$0xff] %v746
                %v748 = vld [vmem:[%s654 + $0x2e0] sm:$0xff]
                %749 = vst [vmem:[%s655 + $0x170] sm:$0xff] %v748
                %v750 = vld [vmem:[%s654 + $0x2e8] sm:$0xff]
                %751 = vst [vmem:[%s655 + $0x178] sm:$0xff] %v750
                %v752 = vld [vmem:[%s654 + $0x300] sm:$0xff]
                %753 = vst [vmem:[%s655 + $0x180] sm:$0xff] %v752
                %v754 = vld [vmem:[%s654 + $0x308] sm:$0xff]
                %755 = vst [vmem:[%s655 + $0x188] sm:$0xff] %v754
                %v756 = vld [vmem:[%s654 + $0x320] sm:$0xff]
                %757 = vst [vmem:[%s655 + $0x190] sm:$0xff] %v756
                %v758 = vld [vmem:[%s654 + $0x328] sm:$0xff]
                %759 = vst [vmem:[%s655 + $0x198] sm:$0xff] %v758
                %v760 = vld [vmem:[%s654 + $0x340] sm:$0xff]
                %761 = vst [vmem:[%s655 + $0x1a0] sm:$0xff] %v760
                %v762 = vld [vmem:[%s654 + $0x348] sm:$0xff]
                %763 = vst [vmem:[%s655 + $0x1a8] sm:$0xff] %v762
                %v764 = vld [vmem:[%s654 + $0x360] sm:$0xff]
                %765 = vst [vmem:[%s655 + $0x1b0] sm:$0xff] %v764
                %v766 = vld [vmem:[%s654 + $0x368] sm:$0xff]
                %767 = vst [vmem:[%s655 + $0x1b8] sm:$0xff] %v766
                %v768 = vld [vmem:[%s654 + $0x380] sm:$0xff]
                %769 = vst [vmem:[%s655 + $0x1c0] sm:$0xff] %v768
                %v770 = vld [vmem:[%s654 + $0x388] sm:$0xff]
                %771 = vst [vmem:[%s655 + $0x1c8] sm:$0xff] %v770
                %v772 = vld [vmem:[%s654 + $0x3a0] sm:$0xff]
                %773 = vst [vmem:[%s655 + $0x1d0] sm:$0xff] %v772
                %v774 = vld [vmem:[%s654 + $0x3a8] sm:$0xff]
                %775 = vst [vmem:[%s655 + $0x1d8] sm:$0xff] %v774
                %v776 = vld [vmem:[%s654 + $0x3c0] sm:$0xff]
                %777 = vst [vmem:[%s655 + $0x1e0] sm:$0xff] %v776
                %v778 = vld [vmem:[%s654 + $0x3c8] sm:$0xff]
                %779 = vst [vmem:[%s655 + $0x1e8] sm:$0xff] %v778
                %v780 = vld [vmem:[%s654 + $0x3e0] sm:$0xff]
                %781 = vst [vmem:[%s655 + $0x1f0] sm:$0xff] %v780
                %v782 = vld [vmem:[%s654 + $0x3e8] sm:$0xff]
                %783 = vst [vmem:[%s655 + $0x1f8] sm:$0xff] %v782
              $region100: #{multvae_forward.1} parent=94 // loop_footer
                %s653 = sadd.s32 1, %s649
              $region101: #{multvae_forward.1} parent=94 // loop_footer_branch
                %648 = sbr.rel target = $region97
              $region102: #{multvae_forward.1} parent=94 // loop_exit
                _
            $region95: #{multvae_forward.1} parent=90 // pred_fallthru
              _
            // Predicated region
            $region103: #{multvae_forward.1} parent=90 // pred_check
              _
            $region104: #{multvae_forward.1} parent=90 // pred_check_branch
              %785 = sbr.rel target = $region106
            $region105: #{multvae_forward.1} parent=90 // pred_region
              _
            $region106: #{multvae_forward.1} parent=90 // pred_fallthru
              _
          $region91: #{multvae_forward.1} parent=86 // pred_fallthru
            _
          %786 = vnop
        $region87: #{multvae_forward.1} parent=51 // pred_fallthru
          _
        // Predicated region
        $region107: #{multvae_forward.1} parent=51 // pred_check
          %p787 = pneg %p376
        $region108: #{multvae_forward.1} parent=51 // pred_check_branch
          %789 = sbr.rel (%p787) target = $region110
        $region109: #{multvae_forward.1} parent=51 // pred_region
          %s790 = ssub.s32 %s37, 2
          %p791 = scmp.gt.s32.totalorder %s790, 0
          %s792 = scalar_select %p791, %s790, 0
          %s793 = smul.u32 4, %s792
          %p794 = scmp.lt.s32.totalorder %s793, 7
          %s795 = scalar_select %p794, %s793, 7
          %s796 = scalar_lea.vmem %s13, %s795
          %s797 = ssub.s32 %s37, 2
          %p798 = scmp.gt.s32.totalorder %s797, 0
          %s799 = scalar_select %p798, %s797, 0
          %s800 = smul.u32 4, %s799
        $region110: #{multvae_forward.1} parent=51 // pred_fallthru
          _
      $region52: #{multvae_forward.1} parent=5 // pred_fallthru
        _
      %p801 = scmp.le.s32.totalorder 1, %s29
      %p802 = scmp.lt.s32.totalorder %s29, 9
      %p803 = pnand %p801, %p802
      %p804 = pneg %p803
      // Predicated region
      $region111: #{multvae_forward.1} parent=5 // pred_check
        _
      $region112: #{multvae_forward.1} parent=5 // pred_check_branch
        %806 = sbr.rel (%p803) target = $region114
      $region113: #{multvae_forward.1} parent=5 // pred_region
        %s807 = ssub.s32 %s29, 1
        %s808 = sand.u32 %s60, 1
        %s809 = sand.u32 %s60, 1
        %s810 = smul.addr %s809, 256
        %s811 = scalar_lea.vmem [#allocation5], %s810
        // Predicated region
        $region115: #{multvae_forward.1} parent=113 // pred_check
          %p812 = pneg %p73
        $region116: #{multvae_forward.1} parent=113 // pred_check_branch
          %814 = sbr.rel (%p812) target = $region118
        $region117: #{multvae_forward.1} parent=113 // pred_region
          _
        $region118: #{multvae_forward.1} parent=113 // pred_fallthru
          _
        %s815 = sand.u32 %s337, 1
        %s816 = sand.u32 %s337, 1
        %s817 = smul.addr %s816, 512
        %s818 = scalar_lea.vmem [#allocation6], %s817
        // Predicated region
        $region119: #{multvae_forward.1} parent=113 // pred_check
          %p819 = pneg %p350
        $region120: #{multvae_forward.1} parent=113 // pred_check_branch
          %821 = sbr.rel (%p819) target = $region122
        $region121: #{multvae_forward.1} parent=113 // pred_region
          _
        $region122: #{multvae_forward.1} parent=113 // pred_fallthru
          _
        %s822 = sand.u32 %s60, 1
        %s823 = sand.u32 %s60, 1
        %s824 = smul.addr %s823, 256
        %s825 = scalar_lea.vmem [#allocation5], %s824
        %p826 = pneg %p73
        %p827 = pneg %p70
        %s828 = smul.u32 16, %s38
        %p829 = scmp.lt.s32.totalorder %s828, 31
        %s830 = scalar_select %p829, %s828, 31
        %s831 = smul.addr %s830, 8
        %s832 = scalar_lea.vmem %s1, %s831
        %p833 = pneg %p99
        %p834 = pneg %p96
        %p835 = scmp.lt.s32.totalorder %s39, 1
        %s836 = scalar_select %p835, %s39, 1
        %s837 = smul.u32 64, %s836
        %p838 = scmp.lt.s32.totalorder %s837, 127
        %s839 = scalar_select %p838, %s837, 127
        %s840 = smul.addr %s839, 2
        %s841 = smul.addr %s840, 4
        %s842 = scalar_lea.vmem %s2, %s841
        %p843 = pneg %p129
        %p844 = pneg %p126
        %p845 = pneg %p150
        %p846 = pneg %p147
        %p847 = pneg %p171
        %p848 = pneg %p168
        %p849 = pneg %p192
        %p850 = pneg %p189
        %p851 = pneg %p213
        %p852 = pneg %p210
        %p853 = pneg %p234
        %p854 = pneg %p231
        %p855 = pneg %p255
        %p856 = pneg %p252
        %p857 = pneg %p276
        %p858 = pneg %p273
        %p859 = pneg %p297
        %p860 = pneg %p294
        %p861 = pneg %p318
        %p862 = pneg %p315
        %s863 = sand.u32 %s337, 1
        %s864 = sand.u32 %s337, 1
        %s865 = smul.addr %s864, 512
        %s866 = scalar_lea.vmem [#allocation6], %s865
        %p867 = pneg %p350
        %p868 = pneg %p347
        %s869 = ssub.s32 %s39, 2
        %p870 = scmp.gt.s32.totalorder %s869, 0
        %s871 = scalar_select %p870, %s869, 0
        %s872 = smul.u32 4, %s871
        %p873 = scmp.lt.s32.totalorder %s872, 7
        %s874 = scalar_select %p873, %s872, 7
        %s875 = scalar_lea.vmem %s13, %s874
        %p876 = pneg %p382
        %p877 = pneg %p379
        %p878 = pneg %p416
        %p879 = pneg %p413
        %s880 = sand.u32 %s403, 1
        %s881 = scalar_lea.sflag [#allocation8], %s880
        %s882 = sand.u32 %s403, 1
        %s883 = smul.addr %s882, 256
        %s884 = scalar_lea.vmem [#allocation7], %s883
        %p885 = pneg %p442
        %p886 = pneg %p439
        %s887 = sand.u32 %s34, 1
        %s888 = scalar_lea.sflag [#allocation10], %s887
        %s889 = sand.u32 %s429, 1
        %s890 = smul.addr %s889, 128
        %s891 = scalar_lea.vmem [#allocation9], %s890
        %p892 = pneg %p468
        %p893 = pneg %p465
        %s894 = sand.u32 %s34, 1
        %s895 = scalar_lea.sflag [#allocation10], %s894
        %s896 = sand.u32 %s455, 1
        %s897 = smul.addr %s896, 128
        %s898 = scalar_lea.vmem [#allocation11], %s897
        %p899 = scmp.lt.s32.totalorder %s39, 1
        %s900 = scalar_select %p899, %s39, 1
        %s901 = smul.u32 16, %s38
        %s902 = smul.u32 4, %s900
        %s903 = smul.u32 16, %s38
        %p904 = scmp.lt.s32.totalorder %s903, 31
        %s905 = scalar_select %p904, %s903, 31
        %s906 = smul.addr %s905, 8
        %s907 = scalar_lea.vmem %s1, %s906
        %s908 = smul.u32 16, %s38
        %p909 = scmp.lt.s32.totalorder %s39, 1
        %s910 = scalar_select %p909, %s39, 1
        %s911 = smul.u32 64, %s910
        %p912 = scmp.lt.s32.totalorder %s911, 127
        %s913 = scalar_select %p912, %s911, 127
        %s914 = smul.addr %s913, 2
        %s915 = smul.addr %s914, 4
        %s916 = scalar_lea.vmem %s2, %s915
        %p917 = scmp.lt.s32.totalorder %s39, 1
        %s918 = scalar_select %p917, %s39, 1
        %s919 = smul.u32 64, %s918
        %s920 = ssub.s32 %s39, 2
        %p921 = scmp.gt.s32.totalorder %s920, 0
        %s922 = scalar_select %p921, %s920, 0
        %s923 = smul.u32 4, %s922
        %s924 = ssub.s32 %s39, 2
        %p925 = scmp.gt.s32.totalorder %s924, 0
        %s926 = scalar_select %p925, %s924, 0
        %s927 = smul.u32 4, %s926
        %p928 = scmp.lt.s32.totalorder %s927, 7
        %s929 = scalar_select %p928, %s927, 7
        %s930 = scalar_lea.vmem %s13, %s929
        %s931 = ssub.s32 %s39, 2
        %p932 = scmp.gt.s32.totalorder %s931, 0
        %s933 = scalar_select %p932, %s931, 0
        %s934 = smul.u32 4, %s933
        %s935 = ssub.s32 %s39, 2
        %p936 = scmp.gt.s32.totalorder %s935, 0
        %s937 = scalar_select %p936, %s935, 0
        %s938 = smul.u32 16, %s38
        %s939 = smul.u32 4, %s937
        %s940 = smul.u32 16, %s38
        %s941 = smul.u32 16, %s38
        %p943 = scmp.eq.s32.totalorder %s39, 0
        // Predicated region
        $region123: #{multvae_forward.1} parent=113 // pred_check
          %p944 = pneg %p943
        $region124: #{multvae_forward.1} parent=113 // pred_check_branch
          %946 = sbr.rel (%p944) target = $region126
        $region125: #{multvae_forward.1} parent=113 // pred_region
          %947 = vst [vmem:[#allocation2] sm:$0xff] 0.0
          %948 = vst [vmem:[#allocation2 + $0x8] sm:$0xff] 0.0
          %949 = vst [vmem:[#allocation2 + $0x10] sm:$0xff] 0.0
          %950 = vst [vmem:[#allocation2 + $0x18] sm:$0xff] 0.0
          %951 = vst [vmem:[#allocation2 + $0x20] sm:$0xff] 0.0
          %952 = vst [vmem:[#allocation2 + $0x28] sm:$0xff] 0.0
          %953 = vst [vmem:[#allocation2 + $0x30] sm:$0xff] 0.0
          %954 = vst [vmem:[#allocation2 + $0x38] sm:$0xff] 0.0
          %955 = vst [vmem:[#allocation2 + $0x40] sm:$0xff] 0.0
          %956 = vst [vmem:[#allocation2 + $0x48] sm:$0xff] 0.0
          %957 = vst [vmem:[#allocation2 + $0x50] sm:$0xff] 0.0
          %958 = vst [vmem:[#allocation2 + $0x58] sm:$0xff] 0.0
          %959 = vst [vmem:[#allocation2 + $0x60] sm:$0xff] 0.0
          %960 = vst [vmem:[#allocation2 + $0x68] sm:$0xff] 0.0
          %961 = vst [vmem:[#allocation2 + $0x70] sm:$0xff] 0.0
          %962 = vst [vmem:[#allocation2 + $0x78] sm:$0xff] 0.0
          %963 = vst [vmem:[#allocation2 + $0x80] sm:$0xff] 0.0
          %964 = vst [vmem:[#allocation2 + $0x88] sm:$0xff] 0.0
          %965 = vst [vmem:[#allocation2 + $0x90] sm:$0xff] 0.0
          %966 = vst [vmem:[#allocation2 + $0x98] sm:$0xff] 0.0
          %967 = vst [vmem:[#allocation2 + $0xa0] sm:$0xff] 0.0
          %968 = vst [vmem:[#allocation2 + $0xa8] sm:$0xff] 0.0
          %969 = vst [vmem:[#allocation2 + $0xb0] sm:$0xff] 0.0
          %970 = vst [vmem:[#allocation2 + $0xb8] sm:$0xff] 0.0
          %971 = vst [vmem:[#allocation2 + $0xc0] sm:$0xff] 0.0
          %972 = vst [vmem:[#allocation2 + $0xc8] sm:$0xff] 0.0
          %973 = vst [vmem:[#allocation2 + $0xd0] sm:$0xff] 0.0
          %974 = vst [vmem:[#allocation2 + $0xd8] sm:$0xff] 0.0
          %975 = vst [vmem:[#allocation2 + $0xe0] sm:$0xff] 0.0
          %976 = vst [vmem:[#allocation2 + $0xe8] sm:$0xff] 0.0
          %977 = vst [vmem:[#allocation2 + $0xf0] sm:$0xff] 0.0
          %978 = vst [vmem:[#allocation2 + $0xf8] sm:$0xff] 0.0
        $region126: #{multvae_forward.1} parent=113 // pred_fallthru
          _
        %p979 = scmp.lt.s32.totalorder %s39, 2
        // Predicated region
        $region127: #{multvae_forward.1} parent=113 // pred_check
          %p980 = pneg %p979
        $region128: #{multvae_forward.1} parent=113 // pred_check_branch
          %982 = sbr.rel (%p980) target = $region130
        $region129: #{multvae_forward.1} parent=113 // pred_region
          %v983 = vld [vmem:[#allocation2] sm:$0xff]
          %v984 = vld [vmem:[#allocation2 + $0x8] sm:$0xff]
          %v985 = vld [vmem:[#allocation2 + $0x10] sm:$0xff]
          %v986 = vld [vmem:[#allocation2 + $0x18] sm:$0xff]
          %v987 = vld [vmem:[#allocation2 + $0x20] sm:$0xff]
          %v988 = vld [vmem:[#allocation2 + $0x28] sm:$0xff]
          %v989 = vld [vmem:[#allocation2 + $0x30] sm:$0xff]
          %v990 = vld [vmem:[#allocation2 + $0x38] sm:$0xff]
          %v991 = vld [vmem:[#allocation2 + $0x40] sm:$0xff]
          %v992 = vld [vmem:[#allocation2 + $0x48] sm:$0xff]
          %v993 = vld [vmem:[#allocation2 + $0x50] sm:$0xff]
          %v994 = vld [vmem:[#allocation2 + $0x58] sm:$0xff]
          %v995 = vld [vmem:[#allocation2 + $0x60] sm:$0xff]
          %v996 = vld [vmem:[#allocation2 + $0x68] sm:$0xff]
          %v997 = vld [vmem:[#allocation2 + $0x70] sm:$0xff]
          %v998 = vld [vmem:[#allocation2 + $0x78] sm:$0xff]
          %v999 = vld [vmem:[#allocation2 + $0x80] sm:$0xff]
          %v1000 = vld [vmem:[#allocation2 + $0x88] sm:$0xff]
          %v1001 = vld [vmem:[#allocation2 + $0x90] sm:$0xff]
          %v1002 = vld [vmem:[#allocation2 + $0x98] sm:$0xff]
          %v1003 = vld [vmem:[#allocation2 + $0xa0] sm:$0xff]
          %v1004 = vld [vmem:[#allocation2 + $0xa8] sm:$0xff]
          %v1005 = vld [vmem:[#allocation2 + $0xb0] sm:$0xff]
          %v1006 = vld [vmem:[#allocation2 + $0xb8] sm:$0xff]
          %v1007 = vld [vmem:[#allocation2 + $0xc0] sm:$0xff]
          %v1008 = vld [vmem:[#allocation2 + $0xc8] sm:$0xff]
          %v1009 = vld [vmem:[#allocation2 + $0xd0] sm:$0xff]
          %v1010 = vld [vmem:[#allocation2 + $0xd8] sm:$0xff]
          %v1011 = vld [vmem:[#allocation2 + $0xe0] sm:$0xff]
          %v1012 = vld [vmem:[#allocation2 + $0xe8] sm:$0xff]
          %v1013 = vld [vmem:[#allocation2 + $0xf0] sm:$0xff]
          %v1014 = vld [vmem:[#allocation2 + $0xf8] sm:$0xff]
          %v1015 = vld [vmem:[%s811] sm:$0xff]
          %v1016 = vld [vmem:[%s811 + $0x8] sm:$0xff]
          %v1017 = vld [vmem:[%s811 + $0x10] sm:$0xff]
          %v1018 = vld [vmem:[%s811 + $0x18] sm:$0xff]
          %v1019 = vld [vmem:[%s811 + $0x20] sm:$0xff]
          %v1020 = vld [vmem:[%s811 + $0x28] sm:$0xff]
          %v1021 = vld [vmem:[%s811 + $0x30] sm:$0xff]
          %v1022 = vld [vmem:[%s811 + $0x38] sm:$0xff]
          %v1023 = vld [vmem:[%s811 + $0x40] sm:$0xff]
          %v1024 = vld [vmem:[%s811 + $0x48] sm:$0xff]
          %v1025 = vld [vmem:[%s811 + $0x50] sm:$0xff]
          %v1026 = vld [vmem:[%s811 + $0x58] sm:$0xff]
          %v1027 = vld [vmem:[%s811 + $0x60] sm:$0xff]
          %v1028 = vld [vmem:[%s811 + $0x68] sm:$0xff]
          %v1029 = vld [vmem:[%s811 + $0x70] sm:$0xff]
          %v1030 = vld [vmem:[%s811 + $0x78] sm:$0xff]
          %v1031 = vld [vmem:[%s811 + $0x80] sm:$0xff]
          %v1032 = vld [vmem:[%s811 + $0x88] sm:$0xff]
          %v1033 = vld [vmem:[%s811 + $0x90] sm:$0xff]
          %v1034 = vld [vmem:[%s811 + $0x98] sm:$0xff]
          %v1035 = vld [vmem:[%s811 + $0xa0] sm:$0xff]
          %v1036 = vld [vmem:[%s811 + $0xa8] sm:$0xff]
          %v1037 = vld [vmem:[%s811 + $0xb0] sm:$0xff]
          %v1038 = vld [vmem:[%s811 + $0xb8] sm:$0xff]
          %v1039 = vld [vmem:[%s811 + $0xc0] sm:$0xff]
          %v1040 = vld [vmem:[%s811 + $0xc8] sm:$0xff]
          %v1041 = vld [vmem:[%s811 + $0xd0] sm:$0xff]
          %v1042 = vld [vmem:[%s811 + $0xd8] sm:$0xff]
          %v1043 = vld [vmem:[%s811 + $0xe0] sm:$0xff]
          %v1044 = vld [vmem:[%s811 + $0xe8] sm:$0xff]
          %v1045 = vld [vmem:[%s811 + $0xf0] sm:$0xff]
          %v1046 = vld [vmem:[%s811 + $0xf8] sm:$0xff]
          %v1047 = vld [vmem:[%s916] sm:$0xff]
          %v1048 = vld [vmem:[%s916 + $0x8] sm:$0xff]
          %v1049 = vld [vmem:[%s916 + $0x10] sm:$0xff]
          %v1050 = vld [vmem:[%s916 + $0x18] sm:$0xff]
          %v1051 = vld [vmem:[%s916 + $0x20] sm:$0xff]
          %v1052 = vld [vmem:[%s916 + $0x28] sm:$0xff]
          %v1053 = vld [vmem:[%s916 + $0x30] sm:$0xff]
          %v1054 = vld [vmem:[%s916 + $0x38] sm:$0xff]
          %v1055 = vld [vmem:[%s916 + $0x40] sm:$0xff]
          %v1056 = vld [vmem:[%s916 + $0x48] sm:$0xff]
          %v1057 = vld [vmem:[%s916 + $0x50] sm:$0xff]
          %v1058 = vld [vmem:[%s916 + $0x58] sm:$0xff]
          %v1059 = vld [vmem:[%s916 + $0x60] sm:$0xff]
          %v1060 = vld [vmem:[%s916 + $0x68] sm:$0xff]
          %v1061 = vld [vmem:[%s916 + $0x70] sm:$0xff]
          %v1062 = vld [vmem:[%s916 + $0x78] sm:$0xff]
          %v1063 = vld [vmem:[%s916 + $0x80] sm:$0xff]
          %v1064 = vld [vmem:[%s916 + $0x88] sm:$0xff]
          %v1065 = vld [vmem:[%s916 + $0x90] sm:$0xff]
          %v1066 = vld [vmem:[%s916 + $0x98] sm:$0xff]
          %v1067 = vld [vmem:[%s916 + $0xa0] sm:$0xff]
          %v1068 = vld [vmem:[%s916 + $0xa8] sm:$0xff]
          %v1069 = vld [vmem:[%s916 + $0xb0] sm:$0xff]
          %v1070 = vld [vmem:[%s916 + $0xb8] sm:$0xff]
          %v1071 = vld [vmem:[%s916 + $0xc0] sm:$0xff]
          %v1072 = vld [vmem:[%s916 + $0xc8] sm:$0xff]
          %v1073 = vld [vmem:[%s916 + $0xd0] sm:$0xff]
          %v1074 = vld [vmem:[%s916 + $0xd8] sm:$0xff]
          %v1075 = vld [vmem:[%s916 + $0xe0] sm:$0xff]
          %v1076 = vld [vmem:[%s916 + $0xe8] sm:$0xff]
          %v1077 = vld [vmem:[%s916 + $0xf0] sm:$0xff]
          %v1078 = vld [vmem:[%s916 + $0xf8] sm:$0xff]
          %v1079 = vld [vmem:[%s916 + $0x100] sm:$0xff]
          %v1080 = vld [vmem:[%s916 + $0x108] sm:$0xff]
          %v1081 = vld [vmem:[%s916 + $0x110] sm:$0xff]
          %v1082 = vld [vmem:[%s916 + $0x118] sm:$0xff]
          %v1083 = vld [vmem:[%s916 + $0x120] sm:$0xff]
          %v1084 = vld [vmem:[%s916 + $0x128] sm:$0xff]
          %v1085 = vld [vmem:[%s916 + $0x130] sm:$0xff]
          %v1086 = vld [vmem:[%s916 + $0x138] sm:$0xff]
          %v1087 = vld [vmem:[%s916 + $0x140] sm:$0xff]
          %v1088 = vld [vmem:[%s916 + $0x148] sm:$0xff]
          %v1089 = vld [vmem:[%s916 + $0x150] sm:$0xff]
          %v1090 = vld [vmem:[%s916 + $0x158] sm:$0xff]
          %v1091 = vld [vmem:[%s916 + $0x160] sm:$0xff]
          %v1092 = vld [vmem:[%s916 + $0x168] sm:$0xff]
          %v1093 = vld [vmem:[%s916 + $0x170] sm:$0xff]
          %v1094 = vld [vmem:[%s916 + $0x178] sm:$0xff]
          %v1095 = vld [vmem:[%s916 + $0x180] sm:$0xff]
          %v1096 = vld [vmem:[%s916 + $0x188] sm:$0xff]
          %v1097 = vld [vmem:[%s916 + $0x190] sm:$0xff]
          %v1098 = vld [vmem:[%s916 + $0x198] sm:$0xff]
          %v1099 = vld [vmem:[%s916 + $0x1a0] sm:$0xff]
          %v1100 = vld [vmem:[%s916 + $0x1a8] sm:$0xff]
          %v1101 = vld [vmem:[%s916 + $0x1b0] sm:$0xff]
          %v1102 = vld [vmem:[%s916 + $0x1b8] sm:$0xff]
          %v1103 = vld [vmem:[%s916 + $0x1c0] sm:$0xff]
          %v1104 = vld [vmem:[%s916 + $0x1c8] sm:$0xff]
          %v1105 = vld [vmem:[%s916 + $0x1d0] sm:$0xff]
          %v1106 = vld [vmem:[%s916 + $0x1d8] sm:$0xff]
          %v1107 = vld [vmem:[%s916 + $0x1e0] sm:$0xff]
          %v1108 = vld [vmem:[%s916 + $0x1e8] sm:$0xff]
          %v1109 = vld [vmem:[%s916 + $0x1f0] sm:$0xff]
          %v1110 = vld [vmem:[%s916 + $0x1f8] sm:$0xff]
          %v1143 = vunpack.c.l.b16 %v1015
          %v1144 = vunpack.c.h.b16 %v1015
          %v1145 = vunpack.c.l.b16 %v1016
          %v1146 = vunpack.c.h.b16 %v1016
          %v1147 = vunpack.c.l.b16 %v1017
          %v1148 = vunpack.c.h.b16 %v1017
          %v1149 = vunpack.c.l.b16 %v1018
          %v1150 = vunpack.c.h.b16 %v1018
          %v1151 = vunpack.c.l.b16 %v1019
          %v1152 = vunpack.c.h.b16 %v1019
          %v1153 = vunpack.c.l.b16 %v1020
          %v1154 = vunpack.c.h.b16 %v1020
          %v1155 = vunpack.c.l.b16 %v1021
          %v1156 = vunpack.c.h.b16 %v1021
          %v1157 = vunpack.c.l.b16 %v1022
          %v1158 = vunpack.c.h.b16 %v1022
          %v1159 = vunpack.c.l.b16 %v1023
          %v1160 = vunpack.c.h.b16 %v1023
          %v1161 = vunpack.c.l.b16 %v1024
          %v1162 = vunpack.c.h.b16 %v1024
          %v1163 = vunpack.c.l.b16 %v1025
          %v1164 = vunpack.c.h.b16 %v1025
          %v1165 = vunpack.c.l.b16 %v1026
          %v1166 = vunpack.c.h.b16 %v1026
          %v1167 = vunpack.c.l.b16 %v1027
          %v1168 = vunpack.c.h.b16 %v1027
          %v1169 = vunpack.c.l.b16 %v1028
          %v1170 = vunpack.c.h.b16 %v1028
          %v1171 = vunpack.c.l.b16 %v1029
          %v1172 = vunpack.c.h.b16 %v1029
          %v1173 = vunpack.c.l.b16 %v1030
          %v1174 = vunpack.c.h.b16 %v1030
          %v1175 = vunpack.c.l.b16 %v1031
          %v1176 = vunpack.c.h.b16 %v1031
          %v1177 = vunpack.c.l.b16 %v1032
          %v1178 = vunpack.c.h.b16 %v1032
          %v1179 = vunpack.c.l.b16 %v1033
          %v1180 = vunpack.c.h.b16 %v1033
          %v1181 = vunpack.c.l.b16 %v1034
          %v1182 = vunpack.c.h.b16 %v1034
          %v1183 = vunpack.c.l.b16 %v1035
          %v1184 = vunpack.c.h.b16 %v1035
          %v1185 = vunpack.c.l.b16 %v1036
          %v1186 = vunpack.c.h.b16 %v1036
          %v1187 = vunpack.c.l.b16 %v1037
          %v1188 = vunpack.c.h.b16 %v1037
          %v1189 = vunpack.c.l.b16 %v1038
          %v1190 = vunpack.c.h.b16 %v1038
          %v1191 = vunpack.c.l.b16 %v1039
          %v1192 = vunpack.c.h.b16 %v1039
          %v1193 = vunpack.c.l.b16 %v1040
          %v1194 = vunpack.c.h.b16 %v1040
          %v1195 = vunpack.c.l.b16 %v1041
          %v1196 = vunpack.c.h.b16 %v1041
          %v1197 = vunpack.c.l.b16 %v1042
          %v1198 = vunpack.c.h.b16 %v1042
          %v1199 = vunpack.c.l.b16 %v1043
          %v1200 = vunpack.c.h.b16 %v1043
          %v1201 = vunpack.c.l.b16 %v1044
          %v1202 = vunpack.c.h.b16 %v1044
          %v1203 = vunpack.c.l.b16 %v1045
          %v1204 = vunpack.c.h.b16 %v1045
          %v1205 = vunpack.c.l.b16 %v1046
          %v1206 = vunpack.c.h.b16 %v1046
          %v1207 = vpack.c.b16 %v1147, %v1143
          %v1208 = vpack.c.b16 %v1148, %v1144
          %v1209 = vpack.c.b16 %v1149, %v1145
          %v1210 = vpack.c.b16 %v1150, %v1146
          %v1211 = vpack.c.b16 %v1155, %v1151
          %v1212 = vpack.c.b16 %v1156, %v1152
          %v1213 = vpack.c.b16 %v1157, %v1153
          %v1214 = vpack.c.b16 %v1158, %v1154
          %v1215 = vpack.c.b16 %v1163, %v1159
          %v1216 = vpack.c.b16 %v1164, %v1160
          %v1217 = vpack.c.b16 %v1165, %v1161
          %v1218 = vpack.c.b16 %v1166, %v1162
          %v1219 = vpack.c.b16 %v1171, %v1167
          %v1220 = vpack.c.b16 %v1172, %v1168
          %v1221 = vpack.c.b16 %v1173, %v1169
          %v1222 = vpack.c.b16 %v1174, %v1170
          %v1223 = vpack.c.b16 %v1179, %v1175
          %v1224 = vpack.c.b16 %v1180, %v1176
          %v1225 = vpack.c.b16 %v1181, %v1177
          %v1226 = vpack.c.b16 %v1182, %v1178
          %v1227 = vpack.c.b16 %v1187, %v1183
          %v1228 = vpack.c.b16 %v1188, %v1184
          %v1229 = vpack.c.b16 %v1189, %v1185
          %v1230 = vpack.c.b16 %v1190, %v1186
          %v1231 = vpack.c.b16 %v1195, %v1191
          %v1232 = vpack.c.b16 %v1196, %v1192
          %v1233 = vpack.c.b16 %v1197, %v1193
          %v1234 = vpack.c.b16 %v1198, %v1194
          %v1235 = vpack.c.b16 %v1203, %v1199
          %v1236 = vpack.c.b16 %v1204, %v1200
          %v1237 = vpack.c.b16 %v1205, %v1201
          %v1238 = vpack.c.b16 %v1206, %v1202
          %v1335 = vunpack.c.l.b16 %v1047
          %v1336 = vunpack.c.h.b16 %v1047
          %v1337 = vunpack.c.l.b16 %v1048
          %v1338 = vunpack.c.h.b16 %v1048
          %v1339 = vunpack.c.l.b16 %v1049
          %v1340 = vunpack.c.h.b16 %v1049
          %v1341 = vunpack.c.l.b16 %v1050
          %v1342 = vunpack.c.h.b16 %v1050
          %v1343 = vunpack.c.l.b16 %v1051
          %v1344 = vunpack.c.h.b16 %v1051
          %v1345 = vunpack.c.l.b16 %v1052
          %v1346 = vunpack.c.h.b16 %v1052
          %v1347 = vunpack.c.l.b16 %v1053
          %v1348 = vunpack.c.h.b16 %v1053
          %v1349 = vunpack.c.l.b16 %v1054
          %v1350 = vunpack.c.h.b16 %v1054
          %v1351 = vunpack.c.l.b16 %v1055
          %v1352 = vunpack.c.h.b16 %v1055
          %v1353 = vunpack.c.l.b16 %v1056
          %v1354 = vunpack.c.h.b16 %v1056
          %v1355 = vunpack.c.l.b16 %v1057
          %v1356 = vunpack.c.h.b16 %v1057
          %v1357 = vunpack.c.l.b16 %v1058
          %v1358 = vunpack.c.h.b16 %v1058
          %v1359 = vunpack.c.l.b16 %v1059
          %v1360 = vunpack.c.h.b16 %v1059
          %v1361 = vunpack.c.l.b16 %v1060
          %v1362 = vunpack.c.h.b16 %v1060
          %v1363 = vunpack.c.l.b16 %v1061
          %v1364 = vunpack.c.h.b16 %v1061
          %v1365 = vunpack.c.l.b16 %v1062
          %v1366 = vunpack.c.h.b16 %v1062
          %v1367 = vunpack.c.l.b16 %v1063
          %v1368 = vunpack.c.h.b16 %v1063
          %v1369 = vunpack.c.l.b16 %v1064
          %v1370 = vunpack.c.h.b16 %v1064
          %v1371 = vunpack.c.l.b16 %v1065
          %v1372 = vunpack.c.h.b16 %v1065
          %v1373 = vunpack.c.l.b16 %v1066
          %v1374 = vunpack.c.h.b16 %v1066
          %v1375 = vunpack.c.l.b16 %v1067
          %v1376 = vunpack.c.h.b16 %v1067
          %v1377 = vunpack.c.l.b16 %v1068
          %v1378 = vunpack.c.h.b16 %v1068
          %v1379 = vunpack.c.l.b16 %v1069
          %v1380 = vunpack.c.h.b16 %v1069
          %v1381 = vunpack.c.l.b16 %v1070
          %v1382 = vunpack.c.h.b16 %v1070
          %v1383 = vunpack.c.l.b16 %v1071
          %v1384 = vunpack.c.h.b16 %v1071
          %v1385 = vunpack.c.l.b16 %v1072
          %v1386 = vunpack.c.h.b16 %v1072
          %v1387 = vunpack.c.l.b16 %v1073
          %v1388 = vunpack.c.h.b16 %v1073
          %v1389 = vunpack.c.l.b16 %v1074
          %v1390 = vunpack.c.h.b16 %v1074
          %v1391 = vunpack.c.l.b16 %v1075
          %v1392 = vunpack.c.h.b16 %v1075
          %v1393 = vunpack.c.l.b16 %v1076
          %v1394 = vunpack.c.h.b16 %v1076
          %v1395 = vunpack.c.l.b16 %v1077
          %v1396 = vunpack.c.h.b16 %v1077
          %v1397 = vunpack.c.l.b16 %v1078
          %v1398 = vunpack.c.h.b16 %v1078
          %v1399 = vunpack.c.l.b16 %v1079
          %v1400 = vunpack.c.h.b16 %v1079
          %v1401 = vunpack.c.l.b16 %v1080
          %v1402 = vunpack.c.h.b16 %v1080
          %v1403 = vunpack.c.l.b16 %v1081
          %v1404 = vunpack.c.h.b16 %v1081
          %v1405 = vunpack.c.l.b16 %v1082
          %v1406 = vunpack.c.h.b16 %v1082
          %v1407 = vunpack.c.l.b16 %v1083
          %v1408 = vunpack.c.h.b16 %v1083
          %v1409 = vunpack.c.l.b16 %v1084
          %v1410 = vunpack.c.h.b16 %v1084
          %v1411 = vunpack.c.l.b16 %v1085
          %v1412 = vunpack.c.h.b16 %v1085
          %v1413 = vunpack.c.l.b16 %v1086
          %v1414 = vunpack.c.h.b16 %v1086
          %v1415 = vunpack.c.l.b16 %v1087
          %v1416 = vunpack.c.h.b16 %v1087
          %v1417 = vunpack.c.l.b16 %v1088
          %v1418 = vunpack.c.h.b16 %v1088
          %v1419 = vunpack.c.l.b16 %v1089
          %v1420 = vunpack.c.h.b16 %v1089
          %v1421 = vunpack.c.l.b16 %v1090
          %v1422 = vunpack.c.h.b16 %v1090
          %v1423 = vunpack.c.l.b16 %v1091
          %v1424 = vunpack.c.h.b16 %v1091
          %v1425 = vunpack.c.l.b16 %v1092
          %v1426 = vunpack.c.h.b16 %v1092
          %v1427 = vunpack.c.l.b16 %v1093
          %v1428 = vunpack.c.h.b16 %v1093
          %v1429 = vunpack.c.l.b16 %v1094
          %v1430 = vunpack.c.h.b16 %v1094
          %v1431 = vunpack.c.l.b16 %v1095
          %v1432 = vunpack.c.h.b16 %v1095
          %v1433 = vunpack.c.l.b16 %v1096
          %v1434 = vunpack.c.h.b16 %v1096
          %v1435 = vunpack.c.l.b16 %v1097
          %v1436 = vunpack.c.h.b16 %v1097
          %v1437 = vunpack.c.l.b16 %v1098
          %v1438 = vunpack.c.h.b16 %v1098
          %v1439 = vunpack.c.l.b16 %v1099
          %v1440 = vunpack.c.h.b16 %v1099
          %v1441 = vunpack.c.l.b16 %v1100
          %v1442 = vunpack.c.h.b16 %v1100
          %v1443 = vunpack.c.l.b16 %v1101
          %v1444 = vunpack.c.h.b16 %v1101
          %v1445 = vunpack.c.l.b16 %v1102
          %v1446 = vunpack.c.h.b16 %v1102
          %v1447 = vunpack.c.l.b16 %v1103
          %v1448 = vunpack.c.h.b16 %v1103
          %v1449 = vunpack.c.l.b16 %v1104
          %v1450 = vunpack.c.h.b16 %v1104
          %v1451 = vunpack.c.l.b16 %v1105
          %v1452 = vunpack.c.h.b16 %v1105
          %v1453 = vunpack.c.l.b16 %v1106
          %v1454 = vunpack.c.h.b16 %v1106
          %v1455 = vunpack.c.l.b16 %v1107
          %v1456 = vunpack.c.h.b16 %v1107
          %v1457 = vunpack.c.l.b16 %v1108
          %v1458 = vunpack.c.h.b16 %v1108
          %v1459 = vunpack.c.l.b16 %v1109
          %v1460 = vunpack.c.h.b16 %v1109
          %v1461 = vunpack.c.l.b16 %v1110
          %v1462 = vunpack.c.h.b16 %v1110
          %v1463 = vpack.c.b16 %v1337, %v1335
          %v1464 = vpack.c.b16 %v1338, %v1336
          %v1465 = vpack.c.b16 %v1341, %v1339
          %v1466 = vpack.c.b16 %v1342, %v1340
          %v1467 = vpack.c.b16 %v1345, %v1343
          %v1468 = vpack.c.b16 %v1346, %v1344
          %v1469 = vpack.c.b16 %v1349, %v1347
          %v1470 = vpack.c.b16 %v1350, %v1348
          %v1471 = vpack.c.b16 %v1353, %v1351
          %v1472 = vpack.c.b16 %v1354, %v1352
          %v1473 = vpack.c.b16 %v1357, %v1355
          %v1474 = vpack.c.b16 %v1358, %v1356
          %v1475 = vpack.c.b16 %v1361, %v1359
          %v1476 = vpack.c.b16 %v1362, %v1360
          %v1477 = vpack.c.b16 %v1365, %v1363
          %v1478 = vpack.c.b16 %v1366, %v1364
          %v1479 = vpack.c.b16 %v1369, %v1367
          %v1480 = vpack.c.b16 %v1370, %v1368
          %v1481 = vpack.c.b16 %v1373, %v1371
          %v1482 = vpack.c.b16 %v1374, %v1372
          %v1483 = vpack.c.b16 %v1377, %v1375
          %v1484 = vpack.c.b16 %v1378, %v1376
          %v1485 = vpack.c.b16 %v1381, %v1379
          %v1486 = vpack.c.b16 %v1382, %v1380
          %v1487 = vpack.c.b16 %v1385, %v1383
          %v1488 = vpack.c.b16 %v1386, %v1384
          %v1489 = vpack.c.b16 %v1389, %v1387
          %v1490 = vpack.c.b16 %v1390, %v1388
          %v1491 = vpack.c.b16 %v1393, %v1391
          %v1492 = vpack.c.b16 %v1394, %v1392
          %v1493 = vpack.c.b16 %v1397, %v1395
          %v1494 = vpack.c.b16 %v1398, %v1396
          %v1495 = vpack.c.b16 %v1401, %v1399
          %v1496 = vpack.c.b16 %v1402, %v1400
          %v1497 = vpack.c.b16 %v1405, %v1403
          %v1498 = vpack.c.b16 %v1406, %v1404
          %v1499 = vpack.c.b16 %v1409, %v1407
          %v1500 = vpack.c.b16 %v1410, %v1408
          %v1501 = vpack.c.b16 %v1413, %v1411
          %v1502 = vpack.c.b16 %v1414, %v1412
          %v1503 = vpack.c.b16 %v1417, %v1415
          %v1504 = vpack.c.b16 %v1418, %v1416
          %v1505 = vpack.c.b16 %v1421, %v1419
          %v1506 = vpack.c.b16 %v1422, %v1420
          %v1507 = vpack.c.b16 %v1425, %v1423
          %v1508 = vpack.c.b16 %v1426, %v1424
          %v1509 = vpack.c.b16 %v1429, %v1427
          %v1510 = vpack.c.b16 %v1430, %v1428
          %v1511 = vpack.c.b16 %v1433, %v1431
          %v1512 = vpack.c.b16 %v1434, %v1432
          %v1513 = vpack.c.b16 %v1437, %v1435
          %v1514 = vpack.c.b16 %v1438, %v1436
          %v1515 = vpack.c.b16 %v1441, %v1439
          %v1516 = vpack.c.b16 %v1442, %v1440
          %v1517 = vpack.c.b16 %v1445, %v1443
          %v1518 = vpack.c.b16 %v1446, %v1444
          %v1519 = vpack.c.b16 %v1449, %v1447
          %v1520 = vpack.c.b16 %v1450, %v1448
          %v1521 = vpack.c.b16 %v1453, %v1451
          %v1522 = vpack.c.b16 %v1454, %v1452
          %v1523 = vpack.c.b16 %v1457, %v1455
          %v1524 = vpack.c.b16 %v1458, %v1456
          %v1525 = vpack.c.b16 %v1461, %v1459
          %v1526 = vpack.c.b16 %v1462, %v1460
          %1591 = vmatprep.subr.bf16.mxu0 %v1464
          %1592 = vmatpush1.bf16.msra.mxu0 %v1463
          %1593 = vmatprep.subr.bf16.mxu0 %v1466
          %1594 = vmatpush1.bf16.msra.mxu0 %v1465
          %1595 = vmatprep.subr.bf16.mxu0 %v1468
          %1596 = vmatpush1.bf16.msra.mxu0 %v1467
          %1597 = vmatprep.subr.bf16.mxu0 %v1470
          %1598 = vmatpush1.bf16.msra.mxu0 %v1469
          %1599 = vmatprep.subr.bf16.mxu0 %v1472
          %1600 = vmatpush1.bf16.msra.mxu0 %v1471
          %1601 = vmatprep.subr.bf16.mxu0 %v1474
          %1602 = vmatpush1.bf16.msra.mxu0 %v1473
          %1603 = vmatprep.subr.bf16.mxu0 %v1476
          %1604 = vmatpush1.bf16.msra.mxu0 %v1475
          %1605 = vmatprep.subr.bf16.mxu0 %v1478
          %1606 = vmatpush1.bf16.msra.mxu0 %v1477
          %1607 = vmatprep.subr.bf16.mxu0 %v1480
          %1608 = vmatpush1.bf16.msra.mxu0 %v1479
          %1609 = vmatprep.subr.bf16.mxu0 %v1482
          %1610 = vmatpush1.bf16.msra.mxu0 %v1481
          %1611 = vmatprep.subr.bf16.mxu0 %v1484
          %1612 = vmatpush1.bf16.msra.mxu0 %v1483
          %1613 = vmatprep.subr.bf16.mxu0 %v1486
          %1614 = vmatpush1.bf16.msra.mxu0 %v1485
          %1615 = vmatprep.subr.bf16.mxu0 %v1488
          %1616 = vmatpush1.bf16.msra.mxu0 %v1487
          %1617 = vmatprep.subr.bf16.mxu0 %v1490
          %1618 = vmatpush1.bf16.msra.mxu0 %v1489
          %1619 = vmatprep.subr.bf16.mxu0 %v1492
          %1620 = vmatpush1.bf16.msra.mxu0 %v1491
          %1621 = vmatprep.subr.bf16.mxu0 %v1494
          %1622 = vmatpush1.bf16.msra.mxu0 %v1493
          %1623 = vmatprep.mubr.bf16.mxu0 %v1208
          %1624 = vmatmul.mubr.bf16.gmra.mrb[0].mxu0 %v1207
          %v1625 = vpop.f32.mrb[0].mxu0
          %v1626 = vadd.f32 0.0, %v1625
          %v1627 = vpop.f32.mrb[0].mxu0
          %v1628 = vadd.f32 0.0, %v1627
          %v1629 = vpop.f32.mrb[0].mxu0
          %v1630 = vadd.f32 0.0, %v1629
          %v1631 = vpop.f32.mrb[0].mxu0
          %v1632 = vadd.f32 0.0, %v1631
          %1633 = vmatprep.mubr.bf16.mxu0 %v1212
          %1634 = vmatmul.mubr.bf16.gmra.mrb[0].mxu0 %v1211
          %v1635 = vpop.f32.mrb[0].mxu0
          %v1636 = vadd.f32 0.0, %v1635
          %v1637 = vpop.f32.mrb[0].mxu0
          %v1638 = vadd.f32 0.0, %v1637
          %v1639 = vpop.f32.mrb[0].mxu0
          %v1640 = vadd.f32 0.0, %v1639
          %v1641 = vpop.f32.mrb[0].mxu0
          %v1642 = vadd.f32 0.0, %v1641
          %1643 = vmatprep.mubr.bf16.mxu0 %v1216
          %1644 = vmatmul.mubr.bf16.gmra.mrb[0].mxu0 %v1215
          %v1645 = vpop.f32.mrb[0].mxu0
          %v1646 = vadd.f32 0.0, %v1645
          %v1647 = vpop.f32.mrb[0].mxu0
          %v1648 = vadd.f32 0.0, %v1647
          %v1649 = vpop.f32.mrb[0].mxu0
          %v1650 = vadd.f32 0.0, %v1649
          %v1651 = vpop.f32.mrb[0].mxu0
          %v1652 = vadd.f32 0.0, %v1651
          %1653 = vmatprep.mubr.bf16.mxu0 %v1220
          %1654 = vmatmul.mubr.bf16.gmra.mrb[0].mxu0 %v1219
          %v1655 = vpop.f32.mrb[0].mxu0
          %v1656 = vadd.f32 0.0, %v1655
          %v1657 = vpop.f32.mrb[0].mxu0
          %v1658 = vadd.f32 0.0, %v1657
          %v1659 = vpop.f32.mrb[0].mxu0
          %v1660 = vadd.f32 0.0, %v1659
          %v1661 = vpop.f32.mrb[0].mxu0
          %v1662 = vadd.f32 0.0, %v1661
          %1663 = vmatprep.mubr.bf16.mxu0 %v1224
          %1664 = vmatmul.mubr.bf16.gmra.mrb[0].mxu0 %v1223
          %v1665 = vpop.f32.mrb[0].mxu0
          %v1666 = vadd.f32 0.0, %v1665
          %v1667 = vpop.f32.mrb[0].mxu0
          %v1668 = vadd.f32 0.0, %v1667
          %v1669 = vpop.f32.mrb[0].mxu0
          %v1670 = vadd.f32 0.0, %v1669
          %v1671 = vpop.f32.mrb[0].mxu0
          %v1672 = vadd.f32 0.0, %v1671
          %1673 = vmatprep.mubr.bf16.mxu0 %v1228
          %1674 = vmatmul.mubr.bf16.gmra.mrb[0].mxu0 %v1227
          %v1675 = vpop.f32.mrb[0].mxu0
          %v1676 = vadd.f32 0.0, %v1675
          %v1677 = vpop.f32.mrb[0].mxu0
          %v1678 = vadd.f32 0.0, %v1677
          %v1679 = vpop.f32.mrb[0].mxu0
          %v1680 = vadd.f32 0.0, %v1679
          %v1681 = vpop.f32.mrb[0].mxu0
          %v1682 = vadd.f32 0.0, %v1681
          %1683 = vmatprep.mubr.bf16.mxu0 %v1232
          %1684 = vmatmul.mubr.bf16.gmra.mrb[0].mxu0 %v1231
          %v1685 = vpop.f32.mrb[0].mxu0
          %v1686 = vadd.f32 0.0, %v1685
          %v1687 = vpop.f32.mrb[0].mxu0
          %v1688 = vadd.f32 0.0, %v1687
          %v1689 = vpop.f32.mrb[0].mxu0
          %v1690 = vadd.f32 0.0, %v1689
          %v1691 = vpop.f32.mrb[0].mxu0
          %v1692 = vadd.f32 0.0, %v1691
          %1693 = vmatprep.mubr.bf16.mxu0 %v1236
          %1694 = vmatmul.mubr.bf16.gmra.mrb[0].mxu0 %v1235
          %v1695 = vpop.f32.mrb[0].mxu0
          %v1696 = vadd.f32 0.0, %v1695
          %v1697 = vpop.f32.mrb[0].mxu0
          %v1698 = vadd.f32 0.0, %v1697
          %v1699 = vpop.f32.mrb[0].mxu0
          %v1700 = vadd.f32 0.0, %v1699
          %v1701 = vpop.f32.mrb[0].mxu0
          %v1702 = vadd.f32 0.0, %v1701
          %1703 = vdwg.mxu0
          %1704 = vmatprep.subr.bf16.mxu0 %v1496
          %1705 = vmatpush1.bf16.msra.mxu0 %v1495
          %1706 = vmatprep.subr.bf16.mxu0 %v1498
          %1707 = vmatpush1.bf16.msra.mxu0 %v1497
          %1708 = vmatprep.subr.bf16.mxu0 %v1500
          %1709 = vmatpush1.bf16.msra.mxu0 %v1499
          %1710 = vmatprep.subr.bf16.mxu0 %v1502
          %1711 = vmatpush1.bf16.msra.mxu0 %v1501
          %1712 = vmatprep.subr.bf16.mxu0 %v1504
          %1713 = vmatpush1.bf16.msra.mxu0 %v1503
          %1714 = vmatprep.subr.bf16.mxu0 %v1506
          %1715 = vmatpush1.bf16.msra.mxu0 %v1505
          %1716 = vmatprep.subr.bf16.mxu0 %v1508
          %1717 = vmatpush1.bf16.msra.mxu0 %v1507
          %1718 = vmatprep.subr.bf16.mxu0 %v1510
          %1719 = vmatpush1.bf16.msra.mxu0 %v1509
          %1720 = vmatprep.subr.bf16.mxu0 %v1512
          %1721 = vmatpush1.bf16.msra.mxu0 %v1511
          %1722 = vmatprep.subr.bf16.mxu0 %v1514
          %1723 = vmatpush1.bf16.msra.mxu0 %v1513
          %1724 = vmatprep.subr.bf16.mxu0 %v1516
          %1725 = vmatpush1.bf16.msra.mxu0 %v1515
          %1726 = vmatprep.subr.bf16.mxu0 %v1518
          %1727 = vmatpush1.bf16.msra.mxu0 %v1517
          %1728 = vmatprep.subr.bf16.mxu0 %v1520
          %1729 = vmatpush1.bf16.msra.mxu0 %v1519
          %1730 = vmatprep.subr.bf16.mxu0 %v1522
          %1731 = vmatpush1.bf16.msra.mxu0 %v1521
          %1732 = vmatprep.subr.bf16.mxu0 %v1524
          %1733 = vmatpush1.bf16.msra.mxu0 %v1523
          %1734 = vmatprep.subr.bf16.mxu0 %v1526
          %1735 = vmatpush1.bf16.msra.mxu0 %v1525
          %1736 = vmatprep.mubr.bf16.mxu0 %v1210
          %1737 = vmatmul.mubr.bf16.gmra.mrb[0].mxu0 %v1209
          %v1738 = vpop.f32.mrb[0].mxu0
          %v1739 = vadd.f32 %v1626, %v1738
          %v1740 = vpop.f32.mrb[0].mxu0
          %v1741 = vadd.f32 %v1628, %v1740
          %v1742 = vpop.f32.mrb[0].mxu0
          %v1743 = vadd.f32 %v1630, %v1742
          %v1744 = vpop.f32.mrb[0].mxu0
          %v1745 = vadd.f32 %v1632, %v1744
          %1746 = vmatprep.mubr.bf16.mxu0 %v1214
          %1747 = vmatmul.mubr.bf16.gmra.mrb[0].mxu0 %v1213
          %v1748 = vpop.f32.mrb[0].mxu0
          %v1749 = vadd.f32 %v1636, %v1748
          %v1750 = vpop.f32.mrb[0].mxu0
          %v1751 = vadd.f32 %v1638, %v1750
          %v1752 = vpop.f32.mrb[0].mxu0
          %v1753 = vadd.f32 %v1640, %v1752
          %v1754 = vpop.f32.mrb[0].mxu0
          %v1755 = vadd.f32 %v1642, %v1754
          %1756 = vmatprep.mubr.bf16.mxu0 %v1218
          %1757 = vmatmul.mubr.bf16.gmra.mrb[0].mxu0 %v1217
          %v1758 = vpop.f32.mrb[0].mxu0
          %v1759 = vadd.f32 %v1646, %v1758
          %v1760 = vpop.f32.mrb[0].mxu0
          %v1761 = vadd.f32 %v1648, %v1760
          %v1762 = vpop.f32.mrb[0].mxu0
          %v1763 = vadd.f32 %v1650, %v1762
          %v1764 = vpop.f32.mrb[0].mxu0
          %v1765 = vadd.f32 %v1652, %v1764
          %1766 = vmatprep.mubr.bf16.mxu0 %v1222
          %1767 = vmatmul.mubr.bf16.gmra.mrb[0].mxu0 %v1221
          %v1768 = vpop.f32.mrb[0].mxu0
          %v1769 = vadd.f32 %v1656, %v1768
          %v1770 = vpop.f32.mrb[0].mxu0
          %v1771 = vadd.f32 %v1658, %v1770
          %v1772 = vpop.f32.mrb[0].mxu0
          %v1773 = vadd.f32 %v1660, %v1772
          %v1774 = vpop.f32.mrb[0].mxu0
          %v1775 = vadd.f32 %v1662, %v1774
          %1776 = vmatprep.mubr.bf16.mxu0 %v1226
          %1777 = vmatmul.mubr.bf16.gmra.mrb[0].mxu0 %v1225
          %v1778 = vpop.f32.mrb[0].mxu0
          %v1779 = vadd.f32 %v1666, %v1778
          %v1780 = vpop.f32.mrb[0].mxu0
          %v1781 = vadd.f32 %v1668, %v1780
          %v1782 = vpop.f32.mrb[0].mxu0
          %v1783 = vadd.f32 %v1670, %v1782
          %v1784 = vpop.f32.mrb[0].mxu0
          %v1785 = vadd.f32 %v1672, %v1784
          %1786 = vmatprep.mubr.bf16.mxu0 %v1230
          %1787 = vmatmul.mubr.bf16.gmra.mrb[0].mxu0 %v1229
          %v1788 = vpop.f32.mrb[0].mxu0
          %v1789 = vadd.f32 %v1676, %v1788
          %v1790 = vpop.f32.mrb[0].mxu0
          %v1791 = vadd.f32 %v1678, %v1790
          %v1792 = vpop.f32.mrb[0].mxu0
          %v1793 = vadd.f32 %v1680, %v1792
          %v1794 = vpop.f32.mrb[0].mxu0
          %v1795 = vadd.f32 %v1682, %v1794
          %1796 = vmatprep.mubr.bf16.mxu0 %v1234
          %1797 = vmatmul.mubr.bf16.gmra.mrb[0].mxu0 %v1233
          %v1798 = vpop.f32.mrb[0].mxu0
          %v1799 = vadd.f32 %v1686, %v1798
          %v1800 = vpop.f32.mrb[0].mxu0
          %v1801 = vadd.f32 %v1688, %v1800
          %v1802 = vpop.f32.mrb[0].mxu0
          %v1803 = vadd.f32 %v1690, %v1802
          %v1804 = vpop.f32.mrb[0].mxu0
          %v1805 = vadd.f32 %v1692, %v1804
          %1806 = vmatprep.mubr.bf16.mxu0 %v1238
          %1807 = vmatmul.mubr.bf16.gmra.mrb[0].mxu0 %v1237
          %v1808 = vpop.f32.mrb[0].mxu0
          %v1809 = vadd.f32 %v1696, %v1808
          %v1810 = vpop.f32.mrb[0].mxu0
          %v1811 = vadd.f32 %v1698, %v1810
          %v1812 = vpop.f32.mrb[0].mxu0
          %v1813 = vadd.f32 %v1700, %v1812
          %v1814 = vpop.f32.mrb[0].mxu0
          %v1815 = vadd.f32 %v1702, %v1814
          %1816 = vdwg.mxu0
          %v1817 = vadd.f32 %v983, %v1739
          %v1818 = vadd.f32 %v984, %v1741
          %v1819 = vadd.f32 %v985, %v1743
          %v1820 = vadd.f32 %v986, %v1745
          %v1821 = vadd.f32 %v987, %v1749
          %v1822 = vadd.f32 %v988, %v1751
          %v1823 = vadd.f32 %v989, %v1753
          %v1824 = vadd.f32 %v990, %v1755
          %v1825 = vadd.f32 %v991, %v1759
          %v1826 = vadd.f32 %v992, %v1761
          %v1827 = vadd.f32 %v993, %v1763
          %v1828 = vadd.f32 %v994, %v1765
          %v1829 = vadd.f32 %v995, %v1769
          %v1830 = vadd.f32 %v996, %v1771
          %v1831 = vadd.f32 %v997, %v1773
          %v1832 = vadd.f32 %v998, %v1775
          %v1833 = vadd.f32 %v999, %v1779
          %v1834 = vadd.f32 %v1000, %v1781
          %v1835 = vadd.f32 %v1001, %v1783
          %v1836 = vadd.f32 %v1002, %v1785
          %v1837 = vadd.f32 %v1003, %v1789
          %v1838 = vadd.f32 %v1004, %v1791
          %v1839 = vadd.f32 %v1005, %v1793
          %v1840 = vadd.f32 %v1006, %v1795
          %v1841 = vadd.f32 %v1007, %v1799
          %v1842 = vadd.f32 %v1008, %v1801
          %v1843 = vadd.f32 %v1009, %v1803
          %v1844 = vadd.f32 %v1010, %v1805
          %v1845 = vadd.f32 %v1011, %v1809
          %v1846 = vadd.f32 %v1012, %v1811
          %v1847 = vadd.f32 %v1013, %v1813
          %v1848 = vadd.f32 %v1014, %v1815
          %1849 = vst [vmem:[#allocation2] sm:$0xff] %v1817
          %1850 = vst [vmem:[#allocation2 + $0x8] sm:$0xff] %v1818
          %1851 = vst [vmem:[#allocation2 + $0x10] sm:$0xff] %v1819
          %1852 = vst [vmem:[#allocation2 + $0x18] sm:$0xff] %v1820
          %1853 = vst [vmem:[#allocation2 + $0x20] sm:$0xff] %v1821
          %1854 = vst [vmem:[#allocation2 + $0x28] sm:$0xff] %v1822
          %1855 = vst [vmem:[#allocation2 + $0x30] sm:$0xff] %v1823
          %1856 = vst [vmem:[#allocation2 + $0x38] sm:$0xff] %v1824
          %1857 = vst [vmem:[#allocation2 + $0x40] sm:$0xff] %v1825
          %1858 = vst [vmem:[#allocation2 + $0x48] sm:$0xff] %v1826
          %1859 = vst [vmem:[#allocation2 + $0x50] sm:$0xff] %v1827
          %1860 = vst [vmem:[#allocation2 + $0x58] sm:$0xff] %v1828
          %1861 = vst [vmem:[#allocation2 + $0x60] sm:$0xff] %v1829
          %1862 = vst [vmem:[#allocation2 + $0x68] sm:$0xff] %v1830
          %1863 = vst [vmem:[#allocation2 + $0x70] sm:$0xff] %v1831
          %1864 = vst [vmem:[#allocation2 + $0x78] sm:$0xff] %v1832
          %1865 = vst [vmem:[#allocation2 + $0x80] sm:$0xff] %v1833
          %1866 = vst [vmem:[#allocation2 + $0x88] sm:$0xff] %v1834
          %1867 = vst [vmem:[#allocation2 + $0x90] sm:$0xff] %v1835
          %1868 = vst [vmem:[#allocation2 + $0x98] sm:$0xff] %v1836
          %1869 = vst [vmem:[#allocation2 + $0xa0] sm:$0xff] %v1837
          %1870 = vst [vmem:[#allocation2 + $0xa8] sm:$0xff] %v1838
          %1871 = vst [vmem:[#allocation2 + $0xb0] sm:$0xff] %v1839
          %1872 = vst [vmem:[#allocation2 + $0xb8] sm:$0xff] %v1840
          %1873 = vst [vmem:[#allocation2 + $0xc0] sm:$0xff] %v1841
          %1874 = vst [vmem:[#allocation2 + $0xc8] sm:$0xff] %v1842
          %1875 = vst [vmem:[#allocation2 + $0xd0] sm:$0xff] %v1843
          %1876 = vst [vmem:[#allocation2 + $0xd8] sm:$0xff] %v1844
          %1877 = vst [vmem:[#allocation2 + $0xe0] sm:$0xff] %v1845
          %1878 = vst [vmem:[#allocation2 + $0xe8] sm:$0xff] %v1846
          %1879 = vst [vmem:[#allocation2 + $0xf0] sm:$0xff] %v1847
          %1880 = vst [vmem:[#allocation2 + $0xf8] sm:$0xff] %v1848
        $region130: #{multvae_forward.1} parent=113 // pred_fallthru
          _
        %p1881 = scmp.eq.s32.totalorder %s39, 1
        // Predicated region
        $region131: #{multvae_forward.1} parent=113 // pred_check
          %p1882 = pneg %p1881
        $region132: #{multvae_forward.1} parent=113 // pred_check_branch
          %1884 = sbr.rel (%p1882) target = $region134
        $region133: #{multvae_forward.1} parent=113 // pred_region
          %v1885 = vld [vmem:[#allocation2] sm:$0xff]
          %v1886 = vld [vmem:[#allocation2 + $0x8] sm:$0xff]
          %v1887 = vld [vmem:[#allocation2 + $0x10] sm:$0xff]
          %v1888 = vld [vmem:[#allocation2 + $0x18] sm:$0xff]
          %v1889 = vld [vmem:[#allocation2 + $0x20] sm:$0xff]
          %v1890 = vld [vmem:[#allocation2 + $0x28] sm:$0xff]
          %v1891 = vld [vmem:[#allocation2 + $0x30] sm:$0xff]
          %v1892 = vld [vmem:[#allocation2 + $0x38] sm:$0xff]
          %v1893 = vld [vmem:[#allocation2 + $0x40] sm:$0xff]
          %v1894 = vld [vmem:[#allocation2 + $0x48] sm:$0xff]
          %v1895 = vld [vmem:[#allocation2 + $0x50] sm:$0xff]
          %v1896 = vld [vmem:[#allocation2 + $0x58] sm:$0xff]
          %v1897 = vld [vmem:[#allocation2 + $0x60] sm:$0xff]
          %v1898 = vld [vmem:[#allocation2 + $0x68] sm:$0xff]
          %v1899 = vld [vmem:[#allocation2 + $0x70] sm:$0xff]
          %v1900 = vld [vmem:[#allocation2 + $0x78] sm:$0xff]
          %v1901 = vld [vmem:[#allocation2 + $0x80] sm:$0xff]
          %v1902 = vld [vmem:[#allocation2 + $0x88] sm:$0xff]
          %v1903 = vld [vmem:[#allocation2 + $0x90] sm:$0xff]
          %v1904 = vld [vmem:[#allocation2 + $0x98] sm:$0xff]
          %v1905 = vld [vmem:[#allocation2 + $0xa0] sm:$0xff]
          %v1906 = vld [vmem:[#allocation2 + $0xa8] sm:$0xff]
          %v1907 = vld [vmem:[#allocation2 + $0xb0] sm:$0xff]
          %v1908 = vld [vmem:[#allocation2 + $0xb8] sm:$0xff]
          %v1909 = vld [vmem:[#allocation2 + $0xc0] sm:$0xff]
          %v1910 = vld [vmem:[#allocation2 + $0xc8] sm:$0xff]
          %v1911 = vld [vmem:[#allocation2 + $0xd0] sm:$0xff]
          %v1912 = vld [vmem:[#allocation2 + $0xd8] sm:$0xff]
          %v1913 = vld [vmem:[#allocation2 + $0xe0] sm:$0xff]
          %v1914 = vld [vmem:[#allocation2 + $0xe8] sm:$0xff]
          %v1915 = vld [vmem:[#allocation2 + $0xf0] sm:$0xff]
          %v1916 = vld [vmem:[#allocation2 + $0xf8] sm:$0xff]
          %v1917 = vld [vmem:[%s3] sm:$0x3]
          %v1919 = vlaneseq
          %v1920 = vshrl.u32 %v1919, 7
          %v1921 = vsub.s32 0, %v1920
          %v1922 = vrot.slane %v1917, %v1921
          %v1923 = vlaneseq
          %v1924 = vshrl.u32 %v1923, 7
          %v1925 = vsub.s32 1, %v1924
          %v1926 = vrot.slane %v1917, %v1925
          %v1929 = vadd.f32 %v1885, %v1922
          %v1930 = vadd.f32 %v1886, %v1926
          %v1931 = vadd.f32 %v1887, %v1922
          %v1932 = vadd.f32 %v1888, %v1926
          %v1933 = vadd.f32 %v1889, %v1922
          %v1934 = vadd.f32 %v1890, %v1926
          %v1935 = vadd.f32 %v1891, %v1922
          %v1936 = vadd.f32 %v1892, %v1926
          %v1937 = vadd.f32 %v1893, %v1922
          %v1938 = vadd.f32 %v1894, %v1926
          %v1939 = vadd.f32 %v1895, %v1922
          %v1940 = vadd.f32 %v1896, %v1926
          %v1941 = vadd.f32 %v1897, %v1922
          %v1942 = vadd.f32 %v1898, %v1926
          %v1943 = vadd.f32 %v1899, %v1922
          %v1944 = vadd.f32 %v1900, %v1926
          %v1945 = vadd.f32 %v1901, %v1922
          %v1946 = vadd.f32 %v1902, %v1926
          %v1947 = vadd.f32 %v1903, %v1922
          %v1948 = vadd.f32 %v1904, %v1926
          %v1949 = vadd.f32 %v1905, %v1922
          %v1950 = vadd.f32 %v1906, %v1926
          %v1951 = vadd.f32 %v1907, %v1922
          %v1952 = vadd.f32 %v1908, %v1926
          %v1953 = vadd.f32 %v1909, %v1922
          %v1954 = vadd.f32 %v1910, %v1926
          %v1955 = vadd.f32 %v1911, %v1922
          %v1956 = vadd.f32 %v1912, %v1926
          %v1957 = vadd.f32 %v1913, %v1922
          %v1958 = vadd.f32 %v1914, %v1926
          %v1959 = vadd.f32 %v1915, %v1922
          %v1960 = vadd.f32 %v1916, %v1926
          %v1961 = vtanh.pop %v1929
          %v1962 = vtanh.pop %v1930
          %v1963 = vtanh.pop %v1931
          %v1964 = vtanh.pop %v1932
          %v1965 = vtanh.pop %v1933
          %v1966 = vtanh.pop %v1934
          %v1967 = vtanh.pop %v1935
          %v1968 = vtanh.pop %v1936
          %v1969 = vtanh.pop %v1937
          %v1970 = vtanh.pop %v1938
          %v1971 = vtanh.pop %v1939
          %v1972 = vtanh.pop %v1940
          %v1973 = vtanh.pop %v1941
          %v1974 = vtanh.pop %v1942
          %v1975 = vtanh.pop %v1943
          %v1976 = vtanh.pop %v1944
          %v1977 = vtanh.pop %v1945
          %v1978 = vtanh.pop %v1946
          %v1979 = vtanh.pop %v1947
          %v1980 = vtanh.pop %v1948
          %v1981 = vtanh.pop %v1949
          %v1982 = vtanh.pop %v1950
          %v1983 = vtanh.pop %v1951
          %v1984 = vtanh.pop %v1952
          %v1985 = vtanh.pop %v1953
          %v1986 = vtanh.pop %v1954
          %v1987 = vtanh.pop %v1955
          %v1988 = vtanh.pop %v1956
          %v1989 = vtanh.pop %v1957
          %v1990 = vtanh.pop %v1958
          %v1991 = vtanh.pop %v1959
          %v1992 = vtanh.pop %v1960
          %v1993 = vpack.c.bf16 %v1963, %v1961
          %v1994 = vpack.c.bf16 %v1964, %v1962
          %v1995 = vpack.c.bf16 %v1967, %v1965
          %v1996 = vpack.c.bf16 %v1968, %v1966
          %v1997 = vpack.c.bf16 %v1971, %v1969
          %v1998 = vpack.c.bf16 %v1972, %v1970
          %v1999 = vpack.c.bf16 %v1975, %v1973
          %v2000 = vpack.c.bf16 %v1976, %v1974
          %v2001 = vpack.c.bf16 %v1979, %v1977
          %v2002 = vpack.c.bf16 %v1980, %v1978
          %v2003 = vpack.c.bf16 %v1983, %v1981
          %v2004 = vpack.c.bf16 %v1984, %v1982
          %v2005 = vpack.c.bf16 %v1987, %v1985
          %v2006 = vpack.c.bf16 %v1988, %v1986
          %v2007 = vpack.c.bf16 %v1991, %v1989
          %v2008 = vpack.c.bf16 %v1992, %v1990
          %v2009 = vld [vmem:[%s4] sm:$0xf]
          %v2010 = vld [vmem:[%s4 + $0x4] sm:$0xf]
          %v2011 = vld [vmem:[%s4 + $0x8] sm:$0xf]
          %v2012 = vld [vmem:[%s4 + $0xc] sm:$0xf]
          %v2013 = vld [vmem:[%s4 + $0x10] sm:$0xf]
          %v2014 = vld [vmem:[%s4 + $0x14] sm:$0xf]
          %v2015 = vld [vmem:[%s4 + $0x18] sm:$0xf]
          %v2016 = vld [vmem:[%s4 + $0x1c] sm:$0xf]
          %v2017 = vld [vmem:[%s4 + $0x20] sm:$0xf]
          %v2018 = vld [vmem:[%s4 + $0x24] sm:$0xf]
          %v2019 = vld [vmem:[%s4 + $0x28] sm:$0xf]
          %v2020 = vld [vmem:[%s4 + $0x2c] sm:$0xf]
          %v2021 = vld [vmem:[%s4 + $0x30] sm:$0xf]
          %v2022 = vld [vmem:[%s4 + $0x34] sm:$0xf]
          %v2023 = vld [vmem:[%s4 + $0x38] sm:$0xf]
          %v2024 = vld [vmem:[%s4 + $0x3c] sm:$0xf]
          %v2025 = vld [vmem:[%s4 + $0x40] sm:$0xf]
          %v2026 = vld [vmem:[%s4 + $0x44] sm:$0xf]
          %v2027 = vld [vmem:[%s4 + $0x48] sm:$0xf]
          %v2028 = vld [vmem:[%s4 + $0x4c] sm:$0xf]
          %v2029 = vld [vmem:[%s4 + $0x50] sm:$0xf]
          %v2030 = vld [vmem:[%s4 + $0x54] sm:$0xf]
          %v2031 = vld [vmem:[%s4 + $0x58] sm:$0xf]
          %v2032 = vld [vmem:[%s4 + $0x5c] sm:$0xf]
          %v2033 = vld [vmem:[%s4 + $0x60] sm:$0xf]
          %v2034 = vld [vmem:[%s4 + $0x64] sm:$0xf]
          %v2035 = vld [vmem:[%s4 + $0x68] sm:$0xf]
          %v2036 = vld [vmem:[%s4 + $0x6c] sm:$0xf]
          %v2037 = vld [vmem:[%s4 + $0x70] sm:$0xf]
          %v2038 = vld [vmem:[%s4 + $0x74] sm:$0xf]
          %v2039 = vld [vmem:[%s4 + $0x78] sm:$0xf]
          %v2040 = vld [vmem:[%s4 + $0x7c] sm:$0xf]
          %v2041 = vld [vmem:[%s5] sm:$0x1]
          %v2043 = vlaneseq
          %v2044 = vshrl.u32 %v2043, 7
          %v2045 = vsub.s32 0, %v2044
          %v2046 = vrot.slane %v2041, %v2045
          %v2080 = vunpack.c.l.b16 %v2009
          %v2081 = vunpack.c.l.b16 %v2010
          %v2082 = vunpack.c.l.b16 %v2011
          %v2083 = vunpack.c.l.b16 %v2012
          %v2084 = vunpack.c.l.b16 %v2013
          %v2085 = vunpack.c.l.b16 %v2014
          %v2086 = vunpack.c.l.b16 %v2015
          %v2087 = vunpack.c.l.b16 %v2016
          %v2088 = vunpack.c.l.b16 %v2017
          %v2089 = vunpack.c.l.b16 %v2018
          %v2090 = vunpack.c.l.b16 %v2019
          %v2091 = vunpack.c.l.b16 %v2020
          %v2092 = vunpack.c.l.b16 %v2021
          %v2093 = vunpack.c.l.b16 %v2022
          %v2094 = vunpack.c.l.b16 %v2023
          %v2095 = vunpack.c.l.b16 %v2024
          %v2096 = vunpack.c.l.b16 %v2025
          %v2097 = vunpack.c.l.b16 %v2026
          %v2098 = vunpack.c.l.b16 %v2027
          %v2099 = vunpack.c.l.b16 %v2028
          %v2100 = vunpack.c.l.b16 %v2029
          %v2101 = vunpack.c.l.b16 %v2030
          %v2102 = vunpack.c.l.b16 %v2031
          %v2103 = vunpack.c.l.b16 %v2032
          %v2104 = vunpack.c.l.b16 %v2033
          %v2105 = vunpack.c.l.b16 %v2034
          %v2106 = vunpack.c.l.b16 %v2035
          %v2107 = vunpack.c.l.b16 %v2036
          %v2108 = vunpack.c.l.b16 %v2037
          %v2109 = vunpack.c.l.b16 %v2038
          %v2110 = vunpack.c.l.b16 %v2039
          %v2111 = vunpack.c.l.b16 %v2040
          %v2112 = vpack.c.b16 %v2081, %v2080
          %v2113 = vpack.c.b16 %v2083, %v2082
          %v2114 = vpack.c.b16 %v2085, %v2084
          %v2115 = vpack.c.b16 %v2087, %v2086
          %v2116 = vpack.c.b16 %v2089, %v2088
          %v2117 = vpack.c.b16 %v2091, %v2090
          %v2118 = vpack.c.b16 %v2093, %v2092
          %v2119 = vpack.c.b16 %v2095, %v2094
          %v2120 = vpack.c.b16 %v2097, %v2096
          %v2121 = vpack.c.b16 %v2099, %v2098
          %v2122 = vpack.c.b16 %v2101, %v2100
          %v2123 = vpack.c.b16 %v2103, %v2102
          %v2124 = vpack.c.b16 %v2105, %v2104
          %v2125 = vpack.c.b16 %v2107, %v2106
          %v2126 = vpack.c.b16 %v2109, %v2108
          %v2127 = vpack.c.b16 %v2111, %v2110
          %2144 = vmatprep.subr.bf16.mxu0 0
          %2145 = vmatpush1.bf16.msra.mxu0 %v2112
          %2146 = vmatprep.subr.bf16.mxu0 0
          %2147 = vmatpush1.bf16.msra.mxu0 %v2113
          %2148 = vmatprep.subr.bf16.mxu0 0
          %2149 = vmatpush1.bf16.msra.mxu0 %v2114
          %2150 = vmatprep.subr.bf16.mxu0 0
          %2151 = vmatpush1.bf16.msra.mxu0 %v2115
          %2152 = vmatprep.subr.bf16.mxu0 0
          %2153 = vmatpush1.bf16.msra.mxu0 %v2116
          %2154 = vmatprep.subr.bf16.mxu0 0
          %2155 = vmatpush1.bf16.msra.mxu0 %v2117
          %2156 = vmatprep.subr.bf16.mxu0 0
          %2157 = vmatpush1.bf16.msra.mxu0 %v2118
          %2158 = vmatprep.subr.bf16.mxu0 0
          %2159 = vmatpush1.bf16.msra.mxu0 %v2119
          %2160 = vmatprep.subr.bf16.mxu0 0
          %2161 = vmatpush1.bf16.msra.mxu0 %v2120
          %2162 = vmatprep.subr.bf16.mxu0 0
          %2163 = vmatpush1.bf16.msra.mxu0 %v2121
          %2164 = vmatprep.subr.bf16.mxu0 0
          %2165 = vmatpush1.bf16.msra.mxu0 %v2122
          %2166 = vmatprep.subr.bf16.mxu0 0
          %2167 = vmatpush1.bf16.msra.mxu0 %v2123
          %2168 = vmatprep.subr.bf16.mxu0 0
          %2169 = vmatpush1.bf16.msra.mxu0 %v2124
          %2170 = vmatprep.subr.bf16.mxu0 0
          %2171 = vmatpush1.bf16.msra.mxu0 %v2125
          %2172 = vmatprep.subr.bf16.mxu0 0
          %2173 = vmatpush1.bf16.msra.mxu0 %v2126
          %2174 = vmatprep.subr.bf16.mxu0 0
          %2175 = vmatpush1.bf16.msra.mxu0 %v2127
          %2176 = vmatprep.mubr.bf16.mxu0 %v1994
          %2177 = vmatmul.mubr.bf16.gmra.mrb[0].mxu0 %v1993
          %v2178 = vpop.f32.mrb[0].mxu0
          %v2179 = vadd.f32 %v2046, %v2178
          %v2180 = vpop.f32.mrb[0].mxu0
          %v2181 = vpop.f32.mrb[0].mxu0
          %v2182 = vadd.f32 %v2046, %v2181
          %v2183 = vpop.f32.mrb[0].mxu0
          %2184 = vmatprep.mubr.bf16.mxu0 %v1996
          %2185 = vmatmul.mubr.bf16.gmra.mrb[0].mxu0 %v1995
          %v2186 = vpop.f32.mrb[0].mxu0
          %v2187 = vadd.f32 %v2046, %v2186
          %v2188 = vpop.f32.mrb[0].mxu0
          %v2189 = vpop.f32.mrb[0].mxu0
          %v2190 = vadd.f32 %v2046, %v2189
          %v2191 = vpop.f32.mrb[0].mxu0
          %2192 = vmatprep.mubr.bf16.mxu0 %v1998
          %2193 = vmatmul.mubr.bf16.gmra.mrb[0].mxu0 %v1997
          %v2194 = vpop.f32.mrb[0].mxu0
          %v2195 = vadd.f32 %v2046, %v2194
          %v2196 = vpop.f32.mrb[0].mxu0
          %v2197 = vpop.f32.mrb[0].mxu0
          %v2198 = vadd.f32 %v2046, %v2197
          %v2199 = vpop.f32.mrb[0].mxu0
          %2200 = vmatprep.mubr.bf16.mxu0 %v2000
          %2201 = vmatmul.mubr.bf16.gmra.mrb[0].mxu0 %v1999
          %v2202 = vpop.f32.mrb[0].mxu0
          %v2203 = vadd.f32 %v2046, %v2202
          %v2204 = vpop.f32.mrb[0].mxu0
          %v2205 = vpop.f32.mrb[0].mxu0
          %v2206 = vadd.f32 %v2046, %v2205
          %v2207 = vpop.f32.mrb[0].mxu0
          %2208 = vmatprep.mubr.bf16.mxu0 %v2002
          %2209 = vmatmul.mubr.bf16.gmra.mrb[0].mxu0 %v2001
          %v2210 = vpop.f32.mrb[0].mxu0
          %v2211 = vadd.f32 %v2046, %v2210
          %v2212 = vpop.f32.mrb[0].mxu0
          %v2213 = vpop.f32.mrb[0].mxu0
          %v2214 = vadd.f32 %v2046, %v2213
          %v2215 = vpop.f32.mrb[0].mxu0
          %2216 = vmatprep.mubr.bf16.mxu0 %v2004
          %2217 = vmatmul.mubr.bf16.gmra.mrb[0].mxu0 %v2003
          %v2218 = vpop.f32.mrb[0].mxu0
          %v2219 = vadd.f32 %v2046, %v2218
          %v2220 = vpop.f32.mrb[0].mxu0
          %v2221 = vpop.f32.mrb[0].mxu0
          %v2222 = vadd.f32 %v2046, %v2221
          %v2223 = vpop.f32.mrb[0].mxu0
          %2224 = vmatprep.mubr.bf16.mxu0 %v2006
          %2225 = vmatmul.mubr.bf16.gmra.mrb[0].mxu0 %v2005
          %v2226 = vpop.f32.mrb[0].mxu0
          %v2227 = vadd.f32 %v2046, %v2226
          %v2228 = vpop.f32.mrb[0].mxu0
          %v2229 = vpop.f32.mrb[0].mxu0
          %v2230 = vadd.f32 %v2046, %v2229
          %v2231 = vpop.f32.mrb[0].mxu0
          %2232 = vmatprep.mubr.bf16.mxu0 %v2008
          %2233 = vmatmul.mubr.bf16.gmra.mrb[0].mxu0 %v2007
          %v2234 = vpop.f32.mrb[0].mxu0
          %v2235 = vadd.f32 %v2046, %v2234
          %v2236 = vpop.f32.mrb[0].mxu0
          %v2237 = vpop.f32.mrb[0].mxu0
          %v2238 = vadd.f32 %v2046, %v2237
          %v2239 = vpop.f32.mrb[0].mxu0
          %2240 = vdwg.mxu0
          %v2241 = vtanh.pop %v2179
          %v2242 = vtanh.pop %v2182
          %v2243 = vtanh.pop %v2187
          %v2244 = vtanh.pop %v2190
          %v2245 = vtanh.pop %v2195
          %v2246 = vtanh.pop %v2198
          %v2247 = vtanh.pop %v2203
          %v2248 = vtanh.pop %v2206
          %v2249 = vtanh.pop %v2211
          %v2250 = vtanh.pop %v2214
          %v2251 = vtanh.pop %v2219
          %v2252 = vtanh.pop %v2222
          %v2253 = vtanh.pop %v2227
          %v2254 = vtanh.pop %v2230
          %v2255 = vtanh.pop %v2235
          %v2256 = vtanh.pop %v2238
          %v2257 = vpack.c.bf16 %v2242, %v2241
          %v2258 = vpack.c.bf16 %v2244, %v2243
          %v2259 = vpack.c.bf16 %v2246, %v2245
          %v2260 = vpack.c.bf16 %v2248, %v2247
          %v2261 = vpack.c.bf16 %v2250, %v2249
          %v2262 = vpack.c.bf16 %v2252, %v2251
          %v2263 = vpack.c.bf16 %v2254, %v2253
          %v2264 = vpack.c.bf16 %v2256, %v2255
          %v2265 = vld [vmem:[%s6] sm:$0xff]
          %v2266 = vld [vmem:[%s6 + $0x8] sm:$0xff]
          %v2267 = vld [vmem:[%s6 + $0x10] sm:$0xff]
          %v2268 = vld [vmem:[%s6 + $0x18] sm:$0xff]
          %v2269 = vld [vmem:[%s6 + $0x20] sm:$0xff]
          %v2270 = vld [vmem:[%s6 + $0x28] sm:$0xff]
          %v2271 = vld [vmem:[%s6 + $0x30] sm:$0xff]
          %v2272 = vld [vmem:[%s6 + $0x38] sm:$0xff]
          %v2273 = vld [vmem:[%s6 + $0x40] sm:$0xff]
          %v2274 = vld [vmem:[%s6 + $0x48] sm:$0xff]
          %v2275 = vld [vmem:[%s6 + $0x50] sm:$0xff]
          %v2276 = vld [vmem:[%s6 + $0x58] sm:$0xff]
          %v2277 = vld [vmem:[%s6 + $0x60] sm:$0xff]
          %v2278 = vld [vmem:[%s6 + $0x68] sm:$0xff]
          %v2279 = vld [vmem:[%s6 + $0x70] sm:$0xff]
          %v2280 = vld [vmem:[%s6 + $0x78] sm:$0xff]
          %v2281 = vld [vmem:[%s7] sm:$0x3]
          %v2283 = vlaneseq
          %v2284 = vshrl.u32 %v2283, 7
          %v2285 = vsub.s32 0, %v2284
          %v2286 = vrot.slane %v2281, %v2285
          %v2287 = vlaneseq
          %v2288 = vshrl.u32 %v2287, 7
          %v2289 = vsub.s32 1, %v2288
          %v2290 = vrot.slane %v2281, %v2289
          %v2309 = vunpack.c.l.b16 %v2265
          %v2310 = vunpack.c.h.b16 %v2265
          %v2311 = vunpack.c.l.b16 %v2266
          %v2312 = vunpack.c.h.b16 %v2266
          %v2313 = vunpack.c.l.b16 %v2267
          %v2314 = vunpack.c.h.b16 %v2267
          %v2315 = vunpack.c.l.b16 %v2268
          %v2316 = vunpack.c.h.b16 %v2268
          %v2317 = vunpack.c.l.b16 %v2269
          %v2318 = vunpack.c.h.b16 %v2269
          %v2319 = vunpack.c.l.b16 %v2270
          %v2320 = vunpack.c.h.b16 %v2270
          %v2321 = vunpack.c.l.b16 %v2271
          %v2322 = vunpack.c.h.b16 %v2271
          %v2323 = vunpack.c.l.b16 %v2272
          %v2324 = vunpack.c.h.b16 %v2272
          %v2325 = vunpack.c.l.b16 %v2273
          %v2326 = vunpack.c.h.b16 %v2273
          %v2327 = vunpack.c.l.b16 %v2274
          %v2328 = vunpack.c.h.b16 %v2274
          %v2329 = vunpack.c.l.b16 %v2275
          %v2330 = vunpack.c.h.b16 %v2275
          %v2331 = vunpack.c.l.b16 %v2276
          %v2332 = vunpack.c.h.b16 %v2276
          %v2333 = vunpack.c.l.b16 %v2277
          %v2334 = vunpack.c.h.b16 %v2277
          %v2335 = vunpack.c.l.b16 %v2278
          %v2336 = vunpack.c.h.b16 %v2278
          %v2337 = vunpack.c.l.b16 %v2279
          %v2338 = vunpack.c.h.b16 %v2279
          %v2339 = vunpack.c.l.b16 %v2280
          %v2340 = vunpack.c.h.b16 %v2280
          %v2341 = vpack.c.b16 %v2311, %v2309
          %v2342 = vpack.c.b16 %v2312, %v2310
          %v2343 = vpack.c.b16 %v2315, %v2313
          %v2344 = vpack.c.b16 %v2316, %v2314
          %v2345 = vpack.c.b16 %v2319, %v2317
          %v2346 = vpack.c.b16 %v2320, %v2318
          %v2347 = vpack.c.b16 %v2323, %v2321
          %v2348 = vpack.c.b16 %v2324, %v2322
          %v2349 = vpack.c.b16 %v2327, %v2325
          %v2350 = vpack.c.b16 %v2328, %v2326
          %v2351 = vpack.c.b16 %v2331, %v2329
          %v2352 = vpack.c.b16 %v2332, %v2330
          %v2353 = vpack.c.b16 %v2335, %v2333
          %v2354 = vpack.c.b16 %v2336, %v2334
          %v2355 = vpack.c.b16 %v2339, %v2337
          %v2356 = vpack.c.b16 %v2340, %v2338
          %2373 = vmatprep.subr.bf16.mxu0 %v2342
          %2374 = vmatpush1.bf16.msra.mxu0 %v2341
          %2375 = vmatprep.subr.bf16.mxu0 %v2344
          %2376 = vmatpush1.bf16.msra.mxu0 %v2343
          %2377 = vmatprep.subr.bf16.mxu0 %v2346
          %2378 = vmatpush1.bf16.msra.mxu0 %v2345
          %2379 = vmatprep.subr.bf16.mxu0 %v2348
          %2380 = vmatpush1.bf16.msra.mxu0 %v2347
          %2381 = vmatprep.subr.bf16.mxu0 %v2350
          %2382 = vmatpush1.bf16.msra.mxu0 %v2349
          %2383 = vmatprep.subr.bf16.mxu0 %v2352
          %2384 = vmatpush1.bf16.msra.mxu0 %v2351
          %2385 = vmatprep.subr.bf16.mxu0 %v2354
          %2386 = vmatpush1.bf16.msra.mxu0 %v2353
          %2387 = vmatprep.subr.bf16.mxu0 %v2356
          %2388 = vmatpush1.bf16.msra.mxu0 %v2355
          %2389 = vmatprep.subr.bf16.mxu0 0
          %2390 = vmatpush1.bf16.msra.mxu0 0
          %2391 = vmatprep.subr.bf16.mxu0 0
          %2392 = vmatpush1.bf16.msra.mxu0 0
          %2393 = vmatprep.subr.bf16.mxu0 0
          %2394 = vmatpush1.bf16.msra.mxu0 0
          %2395 = vmatprep.subr.bf16.mxu0 0
          %2396 = vmatpush1.bf16.msra.mxu0 0
          %2397 = vmatprep.subr.bf16.mxu0 0
          %2398 = vmatpush1.bf16.msra.mxu0 0
          %2399 = vmatprep.subr.bf16.mxu0 0
          %2400 = vmatpush1.bf16.msra.mxu0 0
          %2401 = vmatprep.subr.bf16.mxu0 0
          %2402 = vmatpush1.bf16.msra.mxu0 0
          %2403 = vmatprep.subr.bf16.mxu0 0
          %2404 = vmatpush1.bf16.msra.mxu0 0
          %2405 = vmatprep.mubr.bf16.mxu0 0
          %2406 = vmatmul.mubr.bf16.gmra.mrb[0].mxu0 %v2257
          %v2407 = vpop.f32.mrb[0].mxu0
          %v2408 = vadd.f32 %v2286, %v2407
          %v2409 = vpop.f32.mrb[0].mxu0
          %v2410 = vadd.f32 %v2290, %v2409
          %v2411 = vpop.f32.mrb[0].mxu0
          %v2412 = vadd.f32 %v2286, %v2411
          %v2413 = vpop.f32.mrb[0].mxu0
          %v2414 = vadd.f32 %v2290, %v2413
          %2415 = vmatprep.mubr.bf16.mxu0 0
          %2416 = vmatmul.mubr.bf16.gmra.mrb[0].mxu0 %v2258
          %v2417 = vpop.f32.mrb[0].mxu0
          %v2418 = vadd.f32 %v2286, %v2417
          %v2419 = vpop.f32.mrb[0].mxu0
          %v2420 = vadd.f32 %v2290, %v2419
          %v2421 = vpop.f32.mrb[0].mxu0
          %v2422 = vadd.f32 %v2286, %v2421
          %v2423 = vpop.f32.mrb[0].mxu0
          %v2424 = vadd.f32 %v2290, %v2423
          %2425 = vmatprep.mubr.bf16.mxu0 0
          %2426 = vmatmul.mubr.bf16.gmra.mrb[0].mxu0 %v2259
          %v2427 = vpop.f32.mrb[0].mxu0
          %v2428 = vadd.f32 %v2286, %v2427
          %v2429 = vpop.f32.mrb[0].mxu0
          %v2430 = vadd.f32 %v2290, %v2429
          %v2431 = vpop.f32.mrb[0].mxu0
          %v2432 = vadd.f32 %v2286, %v2431
          %v2433 = vpop.f32.mrb[0].mxu0
          %v2434 = vadd.f32 %v2290, %v2433
          %2435 = vmatprep.mubr.bf16.mxu0 0
          %2436 = vmatmul.mubr.bf16.gmra.mrb[0].mxu0 %v2260
          %v2437 = vpop.f32.mrb[0].mxu0
          %v2438 = vadd.f32 %v2286, %v2437
          %v2439 = vpop.f32.mrb[0].mxu0
          %v2440 = vadd.f32 %v2290, %v2439
          %v2441 = vpop.f32.mrb[0].mxu0
          %v2442 = vadd.f32 %v2286, %v2441
          %v2443 = vpop.f32.mrb[0].mxu0
          %v2444 = vadd.f32 %v2290, %v2443
          %2445 = vmatprep.mubr.bf16.mxu0 0
          %2446 = vmatmul.mubr.bf16.gmra.mrb[0].mxu0 %v2261
          %v2447 = vpop.f32.mrb[0].mxu0
          %v2448 = vadd.f32 %v2286, %v2447
          %v2449 = vpop.f32.mrb[0].mxu0
          %v2450 = vadd.f32 %v2290, %v2449
          %v2451 = vpop.f32.mrb[0].mxu0
          %v2452 = vadd.f32 %v2286, %v2451
          %v2453 = vpop.f32.mrb[0].mxu0
          %v2454 = vadd.f32 %v2290, %v2453
          %2455 = vmatprep.mubr.bf16.mxu0 0
          %2456 = vmatmul.mubr.bf16.gmra.mrb[0].mxu0 %v2262
          %v2457 = vpop.f32.mrb[0].mxu0
          %v2458 = vadd.f32 %v2286, %v2457
          %v2459 = vpop.f32.mrb[0].mxu0
          %v2460 = vadd.f32 %v2290, %v2459
          %v2461 = vpop.f32.mrb[0].mxu0
          %v2462 = vadd.f32 %v2286, %v2461
          %v2463 = vpop.f32.mrb[0].mxu0
          %v2464 = vadd.f32 %v2290, %v2463
          %2465 = vmatprep.mubr.bf16.mxu0 0
          %2466 = vmatmul.mubr.bf16.gmra.mrb[0].mxu0 %v2263
          %v2467 = vpop.f32.mrb[0].mxu0
          %v2468 = vadd.f32 %v2286, %v2467
          %v2469 = vpop.f32.mrb[0].mxu0
          %v2470 = vadd.f32 %v2290, %v2469
          %v2471 = vpop.f32.mrb[0].mxu0
          %v2472 = vadd.f32 %v2286, %v2471
          %v2473 = vpop.f32.mrb[0].mxu0
          %v2474 = vadd.f32 %v2290, %v2473
          %2475 = vmatprep.mubr.bf16.mxu0 0
          %2476 = vmatmul.mubr.bf16.gmra.mrb[0].mxu0 %v2264
          %v2477 = vpop.f32.mrb[0].mxu0
          %v2478 = vadd.f32 %v2286, %v2477
          %v2479 = vpop.f32.mrb[0].mxu0
          %v2480 = vadd.f32 %v2290, %v2479
          %v2481 = vpop.f32.mrb[0].mxu0
          %v2482 = vadd.f32 %v2286, %v2481
          %v2483 = vpop.f32.mrb[0].mxu0
          %v2484 = vadd.f32 %v2290, %v2483
          %2485 = vdwg.mxu0
          %v2486 = vmul.f32 %v2410, 0.5
          %v2487 = vmul.f32 %v2414, 0.5
          %v2488 = vmul.f32 %v2420, 0.5
          %v2489 = vmul.f32 %v2424, 0.5
          %v2490 = vmul.f32 %v2430, 0.5
          %v2491 = vmul.f32 %v2434, 0.5
          %v2492 = vmul.f32 %v2440, 0.5
          %v2493 = vmul.f32 %v2444, 0.5
          %v2494 = vmul.f32 %v2450, 0.5
          %v2495 = vmul.f32 %v2454, 0.5
          %v2496 = vmul.f32 %v2460, 0.5
          %v2497 = vmul.f32 %v2464, 0.5
          %v2498 = vmul.f32 %v2470, 0.5
          %v2499 = vmul.f32 %v2474, 0.5
          %v2500 = vmul.f32 %v2480, 0.5
          %v2501 = vmul.f32 %v2484, 0.5
          %v2502 = vmul.f32 %v2486, 1.442695
          %v2503 = vpow.pop %v2502
          %v2504 = vmul.f32 %v2487, 1.442695
          %v2505 = vpow.pop %v2504
          %v2506 = vmul.f32 %v2488, 1.442695
          %v2507 = vpow.pop %v2506
          %v2508 = vmul.f32 %v2489, 1.442695
          %v2509 = vpow.pop %v2508
          %v2510 = vmul.f32 %v2490, 1.442695
          %v2511 = vpow.pop %v2510
          %v2512 = vmul.f32 %v2491, 1.442695
          %v2513 = vpow.pop %v2512
          %v2514 = vmul.f32 %v2492, 1.442695
          %v2515 = vpow.pop %v2514
          %v2516 = vmul.f32 %v2493, 1.442695
          %v2517 = vpow.pop %v2516
          %v2518 = vmul.f32 %v2494, 1.442695
          %v2519 = vpow.pop %v2518
          %v2520 = vmul.f32 %v2495, 1.442695
          %v2521 = vpow.pop %v2520
          %v2522 = vmul.f32 %v2496, 1.442695
          %v2523 = vpow.pop %v2522
          %v2524 = vmul.f32 %v2497, 1.442695
          %v2525 = vpow.pop %v2524
          %v2526 = vmul.f32 %v2498, 1.442695
          %v2527 = vpow.pop %v2526
          %v2528 = vmul.f32 %v2499, 1.442695
          %v2529 = vpow.pop %v2528
          %v2530 = vmul.f32 %v2500, 1.442695
          %v2531 = vpow.pop %v2530
          %v2532 = vmul.f32 %v2501, 1.442695
          %v2533 = vpow.pop %v2532
          %v2534 = vld [vmem:[%s907] sm:$0xff]
          %v2535 = vld [vmem:[%s907 + $0x8] sm:$0xff]
          %v2536 = vld [vmem:[%s907 + $0x10] sm:$0xff]
          %v2537 = vld [vmem:[%s907 + $0x18] sm:$0xff]
          %v2538 = vld [vmem:[%s907 + $0x20] sm:$0xff]
          %v2539 = vld [vmem:[%s907 + $0x28] sm:$0xff]
          %v2540 = vld [vmem:[%s907 + $0x30] sm:$0xff]
          %v2541 = vld [vmem:[%s907 + $0x38] sm:$0xff]
          %v2542 = vld [vmem:[%s907 + $0x40] sm:$0xff]
          %v2543 = vld [vmem:[%s907 + $0x48] sm:$0xff]
          %v2544 = vld [vmem:[%s907 + $0x50] sm:$0xff]
          %v2545 = vld [vmem:[%s907 + $0x58] sm:$0xff]
          %v2546 = vld [vmem:[%s907 + $0x60] sm:$0xff]
          %v2547 = vld [vmem:[%s907 + $0x68] sm:$0xff]
          %v2548 = vld [vmem:[%s907 + $0x70] sm:$0xff]
          %v2549 = vld [vmem:[%s907 + $0x78] sm:$0xff]
          %v2550 = vmul.f32 %v2534, %v2503
          %v2551 = vmul.f32 %v2535, %v2505
          %v2552 = vmul.f32 %v2536, %v2507
          %v2553 = vmul.f32 %v2537, %v2509
          %v2554 = vmul.f32 %v2538, %v2511
          %v2555 = vmul.f32 %v2539, %v2513
          %v2556 = vmul.f32 %v2540, %v2515
          %v2557 = vmul.f32 %v2541, %v2517
          %v2558 = vmul.f32 %v2542, %v2519
          %v2559 = vmul.f32 %v2543, %v2521
          %v2560 = vmul.f32 %v2544, %v2523
          %v2561 = vmul.f32 %v2545, %v2525
          %v2562 = vmul.f32 %v2546, %v2527
          %v2563 = vmul.f32 %v2547, %v2529
          %v2564 = vmul.f32 %v2548, %v2531
          %v2565 = vmul.f32 %v2549, %v2533
          %v2566 = vadd.f32 %v2408, %v2550
          %v2567 = vadd.f32 %v2412, %v2551
          %v2568 = vadd.f32 %v2418, %v2552
          %v2569 = vadd.f32 %v2422, %v2553
          %v2570 = vadd.f32 %v2428, %v2554
          %v2571 = vadd.f32 %v2432, %v2555
          %v2572 = vadd.f32 %v2438, %v2556
          %v2573 = vadd.f32 %v2442, %v2557
          %v2574 = vadd.f32 %v2448, %v2558
          %v2575 = vadd.f32 %v2452, %v2559
          %v2576 = vadd.f32 %v2458, %v2560
          %v2577 = vadd.f32 %v2462, %v2561
          %v2578 = vadd.f32 %v2468, %v2562
          %v2579 = vadd.f32 %v2472, %v2563
          %v2580 = vadd.f32 %v2478, %v2564
          %v2581 = vadd.f32 %v2482, %v2565
          %2582 = vst [vmem:[#allocation3] sm:$0xff] %v2566
          %2583 = vst [vmem:[#allocation3 + $0x8] sm:$0xff] %v2567
          %2584 = vst [vmem:[#allocation3 + $0x10] sm:$0xff] %v2568
          %2585 = vst [vmem:[#allocation3 + $0x18] sm:$0xff] %v2569
          %2586 = vst [vmem:[#allocation3 + $0x20] sm:$0xff] %v2570
          %2587 = vst [vmem:[#allocation3 + $0x28] sm:$0xff] %v2571
          %2588 = vst [vmem:[#allocation3 + $0x30] sm:$0xff] %v2572
          %2589 = vst [vmem:[#allocation3 + $0x38] sm:$0xff] %v2573
          %2590 = vst [vmem:[#allocation3 + $0x40] sm:$0xff] %v2574
          %2591 = vst [vmem:[#allocation3 + $0x48] sm:$0xff] %v2575
          %2592 = vst [vmem:[#allocation3 + $0x50] sm:$0xff] %v2576
          %2593 = vst [vmem:[#allocation3 + $0x58] sm:$0xff] %v2577
          %2594 = vst [vmem:[#allocation3 + $0x60] sm:$0xff] %v2578
          %2595 = vst [vmem:[#allocation3 + $0x68] sm:$0xff] %v2579
          %2596 = vst [vmem:[#allocation3 + $0x70] sm:$0xff] %v2580
          %2597 = vst [vmem:[#allocation3 + $0x78] sm:$0xff] %v2581
          %2598 = vst [vmem:[%s891] sm:$0xff] %v2408
          %2599 = vst [vmem:[%s891 + $0x8] sm:$0xff] %v2412
          %2600 = vst [vmem:[%s891 + $0x10] sm:$0xff] %v2418
          %2601 = vst [vmem:[%s891 + $0x18] sm:$0xff] %v2422
          %2602 = vst [vmem:[%s891 + $0x20] sm:$0xff] %v2428
          %2603 = vst [vmem:[%s891 + $0x28] sm:$0xff] %v2432
          %2604 = vst [vmem:[%s891 + $0x30] sm:$0xff] %v2438
          %2605 = vst [vmem:[%s891 + $0x38] sm:$0xff] %v2442
          %2606 = vst [vmem:[%s891 + $0x40] sm:$0xff] %v2448
          %2607 = vst [vmem:[%s891 + $0x48] sm:$0xff] %v2452
          %2608 = vst [vmem:[%s891 + $0x50] sm:$0xff] %v2458
          %2609 = vst [vmem:[%s891 + $0x58] sm:$0xff] %v2462
          %2610 = vst [vmem:[%s891 + $0x60] sm:$0xff] %v2468
          %2611 = vst [vmem:[%s891 + $0x68] sm:$0xff] %v2472
          %2612 = vst [vmem:[%s891 + $0x70] sm:$0xff] %v2478
          %2613 = vst [vmem:[%s891 + $0x78] sm:$0xff] %v2482
          %2614 = vst [vmem:[%s898] sm:$0xff] %v2410
          %2615 = vst [vmem:[%s898 + $0x8] sm:$0xff] %v2414
          %2616 = vst [vmem:[%s898 + $0x10] sm:$0xff] %v2420
          %2617 = vst [vmem:[%s898 + $0x18] sm:$0xff] %v2424
          %2618 = vst [vmem:[%s898 + $0x20] sm:$0xff] %v2430
          %2619 = vst [vmem:[%s898 + $0x28] sm:$0xff] %v2434
          %2620 = vst [vmem:[%s898 + $0x30] sm:$0xff] %v2440
          %2621 = vst [vmem:[%s898 + $0x38] sm:$0xff] %v2444
          %2622 = vst [vmem:[%s898 + $0x40] sm:$0xff] %v2450
          %2623 = vst [vmem:[%s898 + $0x48] sm:$0xff] %v2454
          %2624 = vst [vmem:[%s898 + $0x50] sm:$0xff] %v2460
          %2625 = vst [vmem:[%s898 + $0x58] sm:$0xff] %v2464
          %2626 = vst [vmem:[%s898 + $0x60] sm:$0xff] %v2470
          %2627 = vst [vmem:[%s898 + $0x68] sm:$0xff] %v2474
          %2628 = vst [vmem:[%s898 + $0x70] sm:$0xff] %v2480
          %2629 = vst [vmem:[%s898 + $0x78] sm:$0xff] %v2484
          %v2630 = vld [vmem:[#allocation3] sm:$0xff]
          %v2631 = vld [vmem:[#allocation3 + $0x8] sm:$0xff]
          %v2632 = vld [vmem:[#allocation3 + $0x10] sm:$0xff]
          %v2633 = vld [vmem:[#allocation3 + $0x18] sm:$0xff]
          %v2634 = vld [vmem:[#allocation3 + $0x20] sm:$0xff]
          %v2635 = vld [vmem:[#allocation3 + $0x28] sm:$0xff]
          %v2636 = vld [vmem:[#allocation3 + $0x30] sm:$0xff]
          %v2637 = vld [vmem:[#allocation3 + $0x38] sm:$0xff]
          %v2638 = vld [vmem:[#allocation3 + $0x40] sm:$0xff]
          %v2639 = vld [vmem:[#allocation3 + $0x48] sm:$0xff]
          %v2640 = vld [vmem:[#allocation3 + $0x50] sm:$0xff]
          %v2641 = vld [vmem:[#allocation3 + $0x58] sm:$0xff]
          %v2642 = vld [vmem:[#allocation3 + $0x60] sm:$0xff]
          %v2643 = vld [vmem:[#allocation3 + $0x68] sm:$0xff]
          %v2644 = vld [vmem:[#allocation3 + $0x70] sm:$0xff]
          %v2645 = vld [vmem:[#allocation3 + $0x78] sm:$0xff]
          %v2646 = vpack.c.bf16 %v2631, %v2630
          %v2647 = vpack.c.bf16 %v2633, %v2632
          %v2648 = vpack.c.bf16 %v2635, %v2634
          %v2649 = vpack.c.bf16 %v2637, %v2636
          %v2650 = vpack.c.bf16 %v2639, %v2638
          %v2651 = vpack.c.bf16 %v2641, %v2640
          %v2652 = vpack.c.bf16 %v2643, %v2642
          %v2653 = vpack.c.bf16 %v2645, %v2644
          %v2654 = vld [vmem:[%s8] sm:$0xf]
          %v2655 = vld [vmem:[%s8 + $0x4] sm:$0xf]
          %v2656 = vld [vmem:[%s8 + $0x8] sm:$0xf]
          %v2657 = vld [vmem:[%s8 + $0xc] sm:$0xf]
          %v2658 = vld [vmem:[%s8 + $0x10] sm:$0xf]
          %v2659 = vld [vmem:[%s8 + $0x14] sm:$0xf]
          %v2660 = vld [vmem:[%s8 + $0x18] sm:$0xf]
          %v2661 = vld [vmem:[%s8 + $0x1c] sm:$0xf]
          %v2662 = vld [vmem:[%s8 + $0x20] sm:$0xf]
          %v2663 = vld [vmem:[%s8 + $0x24] sm:$0xf]
          %v2664 = vld [vmem:[%s8 + $0x28] sm:$0xf]
          %v2665 = vld [vmem:[%s8 + $0x2c] sm:$0xf]
          %v2666 = vld [vmem:[%s8 + $0x30] sm:$0xf]
          %v2667 = vld [vmem:[%s8 + $0x34] sm:$0xf]
          %v2668 = vld [vmem:[%s8 + $0x38] sm:$0xf]
          %v2669 = vld [vmem:[%s8 + $0x3c] sm:$0xf]
          %v2670 = vld [vmem:[%s9] sm:$0x1]
          %v2672 = vlaneseq
          %v2673 = vshrl.u32 %v2672, 7
          %v2674 = vsub.s32 0, %v2673
          %v2675 = vrot.slane %v2670, %v2674
          %v2693 = vunpack.c.l.b16 %v2654
          %v2694 = vunpack.c.l.b16 %v2655
          %v2695 = vunpack.c.l.b16 %v2656
          %v2696 = vunpack.c.l.b16 %v2657
          %v2697 = vunpack.c.l.b16 %v2658
          %v2698 = vunpack.c.l.b16 %v2659
          %v2699 = vunpack.c.l.b16 %v2660
          %v2700 = vunpack.c.l.b16 %v2661
          %v2701 = vunpack.c.l.b16 %v2662
          %v2702 = vunpack.c.l.b16 %v2663
          %v2703 = vunpack.c.l.b16 %v2664
          %v2704 = vunpack.c.l.b16 %v2665
          %v2705 = vunpack.c.l.b16 %v2666
          %v2706 = vunpack.c.l.b16 %v2667
          %v2707 = vunpack.c.l.b16 %v2668
          %v2708 = vunpack.c.l.b16 %v2669
          %v2709 = vpack.c.b16 %v2694, %v2693
          %v2710 = vpack.c.b16 %v2696, %v2695
          %v2711 = vpack.c.b16 %v2698, %v2697
          %v2712 = vpack.c.b16 %v2700, %v2699
          %v2713 = vpack.c.b16 %v2702, %v2701
          %v2714 = vpack.c.b16 %v2704, %v2703
          %v2715 = vpack.c.b16 %v2706, %v2705
          %v2716 = vpack.c.b16 %v2708, %v2707
          %2725 = vmatprep.subr.bf16.mxu0 0
          %2726 = vmatpush1.bf16.msra.mxu0 %v2709
          %2727 = vmatprep.subr.bf16.mxu0 0
          %2728 = vmatpush1.bf16.msra.mxu0 %v2710
          %2729 = vmatprep.subr.bf16.mxu0 0
          %2730 = vmatpush1.bf16.msra.mxu0 %v2711
          %2731 = vmatprep.subr.bf16.mxu0 0
          %2732 = vmatpush1.bf16.msra.mxu0 %v2712
          %2733 = vmatprep.subr.bf16.mxu0 0
          %2734 = vmatpush1.bf16.msra.mxu0 %v2713
          %2735 = vmatprep.subr.bf16.mxu0 0
          %2736 = vmatpush1.bf16.msra.mxu0 %v2714
          %2737 = vmatprep.subr.bf16.mxu0 0
          %2738 = vmatpush1.bf16.msra.mxu0 %v2715
          %2739 = vmatprep.subr.bf16.mxu0 0
          %2740 = vmatpush1.bf16.msra.mxu0 %v2716
          %2741 = vmatprep.subr.bf16.mxu0 0
          %2742 = vmatpush1.bf16.msra.mxu0 0
          %2743 = vmatprep.subr.bf16.mxu0 0
          %2744 = vmatpush1.bf16.msra.mxu0 0
          %2745 = vmatprep.subr.bf16.mxu0 0
          %2746 = vmatpush1.bf16.msra.mxu0 0
          %2747 = vmatprep.subr.bf16.mxu0 0
          %2748 = vmatpush1.bf16.msra.mxu0 0
          %2749 = vmatprep.subr.bf16.mxu0 0
          %2750 = vmatpush1.bf16.msra.mxu0 0
          %2751 = vmatprep.subr.bf16.mxu0 0
          %2752 = vmatpush1.bf16.msra.mxu0 0
          %2753 = vmatprep.subr.bf16.mxu0 0
          %2754 = vmatpush1.bf16.msra.mxu0 0
          %2755 = vmatprep.subr.bf16.mxu0 0
          %2756 = vmatpush1.bf16.msra.mxu0 0
          %2757 = vmatprep.mubr.bf16.mxu0 0
          %2758 = vmatmul.mubr.bf16.gmra.mrb[0].mxu0 %v2646
          %v2759 = vpop.f32.mrb[0].mxu0
          %v2760 = vadd.f32 %v2675, %v2759
          %v2761 = vpop.f32.mrb[0].mxu0
          %v2762 = vpop.f32.mrb[0].mxu0
          %v2763 = vadd.f32 %v2675, %v2762
          %v2764 = vpop.f32.mrb[0].mxu0
          %2765 = vmatprep.mubr.bf16.mxu0 0
          %2766 = vmatmul.mubr.bf16.gmra.mrb[0].mxu0 %v2647
          %v2767 = vpop.f32.mrb[0].mxu0
          %v2768 = vadd.f32 %v2675, %v2767
          %v2769 = vpop.f32.mrb[0].mxu0
          %v2770 = vpop.f32.mrb[0].mxu0
          %v2771 = vadd.f32 %v2675, %v2770
          %v2772 = vpop.f32.mrb[0].mxu0
          %2773 = vmatprep.mubr.bf16.mxu0 0
          %2774 = vmatmul.mubr.bf16.gmra.mrb[0].mxu0 %v2648
          %v2775 = vpop.f32.mrb[0].mxu0
          %v2776 = vadd.f32 %v2675, %v2775
          %v2777 = vpop.f32.mrb[0].mxu0
          %v2778 = vpop.f32.mrb[0].mxu0
          %v2779 = vadd.f32 %v2675, %v2778
          %v2780 = vpop.f32.mrb[0].mxu0
          %2781 = vmatprep.mubr.bf16.mxu0 0
          %2782 = vmatmul.mubr.bf16.gmra.mrb[0].mxu0 %v2649
          %v2783 = vpop.f32.mrb[0].mxu0
          %v2784 = vadd.f32 %v2675, %v2783
          %v2785 = vpop.f32.mrb[0].mxu0
          %v2786 = vpop.f32.mrb[0].mxu0
          %v2787 = vadd.f32 %v2675, %v2786
          %v2788 = vpop.f32.mrb[0].mxu0
          %2789 = vmatprep.mubr.bf16.mxu0 0
          %2790 = vmatmul.mubr.bf16.gmra.mrb[0].mxu0 %v2650
          %v2791 = vpop.f32.mrb[0].mxu0
          %v2792 = vadd.f32 %v2675, %v2791
          %v2793 = vpop.f32.mrb[0].mxu0
          %v2794 = vpop.f32.mrb[0].mxu0
          %v2795 = vadd.f32 %v2675, %v2794
          %v2796 = vpop.f32.mrb[0].mxu0
          %2797 = vmatprep.mubr.bf16.mxu0 0
          %2798 = vmatmul.mubr.bf16.gmra.mrb[0].mxu0 %v2651
          %v2799 = vpop.f32.mrb[0].mxu0
          %v2800 = vadd.f32 %v2675, %v2799
          %v2801 = vpop.f32.mrb[0].mxu0
          %v2802 = vpop.f32.mrb[0].mxu0
          %v2803 = vadd.f32 %v2675, %v2802
          %v2804 = vpop.f32.mrb[0].mxu0
          %2805 = vmatprep.mubr.bf16.mxu0 0
          %2806 = vmatmul.mubr.bf16.gmra.mrb[0].mxu0 %v2652
          %v2807 = vpop.f32.mrb[0].mxu0
          %v2808 = vadd.f32 %v2675, %v2807
          %v2809 = vpop.f32.mrb[0].mxu0
          %v2810 = vpop.f32.mrb[0].mxu0
          %v2811 = vadd.f32 %v2675, %v2810
          %v2812 = vpop.f32.mrb[0].mxu0
          %2813 = vmatprep.mubr.bf16.mxu0 0
          %2814 = vmatmul.mubr.bf16.gmra.mrb[0].mxu0 %v2653
          %v2815 = vpop.f32.mrb[0].mxu0
          %v2816 = vadd.f32 %v2675, %v2815
          %v2817 = vpop.f32.mrb[0].mxu0
          %v2818 = vpop.f32.mrb[0].mxu0
          %v2819 = vadd.f32 %v2675, %v2818
          %v2820 = vpop.f32.mrb[0].mxu0
          %2821 = vdwg.mxu0
          %v2822 = vtanh.pop %v2760
          %v2823 = vtanh.pop %v2763
          %v2824 = vtanh.pop %v2768
          %v2825 = vtanh.pop %v2771
          %v2826 = vtanh.pop %v2776
          %v2827 = vtanh.pop %v2779
          %v2828 = vtanh.pop %v2784
          %v2829 = vtanh.pop %v2787
          %v2830 = vtanh.pop %v2792
          %v2831 = vtanh.pop %v2795
          %v2832 = vtanh.pop %v2800
          %v2833 = vtanh.pop %v2803
          %v2834 = vtanh.pop %v2808
          %v2835 = vtanh.pop %v2811
          %v2836 = vtanh.pop %v2816
          %v2837 = vtanh.pop %v2819
          %v2838 = vpack.c.bf16 %v2823, %v2822
          %v2839 = vpack.c.bf16 %v2825, %v2824
          %v2840 = vpack.c.bf16 %v2827, %v2826
          %v2841 = vpack.c.bf16 %v2829, %v2828
          %v2842 = vpack.c.bf16 %v2831, %v2830
          %v2843 = vpack.c.bf16 %v2833, %v2832
          %v2844 = vpack.c.bf16 %v2835, %v2834
          %v2845 = vpack.c.bf16 %v2837, %v2836
          %v2846 = vld [vmem:[%s10] sm:$0xff]
          %v2847 = vld [vmem:[%s10 + $0x8] sm:$0xff]
          %v2848 = vld [vmem:[%s10 + $0x10] sm:$0xff]
          %v2849 = vld [vmem:[%s10 + $0x18] sm:$0xff]
          %v2850 = vld [vmem:[%s10 + $0x20] sm:$0xff]
          %v2851 = vld [vmem:[%s10 + $0x28] sm:$0xff]
          %v2852 = vld [vmem:[%s10 + $0x30] sm:$0xff]
          %v2853 = vld [vmem:[%s10 + $0x38] sm:$0xff]
          %v2854 = vld [vmem:[%s10 + $0x40] sm:$0xff]
          %v2855 = vld [vmem:[%s10 + $0x48] sm:$0xff]
          %v2856 = vld [vmem:[%s10 + $0x50] sm:$0xff]
          %v2857 = vld [vmem:[%s10 + $0x58] sm:$0xff]
          %v2858 = vld [vmem:[%s10 + $0x60] sm:$0xff]
          %v2859 = vld [vmem:[%s10 + $0x68] sm:$0xff]
          %v2860 = vld [vmem:[%s10 + $0x70] sm:$0xff]
          %v2861 = vld [vmem:[%s10 + $0x78] sm:$0xff]
          %v2862 = vld [vmem:[%s11] sm:$0x3]
          %v2864 = vlaneseq
          %v2865 = vshrl.u32 %v2864, 7
          %v2866 = vsub.s32 0, %v2865
          %v2867 = vrot.slane %v2862, %v2866
          %v2868 = vlaneseq
          %v2869 = vshrl.u32 %v2868, 7
          %v2870 = vsub.s32 1, %v2869
          %v2871 = vrot.slane %v2862, %v2870
          %v2890 = vunpack.c.l.b16 %v2846
          %v2891 = vunpack.c.h.b16 %v2846
          %v2892 = vunpack.c.l.b16 %v2847
          %v2893 = vunpack.c.h.b16 %v2847
          %v2894 = vunpack.c.l.b16 %v2848
          %v2895 = vunpack.c.h.b16 %v2848
          %v2896 = vunpack.c.l.b16 %v2849
          %v2897 = vunpack.c.h.b16 %v2849
          %v2898 = vunpack.c.l.b16 %v2850
          %v2899 = vunpack.c.h.b16 %v2850
          %v2900 = vunpack.c.l.b16 %v2851
          %v2901 = vunpack.c.h.b16 %v2851
          %v2902 = vunpack.c.l.b16 %v2852
          %v2903 = vunpack.c.h.b16 %v2852
          %v2904 = vunpack.c.l.b16 %v2853
          %v2905 = vunpack.c.h.b16 %v2853
          %v2906 = vunpack.c.l.b16 %v2854
          %v2907 = vunpack.c.h.b16 %v2854
          %v2908 = vunpack.c.l.b16 %v2855
          %v2909 = vunpack.c.h.b16 %v2855
          %v2910 = vunpack.c.l.b16 %v2856
          %v2911 = vunpack.c.h.b16 %v2856
          %v2912 = vunpack.c.l.b16 %v2857
          %v2913 = vunpack.c.h.b16 %v2857
          %v2914 = vunpack.c.l.b16 %v2858
          %v2915 = vunpack.c.h.b16 %v2858
          %v2916 = vunpack.c.l.b16 %v2859
          %v2917 = vunpack.c.h.b16 %v2859
          %v2918 = vunpack.c.l.b16 %v2860
          %v2919 = vunpack.c.h.b16 %v2860
          %v2920 = vunpack.c.l.b16 %v2861
          %v2921 = vunpack.c.h.b16 %v2861
          %v2922 = vpack.c.b16 %v2892, %v2890
          %v2923 = vpack.c.b16 %v2893, %v2891
          %v2924 = vpack.c.b16 %v2896, %v2894
          %v2925 = vpack.c.b16 %v2897, %v2895
          %v2926 = vpack.c.b16 %v2900, %v2898
          %v2927 = vpack.c.b16 %v2901, %v2899
          %v2928 = vpack.c.b16 %v2904, %v2902
          %v2929 = vpack.c.b16 %v2905, %v2903
          %v2930 = vpack.c.b16 %v2908, %v2906
          %v2931 = vpack.c.b16 %v2909, %v2907
          %v2932 = vpack.c.b16 %v2912, %v2910
          %v2933 = vpack.c.b16 %v2913, %v2911
          %v2934 = vpack.c.b16 %v2916, %v2914
          %v2935 = vpack.c.b16 %v2917, %v2915
          %v2936 = vpack.c.b16 %v2920, %v2918
          %v2937 = vpack.c.b16 %v2921, %v2919
          %2954 = vmatprep.subr.bf16.mxu0 %v2923
          %2955 = vmatpush1.bf16.msra.mxu0 %v2922
          %2956 = vmatprep.subr.bf16.mxu0 %v2925
          %2957 = vmatpush1.bf16.msra.mxu0 %v2924
          %2958 = vmatprep.subr.bf16.mxu0 %v2927
          %2959 = vmatpush1.bf16.msra.mxu0 %v2926
          %2960 = vmatprep.subr.bf16.mxu0 %v2929
          %2961 = vmatpush1.bf16.msra.mxu0 %v2928
          %2962 = vmatprep.subr.bf16.mxu0 %v2931
          %2963 = vmatpush1.bf16.msra.mxu0 %v2930
          %2964 = vmatprep.subr.bf16.mxu0 %v2933
          %2965 = vmatpush1.bf16.msra.mxu0 %v2932
          %2966 = vmatprep.subr.bf16.mxu0 %v2935
          %2967 = vmatpush1.bf16.msra.mxu0 %v2934
          %2968 = vmatprep.subr.bf16.mxu0 %v2937
          %2969 = vmatpush1.bf16.msra.mxu0 %v2936
          %2970 = vmatprep.subr.bf16.mxu0 0
          %2971 = vmatpush1.bf16.msra.mxu0 0
          %2972 = vmatprep.subr.bf16.mxu0 0
          %2973 = vmatpush1.bf16.msra.mxu0 0
          %2974 = vmatprep.subr.bf16.mxu0 0
          %2975 = vmatpush1.bf16.msra.mxu0 0
          %2976 = vmatprep.subr.bf16.mxu0 0
          %2977 = vmatpush1.bf16.msra.mxu0 0
          %2978 = vmatprep.subr.bf16.mxu0 0
          %2979 = vmatpush1.bf16.msra.mxu0 0
          %2980 = vmatprep.subr.bf16.mxu0 0
          %2981 = vmatpush1.bf16.msra.mxu0 0
          %2982 = vmatprep.subr.bf16.mxu0 0
          %2983 = vmatpush1.bf16.msra.mxu0 0
          %2984 = vmatprep.subr.bf16.mxu0 0
          %2985 = vmatpush1.bf16.msra.mxu0 0
          %2986 = vmatprep.mubr.bf16.mxu0 0
          %2987 = vmatmul.mubr.bf16.gmra.mrb[0].mxu0 %v2838
          %v2988 = vpop.f32.mrb[0].mxu0
          %v2989 = vadd.f32 %v2867, %v2988
          %v2990 = vpop.f32.mrb[0].mxu0
          %v2991 = vadd.f32 %v2871, %v2990
          %v2992 = vpop.f32.mrb[0].mxu0
          %v2993 = vadd.f32 %v2867, %v2992
          %v2994 = vpop.f32.mrb[0].mxu0
          %v2995 = vadd.f32 %v2871, %v2994
          %2996 = vmatprep.mubr.bf16.mxu0 0
          %2997 = vmatmul.mubr.bf16.gmra.mrb[0].mxu0 %v2839
          %v2998 = vpop.f32.mrb[0].mxu0
          %v2999 = vadd.f32 %v2867, %v2998
          %v3000 = vpop.f32.mrb[0].mxu0
          %v3001 = vadd.f32 %v2871, %v3000
          %v3002 = vpop.f32.mrb[0].mxu0
          %v3003 = vadd.f32 %v2867, %v3002
          %v3004 = vpop.f32.mrb[0].mxu0
          %v3005 = vadd.f32 %v2871, %v3004
          %3006 = vmatprep.mubr.bf16.mxu0 0
          %3007 = vmatmul.mubr.bf16.gmra.mrb[0].mxu0 %v2840
          %v3008 = vpop.f32.mrb[0].mxu0
          %v3009 = vadd.f32 %v2867, %v3008
          %v3010 = vpop.f32.mrb[0].mxu0
          %v3011 = vadd.f32 %v2871, %v3010
          %v3012 = vpop.f32.mrb[0].mxu0
          %v3013 = vadd.f32 %v2867, %v3012
          %v3014 = vpop.f32.mrb[0].mxu0
          %v3015 = vadd.f32 %v2871, %v3014
          %3016 = vmatprep.mubr.bf16.mxu0 0
          %3017 = vmatmul.mubr.bf16.gmra.mrb[0].mxu0 %v2841
          %v3018 = vpop.f32.mrb[0].mxu0
          %v3019 = vadd.f32 %v2867, %v3018
          %v3020 = vpop.f32.mrb[0].mxu0
          %v3021 = vadd.f32 %v2871, %v3020
          %v3022 = vpop.f32.mrb[0].mxu0
          %v3023 = vadd.f32 %v2867, %v3022
          %v3024 = vpop.f32.mrb[0].mxu0
          %v3025 = vadd.f32 %v2871, %v3024
          %3026 = vmatprep.mubr.bf16.mxu0 0
          %3027 = vmatmul.mubr.bf16.gmra.mrb[0].mxu0 %v2842
          %v3028 = vpop.f32.mrb[0].mxu0
          %v3029 = vadd.f32 %v2867, %v3028
          %v3030 = vpop.f32.mrb[0].mxu0
          %v3031 = vadd.f32 %v2871, %v3030
          %v3032 = vpop.f32.mrb[0].mxu0
          %v3033 = vadd.f32 %v2867, %v3032
          %v3034 = vpop.f32.mrb[0].mxu0
          %v3035 = vadd.f32 %v2871, %v3034
          %3036 = vmatprep.mubr.bf16.mxu0 0
          %3037 = vmatmul.mubr.bf16.gmra.mrb[0].mxu0 %v2843
          %v3038 = vpop.f32.mrb[0].mxu0
          %v3039 = vadd.f32 %v2867, %v3038
          %v3040 = vpop.f32.mrb[0].mxu0
          %v3041 = vadd.f32 %v2871, %v3040
          %v3042 = vpop.f32.mrb[0].mxu0
          %v3043 = vadd.f32 %v2867, %v3042
          %v3044 = vpop.f32.mrb[0].mxu0
          %v3045 = vadd.f32 %v2871, %v3044
          %3046 = vmatprep.mubr.bf16.mxu0 0
          %3047 = vmatmul.mubr.bf16.gmra.mrb[0].mxu0 %v2844
          %v3048 = vpop.f32.mrb[0].mxu0
          %v3049 = vadd.f32 %v2867, %v3048
          %v3050 = vpop.f32.mrb[0].mxu0
          %v3051 = vadd.f32 %v2871, %v3050
          %v3052 = vpop.f32.mrb[0].mxu0
          %v3053 = vadd.f32 %v2867, %v3052
          %v3054 = vpop.f32.mrb[0].mxu0
          %v3055 = vadd.f32 %v2871, %v3054
          %3056 = vmatprep.mubr.bf16.mxu0 0
          %3057 = vmatmul.mubr.bf16.gmra.mrb[0].mxu0 %v2845
          %v3058 = vpop.f32.mrb[0].mxu0
          %v3059 = vadd.f32 %v2867, %v3058
          %v3060 = vpop.f32.mrb[0].mxu0
          %v3061 = vadd.f32 %v2871, %v3060
          %v3062 = vpop.f32.mrb[0].mxu0
          %v3063 = vadd.f32 %v2867, %v3062
          %v3064 = vpop.f32.mrb[0].mxu0
          %v3065 = vadd.f32 %v2871, %v3064
          %3066 = vdwg.mxu0
          %v3067 = vtanh.pop %v2989
          %v3068 = vtanh.pop %v2991
          %v3069 = vtanh.pop %v2993
          %v3070 = vtanh.pop %v2995
          %v3071 = vtanh.pop %v2999
          %v3072 = vtanh.pop %v3001
          %v3073 = vtanh.pop %v3003
          %v3074 = vtanh.pop %v3005
          %v3075 = vtanh.pop %v3009
          %v3076 = vtanh.pop %v3011
          %v3077 = vtanh.pop %v3013
          %v3078 = vtanh.pop %v3015
          %v3079 = vtanh.pop %v3019
          %v3080 = vtanh.pop %v3021
          %v3081 = vtanh.pop %v3023
          %v3082 = vtanh.pop %v3025
          %v3083 = vtanh.pop %v3029
          %v3084 = vtanh.pop %v3031
          %v3085 = vtanh.pop %v3033
          %v3086 = vtanh.pop %v3035
          %v3087 = vtanh.pop %v3039
          %v3088 = vtanh.pop %v3041
          %v3089 = vtanh.pop %v3043
          %v3090 = vtanh.pop %v3045
          %v3091 = vtanh.pop %v3049
          %v3092 = vtanh.pop %v3051
          %v3093 = vtanh.pop %v3053
          %v3094 = vtanh.pop %v3055
          %v3095 = vtanh.pop %v3059
          %v3096 = vtanh.pop %v3061
          %v3097 = vtanh.pop %v3063
          %v3098 = vtanh.pop %v3065
          %v3099 = vpack.c.bf16 %v3069, %v3067
          %v3100 = vpack.c.bf16 %v3070, %v3068
          %v3101 = vpack.c.bf16 %v3073, %v3071
          %v3102 = vpack.c.bf16 %v3074, %v3072
          %v3103 = vpack.c.bf16 %v3077, %v3075
          %v3104 = vpack.c.bf16 %v3078, %v3076
          %v3105 = vpack.c.bf16 %v3081, %v3079
          %v3106 = vpack.c.bf16 %v3082, %v3080
          %v3107 = vpack.c.bf16 %v3085, %v3083
          %v3108 = vpack.c.bf16 %v3086, %v3084
          %v3109 = vpack.c.bf16 %v3089, %v3087
          %v3110 = vpack.c.bf16 %v3090, %v3088
          %v3111 = vpack.c.bf16 %v3093, %v3091
          %v3112 = vpack.c.bf16 %v3094, %v3092
          %v3113 = vpack.c.bf16 %v3097, %v3095
          %v3114 = vpack.c.bf16 %v3098, %v3096
          %3115 = vst [vmem:[#allocation4] sm:$0xff] %v3099
          %3116 = vst [vmem:[#allocation4 + $0x8] sm:$0xff] %v3100
          %3117 = vst [vmem:[#allocation4 + $0x10] sm:$0xff] %v3101
          %3118 = vst [vmem:[#allocation4 + $0x18] sm:$0xff] %v3102
          %3119 = vst [vmem:[#allocation4 + $0x20] sm:$0xff] %v3103
          %3120 = vst [vmem:[#allocation4 + $0x28] sm:$0xff] %v3104
          %3121 = vst [vmem:[#allocation4 + $0x30] sm:$0xff] %v3105
          %3122 = vst [vmem:[#allocation4 + $0x38] sm:$0xff] %v3106
          %3123 = vst [vmem:[#allocation4 + $0x40] sm:$0xff] %v3107
          %3124 = vst [vmem:[#allocation4 + $0x48] sm:$0xff] %v3108
          %3125 = vst [vmem:[#allocation4 + $0x50] sm:$0xff] %v3109
          %3126 = vst [vmem:[#allocation4 + $0x58] sm:$0xff] %v3110
          %3127 = vst [vmem:[#allocation4 + $0x60] sm:$0xff] %v3111
          %3128 = vst [vmem:[#allocation4 + $0x68] sm:$0xff] %v3112
          %3129 = vst [vmem:[#allocation4 + $0x70] sm:$0xff] %v3113
          %3130 = vst [vmem:[#allocation4 + $0x78] sm:$0xff] %v3114
        $region134: #{multvae_forward.1} parent=113 // pred_fallthru
          _
        %p3131 = scmp.ge.s32.totalorder %s39, 2
        // Predicated region
        $region135: #{multvae_forward.1} parent=113 // pred_check
          %p3132 = pneg %p3131
        $region136: #{multvae_forward.1} parent=113 // pred_check_branch
          %3134 = sbr.rel (%p3132) target = $region138
        $region137: #{multvae_forward.1} parent=113 // pred_region
          %v3135 = vld [vmem:[#allocation4] sm:$0xff]
          %v3136 = vld [vmem:[#allocation4 + $0x8] sm:$0xff]
          %v3137 = vld [vmem:[#allocation4 + $0x10] sm:$0xff]
          %v3138 = vld [vmem:[#allocation4 + $0x18] sm:$0xff]
          %v3139 = vld [vmem:[#allocation4 + $0x20] sm:$0xff]
          %v3140 = vld [vmem:[#allocation4 + $0x28] sm:$0xff]
          %v3141 = vld [vmem:[#allocation4 + $0x30] sm:$0xff]
          %v3142 = vld [vmem:[#allocation4 + $0x38] sm:$0xff]
          %v3143 = vld [vmem:[#allocation4 + $0x40] sm:$0xff]
          %v3144 = vld [vmem:[#allocation4 + $0x48] sm:$0xff]
          %v3145 = vld [vmem:[#allocation4 + $0x50] sm:$0xff]
          %v3146 = vld [vmem:[#allocation4 + $0x58] sm:$0xff]
          %v3147 = vld [vmem:[#allocation4 + $0x60] sm:$0xff]
          %v3148 = vld [vmem:[#allocation4 + $0x68] sm:$0xff]
          %v3149 = vld [vmem:[#allocation4 + $0x70] sm:$0xff]
          %v3150 = vld [vmem:[#allocation4 + $0x78] sm:$0xff]
          %v3151 = vld [vmem:[%s818] sm:$0xff]
          %v3152 = vld [vmem:[%s818 + $0x8] sm:$0xff]
          %v3153 = vld [vmem:[%s818 + $0x10] sm:$0xff]
          %v3154 = vld [vmem:[%s818 + $0x18] sm:$0xff]
          %v3155 = vld [vmem:[%s818 + $0x20] sm:$0xff]
          %v3156 = vld [vmem:[%s818 + $0x28] sm:$0xff]
          %v3157 = vld [vmem:[%s818 + $0x30] sm:$0xff]
          %v3158 = vld [vmem:[%s818 + $0x38] sm:$0xff]
          %v3159 = vld [vmem:[%s818 + $0x40] sm:$0xff]
          %v3160 = vld [vmem:[%s818 + $0x48] sm:$0xff]
          %v3161 = vld [vmem:[%s818 + $0x50] sm:$0xff]
          %v3162 = vld [vmem:[%s818 + $0x58] sm:$0xff]
          %v3163 = vld [vmem:[%s818 + $0x60] sm:$0xff]
          %v3164 = vld [vmem:[%s818 + $0x68] sm:$0xff]
          %v3165 = vld [vmem:[%s818 + $0x70] sm:$0xff]
          %v3166 = vld [vmem:[%s818 + $0x78] sm:$0xff]
          %v3167 = vld [vmem:[%s818 + $0x80] sm:$0xff]
          %v3168 = vld [vmem:[%s818 + $0x88] sm:$0xff]
          %v3169 = vld [vmem:[%s818 + $0x90] sm:$0xff]
          %v3170 = vld [vmem:[%s818 + $0x98] sm:$0xff]
          %v3171 = vld [vmem:[%s818 + $0xa0] sm:$0xff]
          %v3172 = vld [vmem:[%s818 + $0xa8] sm:$0xff]
          %v3173 = vld [vmem:[%s818 + $0xb0] sm:$0xff]
          %v3174 = vld [vmem:[%s818 + $0xb8] sm:$0xff]
          %v3175 = vld [vmem:[%s818 + $0xc0] sm:$0xff]
          %v3176 = vld [vmem:[%s818 + $0xc8] sm:$0xff]
          %v3177 = vld [vmem:[%s818 + $0xd0] sm:$0xff]
          %v3178 = vld [vmem:[%s818 + $0xd8] sm:$0xff]
          %v3179 = vld [vmem:[%s818 + $0xe0] sm:$0xff]
          %v3180 = vld [vmem:[%s818 + $0xe8] sm:$0xff]
          %v3181 = vld [vmem:[%s818 + $0xf0] sm:$0xff]
          %v3182 = vld [vmem:[%s818 + $0xf8] sm:$0xff]
          %v3183 = vld [vmem:[%s818 + $0x100] sm:$0xff]
          %v3184 = vld [vmem:[%s818 + $0x108] sm:$0xff]
          %v3185 = vld [vmem:[%s818 + $0x110] sm:$0xff]
          %v3186 = vld [vmem:[%s818 + $0x118] sm:$0xff]
          %v3187 = vld [vmem:[%s818 + $0x120] sm:$0xff]
          %v3188 = vld [vmem:[%s818 + $0x128] sm:$0xff]
          %v3189 = vld [vmem:[%s818 + $0x130] sm:$0xff]
          %v3190 = vld [vmem:[%s818 + $0x138] sm:$0xff]
          %v3191 = vld [vmem:[%s818 + $0x140] sm:$0xff]
          %v3192 = vld [vmem:[%s818 + $0x148] sm:$0xff]
          %v3193 = vld [vmem:[%s818 + $0x150] sm:$0xff]
          %v3194 = vld [vmem:[%s818 + $0x158] sm:$0xff]
          %v3195 = vld [vmem:[%s818 + $0x160] sm:$0xff]
          %v3196 = vld [vmem:[%s818 + $0x168] sm:$0xff]
          %v3197 = vld [vmem:[%s818 + $0x170] sm:$0xff]
          %v3198 = vld [vmem:[%s818 + $0x178] sm:$0xff]
          %v3199 = vld [vmem:[%s818 + $0x180] sm:$0xff]
          %v3200 = vld [vmem:[%s818 + $0x188] sm:$0xff]
          %v3201 = vld [vmem:[%s818 + $0x190] sm:$0xff]
          %v3202 = vld [vmem:[%s818 + $0x198] sm:$0xff]
          %v3203 = vld [vmem:[%s818 + $0x1a0] sm:$0xff]
          %v3204 = vld [vmem:[%s818 + $0x1a8] sm:$0xff]
          %v3205 = vld [vmem:[%s818 + $0x1b0] sm:$0xff]
          %v3206 = vld [vmem:[%s818 + $0x1b8] sm:$0xff]
          %v3207 = vld [vmem:[%s818 + $0x1c0] sm:$0xff]
          %v3208 = vld [vmem:[%s818 + $0x1c8] sm:$0xff]
          %v3209 = vld [vmem:[%s818 + $0x1d0] sm:$0xff]
          %v3210 = vld [vmem:[%s818 + $0x1d8] sm:$0xff]
          %v3211 = vld [vmem:[%s818 + $0x1e0] sm:$0xff]
          %v3212 = vld [vmem:[%s818 + $0x1e8] sm:$0xff]
          %v3213 = vld [vmem:[%s818 + $0x1f0] sm:$0xff]
          %v3214 = vld [vmem:[%s818 + $0x1f8] sm:$0xff]
          %v3215 = vld [vmem:[%s930] sm:$0xf]
          %v3217 = vlaneseq
          %v3218 = vshrl.u32 %v3217, 7
          %v3219 = vsub.s32 0, %v3218
          %v3220 = vrot.slane %v3215, %v3219
          %v3221 = vlaneseq
          %v3222 = vshrl.u32 %v3221, 7
          %v3223 = vsub.s32 1, %v3222
          %v3224 = vrot.slane %v3215, %v3223
          %v3225 = vlaneseq
          %v3226 = vshrl.u32 %v3225, 7
          %v3227 = vsub.s32 2, %v3226
          %v3228 = vrot.slane %v3215, %v3227
          %v3229 = vlaneseq
          %v3230 = vshrl.u32 %v3229, 7
          %v3231 = vsub.s32 3, %v3230
          %v3232 = vrot.slane %v3215, %v3231
          %v3301 = vunpack.c.l.b16 %v3151
          %v3302 = vunpack.c.h.b16 %v3151
          %v3303 = vunpack.c.l.b16 %v3152
          %v3304 = vunpack.c.h.b16 %v3152
          %v3305 = vunpack.c.l.b16 %v3153
          %v3306 = vunpack.c.h.b16 %v3153
          %v3307 = vunpack.c.l.b16 %v3154
          %v3308 = vunpack.c.h.b16 %v3154
          %v3309 = vunpack.c.l.b16 %v3155
          %v3310 = vunpack.c.h.b16 %v3155
          %v3311 = vunpack.c.l.b16 %v3156
          %v3312 = vunpack.c.h.b16 %v3156
          %v3313 = vunpack.c.l.b16 %v3157
          %v3314 = vunpack.c.h.b16 %v3157
          %v3315 = vunpack.c.l.b16 %v3158
          %v3316 = vunpack.c.h.b16 %v3158
          %v3317 = vunpack.c.l.b16 %v3159
          %v3318 = vunpack.c.h.b16 %v3159
          %v3319 = vunpack.c.l.b16 %v3160
          %v3320 = vunpack.c.h.b16 %v3160
          %v3321 = vunpack.c.l.b16 %v3161
          %v3322 = vunpack.c.h.b16 %v3161
          %v3323 = vunpack.c.l.b16 %v3162
          %v3324 = vunpack.c.h.b16 %v3162
          %v3325 = vunpack.c.l.b16 %v3163
          %v3326 = vunpack.c.h.b16 %v3163
          %v3327 = vunpack.c.l.b16 %v3164
          %v3328 = vunpack.c.h.b16 %v3164
          %v3329 = vunpack.c.l.b16 %v3165
          %v3330 = vunpack.c.h.b16 %v3165
          %v3331 = vunpack.c.l.b16 %v3166
          %v3332 = vunpack.c.h.b16 %v3166
          %v3333 = vunpack.c.l.b16 %v3167
          %v3334 = vunpack.c.h.b16 %v3167
          %v3335 = vunpack.c.l.b16 %v3168
          %v3336 = vunpack.c.h.b16 %v3168
          %v3337 = vunpack.c.l.b16 %v3169
          %v3338 = vunpack.c.h.b16 %v3169
          %v3339 = vunpack.c.l.b16 %v3170
          %v3340 = vunpack.c.h.b16 %v3170
          %v3341 = vunpack.c.l.b16 %v3171
          %v3342 = vunpack.c.h.b16 %v3171
          %v3343 = vunpack.c.l.b16 %v3172
          %v3344 = vunpack.c.h.b16 %v3172
          %v3345 = vunpack.c.l.b16 %v3173
          %v3346 = vunpack.c.h.b16 %v3173
          %v3347 = vunpack.c.l.b16 %v3174
          %v3348 = vunpack.c.h.b16 %v3174
          %v3349 = vunpack.c.l.b16 %v3175
          %v3350 = vunpack.c.h.b16 %v3175
          %v3351 = vunpack.c.l.b16 %v3176
          %v3352 = vunpack.c.h.b16 %v3176
          %v3353 = vunpack.c.l.b16 %v3177
          %v3354 = vunpack.c.h.b16 %v3177
          %v3355 = vunpack.c.l.b16 %v3178
          %v3356 = vunpack.c.h.b16 %v3178
          %v3357 = vunpack.c.l.b16 %v3179
          %v3358 = vunpack.c.h.b16 %v3179
          %v3359 = vunpack.c.l.b16 %v3180
          %v3360 = vunpack.c.h.b16 %v3180
          %v3361 = vunpack.c.l.b16 %v3181
          %v3362 = vunpack.c.h.b16 %v3181
          %v3363 = vunpack.c.l.b16 %v3182
          %v3364 = vunpack.c.h.b16 %v3182
          %v3365 = vunpack.c.l.b16 %v3183
          %v3366 = vunpack.c.h.b16 %v3183
          %v3367 = vunpack.c.l.b16 %v3184
          %v3368 = vunpack.c.h.b16 %v3184
          %v3369 = vunpack.c.l.b16 %v3185
          %v3370 = vunpack.c.h.b16 %v3185
          %v3371 = vunpack.c.l.b16 %v3186
          %v3372 = vunpack.c.h.b16 %v3186
          %v3373 = vunpack.c.l.b16 %v3187
          %v3374 = vunpack.c.h.b16 %v3187
          %v3375 = vunpack.c.l.b16 %v3188
          %v3376 = vunpack.c.h.b16 %v3188
          %v3377 = vunpack.c.l.b16 %v3189
          %v3378 = vunpack.c.h.b16 %v3189
          %v3379 = vunpack.c.l.b16 %v3190
          %v3380 = vunpack.c.h.b16 %v3190
          %v3381 = vunpack.c.l.b16 %v3191
          %v3382 = vunpack.c.h.b16 %v3191
          %v3383 = vunpack.c.l.b16 %v3192
          %v3384 = vunpack.c.h.b16 %v3192
          %v3385 = vunpack.c.l.b16 %v3193
          %v3386 = vunpack.c.h.b16 %v3193
          %v3387 = vunpack.c.l.b16 %v3194
          %v3388 = vunpack.c.h.b16 %v3194
          %v3389 = vunpack.c.l.b16 %v3195
          %v3390 = vunpack.c.h.b16 %v3195
          %v3391 = vunpack.c.l.b16 %v3196
          %v3392 = vunpack.c.h.b16 %v3196
          %v3393 = vunpack.c.l.b16 %v3197
          %v3394 = vunpack.c.h.b16 %v3197
          %v3395 = vunpack.c.l.b16 %v3198
          %v3396 = vunpack.c.h.b16 %v3198
          %v3397 = vunpack.c.l.b16 %v3199
          %v3398 = vunpack.c.h.b16 %v3199
          %v3399 = vunpack.c.l.b16 %v3200
          %v3400 = vunpack.c.h.b16 %v3200
          %v3401 = vunpack.c.l.b16 %v3201
          %v3402 = vunpack.c.h.b16 %v3201
          %v3403 = vunpack.c.l.b16 %v3202
          %v3404 = vunpack.c.h.b16 %v3202
          %v3405 = vunpack.c.l.b16 %v3203
          %v3406 = vunpack.c.h.b16 %v3203
          %v3407 = vunpack.c.l.b16 %v3204
          %v3408 = vunpack.c.h.b16 %v3204
          %v3409 = vunpack.c.l.b16 %v3205
          %v3410 = vunpack.c.h.b16 %v3205
          %v3411 = vunpack.c.l.b16 %v3206
          %v3412 = vunpack.c.h.b16 %v3206
          %v3413 = vunpack.c.l.b16 %v3207
          %v3414 = vunpack.c.h.b16 %v3207
          %v3415 = vunpack.c.l.b16 %v3208
          %v3416 = vunpack.c.h.b16 %v3208
          %v3417 = vunpack.c.l.b16 %v3209
          %v3418 = vunpack.c.h.b16 %v3209
          %v3419 = vunpack.c.l.b16 %v3210
          %v3420 = vunpack.c.h.b16 %v3210
          %v3421 = vunpack.c.l.b16 %v3211
          %v3422 = vunpack.c.h.b16 %v3211
          %v3423 = vunpack.c.l.b16 %v3212
          %v3424 = vunpack.c.h.b16 %v3212
          %v3425 = vunpack.c.l.b16 %v3213
          %v3426 = vunpack.c.h.b16 %v3213
          %v3427 = vunpack.c.l.b16 %v3214
          %v3428 = vunpack.c.h.b16 %v3214
          %v3429 = vpack.c.b16 %v3305, %v3301
          %v3430 = vpack.c.b16 %v3306, %v3302
          %v3431 = vpack.c.b16 %v3307, %v3303
          %v3432 = vpack.c.b16 %v3308, %v3304
          %v3433 = vpack.c.b16 %v3313, %v3309
          %v3434 = vpack.c.b16 %v3314, %v3310
          %v3435 = vpack.c.b16 %v3315, %v3311
          %v3436 = vpack.c.b16 %v3316, %v3312
          %v3437 = vpack.c.b16 %v3321, %v3317
          %v3438 = vpack.c.b16 %v3322, %v3318
          %v3439 = vpack.c.b16 %v3323, %v3319
          %v3440 = vpack.c.b16 %v3324, %v3320
          %v3441 = vpack.c.b16 %v3329, %v3325
          %v3442 = vpack.c.b16 %v3330, %v3326
          %v3443 = vpack.c.b16 %v3331, %v3327
          %v3444 = vpack.c.b16 %v3332, %v3328
          %v3445 = vpack.c.b16 %v3337, %v3333
          %v3446 = vpack.c.b16 %v3338, %v3334
          %v3447 = vpack.c.b16 %v3339, %v3335
          %v3448 = vpack.c.b16 %v3340, %v3336
          %v3449 = vpack.c.b16 %v3345, %v3341
          %v3450 = vpack.c.b16 %v3346, %v3342
          %v3451 = vpack.c.b16 %v3347, %v3343
          %v3452 = vpack.c.b16 %v3348, %v3344
          %v3453 = vpack.c.b16 %v3353, %v3349
          %v3454 = vpack.c.b16 %v3354, %v3350
          %v3455 = vpack.c.b16 %v3355, %v3351
          %v3456 = vpack.c.b16 %v3356, %v3352
          %v3457 = vpack.c.b16 %v3361, %v3357
          %v3458 = vpack.c.b16 %v3362, %v3358
          %v3459 = vpack.c.b16 %v3363, %v3359
          %v3460 = vpack.c.b16 %v3364, %v3360
          %v3461 = vpack.c.b16 %v3369, %v3365
          %v3462 = vpack.c.b16 %v3370, %v3366
          %v3463 = vpack.c.b16 %v3371, %v3367
          %v3464 = vpack.c.b16 %v3372, %v3368
          %v3465 = vpack.c.b16 %v3377, %v3373
          %v3466 = vpack.c.b16 %v3378, %v3374
          %v3467 = vpack.c.b16 %v3379, %v3375
          %v3468 = vpack.c.b16 %v3380, %v3376
          %v3469 = vpack.c.b16 %v3385, %v3381
          %v3470 = vpack.c.b16 %v3386, %v3382
          %v3471 = vpack.c.b16 %v3387, %v3383
          %v3472 = vpack.c.b16 %v3388, %v3384
          %v3473 = vpack.c.b16 %v3393, %v3389
          %v3474 = vpack.c.b16 %v3394, %v3390
          %v3475 = vpack.c.b16 %v3395, %v3391
          %v3476 = vpack.c.b16 %v3396, %v3392
          %v3477 = vpack.c.b16 %v3401, %v3397
          %v3478 = vpack.c.b16 %v3402, %v3398
          %v3479 = vpack.c.b16 %v3403, %v3399
          %v3480 = vpack.c.b16 %v3404, %v3400
          %v3481 = vpack.c.b16 %v3409, %v3405
          %v3482 = vpack.c.b16 %v3410, %v3406
          %v3483 = vpack.c.b16 %v3411, %v3407
          %v3484 = vpack.c.b16 %v3412, %v3408
          %v3485 = vpack.c.b16 %v3417, %v3413
          %v3486 = vpack.c.b16 %v3418, %v3414
          %v3487 = vpack.c.b16 %v3419, %v3415
          %v3488 = vpack.c.b16 %v3420, %v3416
          %v3489 = vpack.c.b16 %v3425, %v3421
          %v3490 = vpack.c.b16 %v3426, %v3422
          %v3491 = vpack.c.b16 %v3427, %v3423
          %v3492 = vpack.c.b16 %v3428, %v3424
          %3557 = vmatprep.subr.bf16.mxu0 %v3430
          %3558 = vmatpush1.bf16.msra.mxu0 %v3429
          %3559 = vmatprep.subr.bf16.mxu0 %v3434
          %3560 = vmatpush1.bf16.msra.mxu0 %v3433
          %3561 = vmatprep.subr.bf16.mxu0 %v3438
          %3562 = vmatpush1.bf16.msra.mxu0 %v3437
          %3563 = vmatprep.subr.bf16.mxu0 %v3442
          %3564 = vmatpush1.bf16.msra.mxu0 %v3441
          %3565 = vmatprep.subr.bf16.mxu0 %v3446
          %3566 = vmatpush1.bf16.msra.mxu0 %v3445
          %3567 = vmatprep.subr.bf16.mxu0 %v3450
          %3568 = vmatpush1.bf16.msra.mxu0 %v3449
          %3569 = vmatprep.subr.bf16.mxu0 %v3454
          %3570 = vmatpush1.bf16.msra.mxu0 %v3453
          %3571 = vmatprep.subr.bf16.mxu0 %v3458
          %3572 = vmatpush1.bf16.msra.mxu0 %v3457
          %3573 = vmatprep.subr.bf16.mxu0 %v3462
          %3574 = vmatpush1.bf16.msra.mxu0 %v3461
          %3575 = vmatprep.subr.bf16.mxu0 %v3466
          %3576 = vmatpush1.bf16.msra.mxu0 %v3465
          %3577 = vmatprep.subr.bf16.mxu0 %v3470
          %3578 = vmatpush1.bf16.msra.mxu0 %v3469
          %3579 = vmatprep.subr.bf16.mxu0 %v3474
          %3580 = vmatpush1.bf16.msra.mxu0 %v3473
          %3581 = vmatprep.subr.bf16.mxu0 %v3478
          %3582 = vmatpush1.bf16.msra.mxu0 %v3477
          %3583 = vmatprep.subr.bf16.mxu0 %v3482
          %3584 = vmatpush1.bf16.msra.mxu0 %v3481
          %3585 = vmatprep.subr.bf16.mxu0 %v3486
          %3586 = vmatpush1.bf16.msra.mxu0 %v3485
          %3587 = vmatprep.subr.bf16.mxu0 %v3490
          %3588 = vmatpush1.bf16.msra.mxu0 %v3489
          %3589 = vmatprep.mubr.bf16.mxu0 %v3136
          %3590 = vmatmul.mubr.bf16.gmra.mrb[0].mxu0 %v3135
          %v3591 = vpop.f32.mrb[0].mxu0
          %v3592 = vadd.f32 %v3220, %v3591
          %v3593 = vpop.f32.mrb[0].mxu0
          %v3594 = vadd.f32 %v3224, %v3593
          %v3595 = vpop.f32.mrb[0].mxu0
          %v3596 = vadd.f32 %v3220, %v3595
          %v3597 = vpop.f32.mrb[0].mxu0
          %v3598 = vadd.f32 %v3224, %v3597
          %3599 = vmatprep.mubr.bf16.mxu0 %v3138
          %3600 = vmatmul.mubr.bf16.gmra.mrb[0].mxu0 %v3137
          %v3601 = vpop.f32.mrb[0].mxu0
          %v3602 = vadd.f32 %v3220, %v3601
          %v3603 = vpop.f32.mrb[0].mxu0
          %v3604 = vadd.f32 %v3224, %v3603
          %v3605 = vpop.f32.mrb[0].mxu0
          %v3606 = vadd.f32 %v3220, %v3605
          %v3607 = vpop.f32.mrb[0].mxu0
          %v3608 = vadd.f32 %v3224, %v3607
          %3609 = vmatprep.mubr.bf16.mxu0 %v3140
          %3610 = vmatmul.mubr.bf16.gmra.mrb[0].mxu0 %v3139
          %v3611 = vpop.f32.mrb[0].mxu0
          %v3612 = vadd.f32 %v3220, %v3611
          %v3613 = vpop.f32.mrb[0].mxu0
          %v3614 = vadd.f32 %v3224, %v3613
          %v3615 = vpop.f32.mrb[0].mxu0
          %v3616 = vadd.f32 %v3220, %v3615
          %v3617 = vpop.f32.mrb[0].mxu0
          %v3618 = vadd.f32 %v3224, %v3617
          %3619 = vmatprep.mubr.bf16.mxu0 %v3142
          %3620 = vmatmul.mubr.bf16.gmra.mrb[0].mxu0 %v3141
          %v3621 = vpop.f32.mrb[0].mxu0
          %v3622 = vadd.f32 %v3220, %v3621
          %v3623 = vpop.f32.mrb[0].mxu0
          %v3624 = vadd.f32 %v3224, %v3623
          %v3625 = vpop.f32.mrb[0].mxu0
          %v3626 = vadd.f32 %v3220, %v3625
          %v3627 = vpop.f32.mrb[0].mxu0
          %v3628 = vadd.f32 %v3224, %v3627
          %3629 = vmatprep.mubr.bf16.mxu0 %v3144
          %3630 = vmatmul.mubr.bf16.gmra.mrb[0].mxu0 %v3143
          %v3631 = vpop.f32.mrb[0].mxu0
          %v3632 = vadd.f32 %v3220, %v3631
          %v3633 = vpop.f32.mrb[0].mxu0
          %v3634 = vadd.f32 %v3224, %v3633
          %v3635 = vpop.f32.mrb[0].mxu0
          %v3636 = vadd.f32 %v3220, %v3635
          %v3637 = vpop.f32.mrb[0].mxu0
          %v3638 = vadd.f32 %v3224, %v3637
          %3639 = vmatprep.mubr.bf16.mxu0 %v3146
          %3640 = vmatmul.mubr.bf16.gmra.mrb[0].mxu0 %v3145
          %v3641 = vpop.f32.mrb[0].mxu0
          %v3642 = vadd.f32 %v3220, %v3641
          %v3643 = vpop.f32.mrb[0].mxu0
          %v3644 = vadd.f32 %v3224, %v3643
          %v3645 = vpop.f32.mrb[0].mxu0
          %v3646 = vadd.f32 %v3220, %v3645
          %v3647 = vpop.f32.mrb[0].mxu0
          %v3648 = vadd.f32 %v3224, %v3647
          %3649 = vmatprep.mubr.bf16.mxu0 %v3148
          %3650 = vmatmul.mubr.bf16.gmra.mrb[0].mxu0 %v3147
          %v3651 = vpop.f32.mrb[0].mxu0
          %v3652 = vadd.f32 %v3220, %v3651
          %v3653 = vpop.f32.mrb[0].mxu0
          %v3654 = vadd.f32 %v3224, %v3653
          %v3655 = vpop.f32.mrb[0].mxu0
          %v3656 = vadd.f32 %v3220, %v3655
          %v3657 = vpop.f32.mrb[0].mxu0
          %v3658 = vadd.f32 %v3224, %v3657
          %3659 = vmatprep.mubr.bf16.mxu0 %v3150
          %3660 = vmatmul.mubr.bf16.gmra.mrb[0].mxu0 %v3149
          %v3661 = vpop.f32.mrb[0].mxu0
          %v3662 = vadd.f32 %v3220, %v3661
          %v3663 = vpop.f32.mrb[0].mxu0
          %v3664 = vadd.f32 %v3224, %v3663
          %v3665 = vpop.f32.mrb[0].mxu0
          %v3666 = vadd.f32 %v3220, %v3665
          %v3667 = vpop.f32.mrb[0].mxu0
          %v3668 = vadd.f32 %v3224, %v3667
          %3669 = vdwg.mxu0
          %3670 = vmatprep.subr.bf16.mxu0 %v3432
          %3671 = vmatpush1.bf16.msra.mxu0 %v3431
          %3672 = vmatprep.subr.bf16.mxu0 %v3436
          %3673 = vmatpush1.bf16.msra.mxu0 %v3435
          %3674 = vmatprep.subr.bf16.mxu0 %v3440
          %3675 = vmatpush1.bf16.msra.mxu0 %v3439
          %3676 = vmatprep.subr.bf16.mxu0 %v3444
          %3677 = vmatpush1.bf16.msra.mxu0 %v3443
          %3678 = vmatprep.subr.bf16.mxu0 %v3448
          %3679 = vmatpush1.bf16.msra.mxu0 %v3447
          %3680 = vmatprep.subr.bf16.mxu0 %v3452
          %3681 = vmatpush1.bf16.msra.mxu0 %v3451
          %3682 = vmatprep.subr.bf16.mxu0 %v3456
          %3683 = vmatpush1.bf16.msra.mxu0 %v3455
          %3684 = vmatprep.subr.bf16.mxu0 %v3460
          %3685 = vmatpush1.bf16.msra.mxu0 %v3459
          %3686 = vmatprep.subr.bf16.mxu0 %v3464
          %3687 = vmatpush1.bf16.msra.mxu0 %v3463
          %3688 = vmatprep.subr.bf16.mxu0 %v3468
          %3689 = vmatpush1.bf16.msra.mxu0 %v3467
          %3690 = vmatprep.subr.bf16.mxu0 %v3472
          %3691 = vmatpush1.bf16.msra.mxu0 %v3471
          %3692 = vmatprep.subr.bf16.mxu0 %v3476
          %3693 = vmatpush1.bf16.msra.mxu0 %v3475
          %3694 = vmatprep.subr.bf16.mxu0 %v3480
          %3695 = vmatpush1.bf16.msra.mxu0 %v3479
          %3696 = vmatprep.subr.bf16.mxu0 %v3484
          %3697 = vmatpush1.bf16.msra.mxu0 %v3483
          %3698 = vmatprep.subr.bf16.mxu0 %v3488
          %3699 = vmatpush1.bf16.msra.mxu0 %v3487
          %3700 = vmatprep.subr.bf16.mxu0 %v3492
          %3701 = vmatpush1.bf16.msra.mxu0 %v3491
          %3702 = vmatprep.mubr.bf16.mxu0 %v3136
          %3703 = vmatmul.mubr.bf16.gmra.mrb[0].mxu0 %v3135
          %v3704 = vpop.f32.mrb[0].mxu0
          %v3705 = vadd.f32 %v3228, %v3704
          %v3706 = vpop.f32.mrb[0].mxu0
          %v3707 = vadd.f32 %v3232, %v3706
          %v3708 = vpop.f32.mrb[0].mxu0
          %v3709 = vadd.f32 %v3228, %v3708
          %v3710 = vpop.f32.mrb[0].mxu0
          %v3711 = vadd.f32 %v3232, %v3710
          %3712 = vmatprep.mubr.bf16.mxu0 %v3138
          %3713 = vmatmul.mubr.bf16.gmra.mrb[0].mxu0 %v3137
          %v3714 = vpop.f32.mrb[0].mxu0
          %v3715 = vadd.f32 %v3228, %v3714
          %v3716 = vpop.f32.mrb[0].mxu0
          %v3717 = vadd.f32 %v3232, %v3716
          %v3718 = vpop.f32.mrb[0].mxu0
          %v3719 = vadd.f32 %v3228, %v3718
          %v3720 = vpop.f32.mrb[0].mxu0
          %v3721 = vadd.f32 %v3232, %v3720
          %3722 = vmatprep.mubr.bf16.mxu0 %v3140
          %3723 = vmatmul.mubr.bf16.gmra.mrb[0].mxu0 %v3139
          %v3724 = vpop.f32.mrb[0].mxu0
          %v3725 = vadd.f32 %v3228, %v3724
          %v3726 = vpop.f32.mrb[0].mxu0
          %v3727 = vadd.f32 %v3232, %v3726
          %v3728 = vpop.f32.mrb[0].mxu0
          %v3729 = vadd.f32 %v3228, %v3728
          %v3730 = vpop.f32.mrb[0].mxu0
          %v3731 = vadd.f32 %v3232, %v3730
          %3732 = vmatprep.mubr.bf16.mxu0 %v3142
          %3733 = vmatmul.mubr.bf16.gmra.mrb[0].mxu0 %v3141
          %v3734 = vpop.f32.mrb[0].mxu0
          %v3735 = vadd.f32 %v3228, %v3734
          %v3736 = vpop.f32.mrb[0].mxu0
          %v3737 = vadd.f32 %v3232, %v3736
          %v3738 = vpop.f32.mrb[0].mxu0
          %v3739 = vadd.f32 %v3228, %v3738
          %v3740 = vpop.f32.mrb[0].mxu0
          %v3741 = vadd.f32 %v3232, %v3740
          %3742 = vmatprep.mubr.bf16.mxu0 %v3144
          %3743 = vmatmul.mubr.bf16.gmra.mrb[0].mxu0 %v3143
          %v3744 = vpop.f32.mrb[0].mxu0
          %v3745 = vadd.f32 %v3228, %v3744
          %v3746 = vpop.f32.mrb[0].mxu0
          %v3747 = vadd.f32 %v3232, %v3746
          %v3748 = vpop.f32.mrb[0].mxu0
          %v3749 = vadd.f32 %v3228, %v3748
          %v3750 = vpop.f32.mrb[0].mxu0
          %v3751 = vadd.f32 %v3232, %v3750
          %3752 = vmatprep.mubr.bf16.mxu0 %v3146
          %3753 = vmatmul.mubr.bf16.gmra.mrb[0].mxu0 %v3145
          %v3754 = vpop.f32.mrb[0].mxu0
          %v3755 = vadd.f32 %v3228, %v3754
          %v3756 = vpop.f32.mrb[0].mxu0
          %v3757 = vadd.f32 %v3232, %v3756
          %v3758 = vpop.f32.mrb[0].mxu0
          %v3759 = vadd.f32 %v3228, %v3758
          %v3760 = vpop.f32.mrb[0].mxu0
          %v3761 = vadd.f32 %v3232, %v3760
          %3762 = vmatprep.mubr.bf16.mxu0 %v3148
          %3763 = vmatmul.mubr.bf16.gmra.mrb[0].mxu0 %v3147
          %v3764 = vpop.f32.mrb[0].mxu0
          %v3765 = vadd.f32 %v3228, %v3764
          %v3766 = vpop.f32.mrb[0].mxu0
          %v3767 = vadd.f32 %v3232, %v3766
          %v3768 = vpop.f32.mrb[0].mxu0
          %v3769 = vadd.f32 %v3228, %v3768
          %v3770 = vpop.f32.mrb[0].mxu0
          %v3771 = vadd.f32 %v3232, %v3770
          %3772 = vmatprep.mubr.bf16.mxu0 %v3150
          %3773 = vmatmul.mubr.bf16.gmra.mrb[0].mxu0 %v3149
          %v3774 = vpop.f32.mrb[0].mxu0
          %v3775 = vadd.f32 %v3228, %v3774
          %v3776 = vpop.f32.mrb[0].mxu0
          %v3777 = vadd.f32 %v3232, %v3776
          %v3778 = vpop.f32.mrb[0].mxu0
          %v3779 = vadd.f32 %v3228, %v3778
          %v3780 = vpop.f32.mrb[0].mxu0
          %v3781 = vadd.f32 %v3232, %v3780
          %3782 = vdwg.mxu0
          %v3783 = vpack.c.bf16 %v3596, %v3592
          %v3784 = vpack.c.bf16 %v3598, %v3594
          %v3785 = vpack.c.bf16 %v3709, %v3705
          %v3786 = vpack.c.bf16 %v3711, %v3707
          %v3787 = vpack.c.bf16 %v3606, %v3602
          %v3788 = vpack.c.bf16 %v3608, %v3604
          %v3789 = vpack.c.bf16 %v3719, %v3715
          %v3790 = vpack.c.bf16 %v3721, %v3717
          %v3791 = vpack.c.bf16 %v3616, %v3612
          %v3792 = vpack.c.bf16 %v3618, %v3614
          %v3793 = vpack.c.bf16 %v3729, %v3725
          %v3794 = vpack.c.bf16 %v3731, %v3727
          %v3795 = vpack.c.bf16 %v3626, %v3622
          %v3796 = vpack.c.bf16 %v3628, %v3624
          %v3797 = vpack.c.bf16 %v3739, %v3735
          %v3798 = vpack.c.bf16 %v3741, %v3737
          %v3799 = vpack.c.bf16 %v3636, %v3632
          %v3800 = vpack.c.bf16 %v3638, %v3634
          %v3801 = vpack.c.bf16 %v3749, %v3745
          %v3802 = vpack.c.bf16 %v3751, %v3747
          %v3803 = vpack.c.bf16 %v3646, %v3642
          %v3804 = vpack.c.bf16 %v3648, %v3644
          %v3805 = vpack.c.bf16 %v3759, %v3755
          %v3806 = vpack.c.bf16 %v3761, %v3757
          %v3807 = vpack.c.bf16 %v3656, %v3652
          %v3808 = vpack.c.bf16 %v3658, %v3654
          %v3809 = vpack.c.bf16 %v3769, %v3765
          %v3810 = vpack.c.bf16 %v3771, %v3767
          %v3811 = vpack.c.bf16 %v3666, %v3662
          %v3812 = vpack.c.bf16 %v3668, %v3664
          %v3813 = vpack.c.bf16 %v3779, %v3775
          %v3814 = vpack.c.bf16 %v3781, %v3777
          %v3847 = vunpack.c.l.b16 %v3783
          %v3848 = vunpack.c.l.b16 %v3784
          %v3849 = vunpack.c.l.b16 %v3785
          %v3850 = vunpack.c.l.b16 %v3786
          %v3851 = vunpack.c.h.b16 %v3783
          %v3852 = vunpack.c.h.b16 %v3784
          %v3853 = vunpack.c.h.b16 %v3785
          %v3854 = vunpack.c.h.b16 %v3786
          %v3855 = vunpack.c.l.b16 %v3787
          %v3856 = vunpack.c.l.b16 %v3788
          %v3857 = vunpack.c.l.b16 %v3789
          %v3858 = vunpack.c.l.b16 %v3790
          %v3859 = vunpack.c.h.b16 %v3787
          %v3860 = vunpack.c.h.b16 %v3788
          %v3861 = vunpack.c.h.b16 %v3789
          %v3862 = vunpack.c.h.b16 %v3790
          %v3863 = vunpack.c.l.b16 %v3791
          %v3864 = vunpack.c.l.b16 %v3792
          %v3865 = vunpack.c.l.b16 %v3793
          %v3866 = vunpack.c.l.b16 %v3794
          %v3867 = vunpack.c.h.b16 %v3791
          %v3868 = vunpack.c.h.b16 %v3792
          %v3869 = vunpack.c.h.b16 %v3793
          %v3870 = vunpack.c.h.b16 %v3794
          %v3871 = vunpack.c.l.b16 %v3795
          %v3872 = vunpack.c.l.b16 %v3796
          %v3873 = vunpack.c.l.b16 %v3797
          %v3874 = vunpack.c.l.b16 %v3798
          %v3875 = vunpack.c.h.b16 %v3795
          %v3876 = vunpack.c.h.b16 %v3796
          %v3877 = vunpack.c.h.b16 %v3797
          %v3878 = vunpack.c.h.b16 %v3798
          %v3879 = vunpack.c.l.b16 %v3799
          %v3880 = vunpack.c.l.b16 %v3800
          %v3881 = vunpack.c.l.b16 %v3801
          %v3882 = vunpack.c.l.b16 %v3802
          %v3883 = vunpack.c.h.b16 %v3799
          %v3884 = vunpack.c.h.b16 %v3800
          %v3885 = vunpack.c.h.b16 %v3801
          %v3886 = vunpack.c.h.b16 %v3802
          %v3887 = vunpack.c.l.b16 %v3803
          %v3888 = vunpack.c.l.b16 %v3804
          %v3889 = vunpack.c.l.b16 %v3805
          %v3890 = vunpack.c.l.b16 %v3806
          %v3891 = vunpack.c.h.b16 %v3803
          %v3892 = vunpack.c.h.b16 %v3804
          %v3893 = vunpack.c.h.b16 %v3805
          %v3894 = vunpack.c.h.b16 %v3806
          %v3895 = vunpack.c.l.b16 %v3807
          %v3896 = vunpack.c.l.b16 %v3808
          %v3897 = vunpack.c.l.b16 %v3809
          %v3898 = vunpack.c.l.b16 %v3810
          %v3899 = vunpack.c.h.b16 %v3807
          %v3900 = vunpack.c.h.b16 %v3808
          %v3901 = vunpack.c.h.b16 %v3809
          %v3902 = vunpack.c.h.b16 %v3810
          %v3903 = vunpack.c.l.b16 %v3811
          %v3904 = vunpack.c.l.b16 %v3812
          %v3905 = vunpack.c.l.b16 %v3813
          %v3906 = vunpack.c.l.b16 %v3814
          %v3907 = vunpack.c.h.b16 %v3811
          %v3908 = vunpack.c.h.b16 %v3812
          %v3909 = vunpack.c.h.b16 %v3813
          %v3910 = vunpack.c.h.b16 %v3814
          %v3911 = vpack.c.b16 %v3848, %v3847
          %v3912 = vpack.c.b16 %v3850, %v3849
          %v3913 = vpack.c.b16 %v3852, %v3851
          %v3914 = vpack.c.b16 %v3854, %v3853
          %v3915 = vpack.c.b16 %v3856, %v3855
          %v3916 = vpack.c.b16 %v3858, %v3857
          %v3917 = vpack.c.b16 %v3860, %v3859
          %v3918 = vpack.c.b16 %v3862, %v3861
          %v3919 = vpack.c.b16 %v3864, %v3863
          %v3920 = vpack.c.b16 %v3866, %v3865
          %v3921 = vpack.c.b16 %v3868, %v3867
          %v3922 = vpack.c.b16 %v3870, %v3869
          %v3923 = vpack.c.b16 %v3872, %v3871
          %v3924 = vpack.c.b16 %v3874, %v3873
          %v3925 = vpack.c.b16 %v3876, %v3875
          %v3926 = vpack.c.b16 %v3878, %v3877
          %v3927 = vpack.c.b16 %v3880, %v3879
          %v3928 = vpack.c.b16 %v3882, %v3881
          %v3929 = vpack.c.b16 %v3884, %v3883
          %v3930 = vpack.c.b16 %v3886, %v3885
          %v3931 = vpack.c.b16 %v3888, %v3887
          %v3932 = vpack.c.b16 %v3890, %v3889
          %v3933 = vpack.c.b16 %v3892, %v3891
          %v3934 = vpack.c.b16 %v3894, %v3893
          %v3935 = vpack.c.b16 %v3896, %v3895
          %v3936 = vpack.c.b16 %v3898, %v3897
          %v3937 = vpack.c.b16 %v3900, %v3899
          %v3938 = vpack.c.b16 %v3902, %v3901
          %v3939 = vpack.c.b16 %v3904, %v3903
          %v3940 = vpack.c.b16 %v3906, %v3905
          %v3941 = vpack.c.b16 %v3908, %v3907
          %v3942 = vpack.c.b16 %v3910, %v3909
          %3975 = vst [vmem:[%s884] sm:$0xff] %v3911
          %3976 = vst [vmem:[%s884 + $0x8] sm:$0xff] %v3912
          %3977 = vst [vmem:[%s884 + $0x10] sm:$0xff] %v3913
          %3978 = vst [vmem:[%s884 + $0x18] sm:$0xff] %v3914
          %3979 = vst [vmem:[%s884 + $0x20] sm:$0xff] %v3915
          %3980 = vst [vmem:[%s884 + $0x28] sm:$0xff] %v3916
          %3981 = vst [vmem:[%s884 + $0x30] sm:$0xff] %v3917
          %3982 = vst [vmem:[%s884 + $0x38] sm:$0xff] %v3918
          %3983 = vst [vmem:[%s884 + $0x40] sm:$0xff] %v3919
          %3984 = vst [vmem:[%s884 + $0x48] sm:$0xff] %v3920
          %3985 = vst [vmem:[%s884 + $0x50] sm:$0xff] %v3921
          %3986 = vst [vmem:[%s884 + $0x58] sm:$0xff] %v3922
          %3987 = vst [vmem:[%s884 + $0x60] sm:$0xff] %v3923
          %3988 = vst [vmem:[%s884 + $0x68] sm:$0xff] %v3924
          %3989 = vst [vmem:[%s884 + $0x70] sm:$0xff] %v3925
          %3990 = vst [vmem:[%s884 + $0x78] sm:$0xff] %v3926
          %3991 = vst [vmem:[%s884 + $0x80] sm:$0xff] %v3927
          %3992 = vst [vmem:[%s884 + $0x88] sm:$0xff] %v3928
          %3993 = vst [vmem:[%s884 + $0x90] sm:$0xff] %v3929
          %3994 = vst [vmem:[%s884 + $0x98] sm:$0xff] %v3930
          %3995 = vst [vmem:[%s884 + $0xa0] sm:$0xff] %v3931
          %3996 = vst [vmem:[%s884 + $0xa8] sm:$0xff] %v3932
          %3997 = vst [vmem:[%s884 + $0xb0] sm:$0xff] %v3933
          %3998 = vst [vmem:[%s884 + $0xb8] sm:$0xff] %v3934
          %3999 = vst [vmem:[%s884 + $0xc0] sm:$0xff] %v3935
          %4000 = vst [vmem:[%s884 + $0xc8] sm:$0xff] %v3936
          %4001 = vst [vmem:[%s884 + $0xd0] sm:$0xff] %v3937
          %4002 = vst [vmem:[%s884 + $0xd8] sm:$0xff] %v3938
          %4003 = vst [vmem:[%s884 + $0xe0] sm:$0xff] %v3939
          %4004 = vst [vmem:[%s884 + $0xe8] sm:$0xff] %v3940
          %4005 = vst [vmem:[%s884 + $0xf0] sm:$0xff] %v3941
          %4006 = vst [vmem:[%s884 + $0xf8] sm:$0xff] %v3942
        $region138: #{multvae_forward.1} parent=113 // pred_fallthru
          _
        %s4007 = sand.u32 %s403, 1
        %s4008 = scalar_lea.sflag [#allocation8], %s4007
        %s4009 = sand.u32 %s403, 1
        %s4010 = smul.addr %s4009, 256
        %s4011 = scalar_lea.vmem [#allocation7], %s4010
        %s4012 = sand.u32 %s34, 1
        %s4013 = scalar_lea.sflag [#allocation10], %s4012
        %s4014 = sand.u32 %s429, 1
        %s4015 = smul.addr %s4014, 128
        %s4016 = scalar_lea.vmem [#allocation9], %s4015
        %s4017 = sand.u32 %s34, 1
        %s4018 = scalar_lea.sflag [#allocation10], %s4017
        %s4019 = sand.u32 %s455, 1
        %s4020 = smul.addr %s4019, 128
        %s4021 = scalar_lea.vmem [#allocation11], %s4020
        // Predicated region
        $region139: #{multvae_forward.1} parent=113 // pred_check
          %p4022 = pneg %p413
        $region140: #{multvae_forward.1} parent=113 // pred_check_branch
          %4024 = sbr.rel (%p4022) target = $region142
        $region141: #{multvae_forward.1} parent=113 // pred_region
          %s4025 = ssub.s32 %s39, 2
          %p4026 = scmp.gt.s32.totalorder %s4025, 0
          %s4027 = scalar_select %p4026, %s4025, 0
          %s4028 = smul.u32 16, %s38
          %s4029 = smul.u32 4, %s4027
          %s4031 = ssub.s32 4096, 4096
          %4032 = vsyncadd %s4008, %s4031
          %s4033 = smul.addr %s4028, 8
          %s4034 = sadd.s32 %s4029, %s4033
          %s4035 = smul.addr %s4034, 64
          %s4036 = scalar_lea.hbm %s14, %s4035
          %s4037 = sshll.u32 %s4011, 4
          %s4038 = int_to_ptr.vmem [resolvable:$true] %s4037
          %4043 = dma.vmem_to_hbm [thread:$0]  %s4038, 4096, %s4036, %s4008, 256, 512, 16
        $region142: #{multvae_forward.1} parent=113 // pred_fallthru
          _
        // Predicated region
        $region143: #{multvae_forward.1} parent=113 // pred_check
          %p4044 = pneg %p439
        $region144: #{multvae_forward.1} parent=113 // pred_check_branch
          %4046 = sbr.rel (%p4044) target = $region146
        $region145: #{multvae_forward.1} parent=113 // pred_region
          %s4047 = smul.u32 16, %s38
          %s4049 = ssub.s32 2048, 2048
          %4050 = vsyncadd %s4013, %s4049
          %s4051 = smul.addr %s4047, 128
          %s4052 = scalar_lea.hbm %s15, %s4051
          %s4053 = sshll.u32 %s4016, 4
          %s4054 = int_to_ptr.vmem [resolvable:$true] %s4053
          %4059 = dma.vmem_to_hbm [thread:$0]  %s4054, 2048, %s4052, %s4013, 128, 128, 8
        $region146: #{multvae_forward.1} parent=113 // pred_fallthru
          _
        // Predicated region
        $region147: #{multvae_forward.1} parent=113 // pred_check
          %p4060 = pneg %p465
        $region148: #{multvae_forward.1} parent=113 // pred_check_branch
          %4062 = sbr.rel (%p4060) target = $region150
        $region149: #{multvae_forward.1} parent=113 // pred_region
          %s4063 = smul.u32 16, %s38
          %s4065 = ssub.s32 2048, 2048
          %4066 = vsyncadd %s4018, %s4065
          %s4067 = smul.addr %s4063, 128
          %s4068 = scalar_lea.hbm %s16, %s4067
          %s4069 = sshll.u32 %s4021, 4
          %s4070 = int_to_ptr.vmem [resolvable:$true] %s4069
          %4075 = dma.vmem_to_hbm [thread:$0]  %s4070, 2048, %s4068, %s4018, 128, 128, 8
        $region150: #{multvae_forward.1} parent=113 // pred_fallthru
          _
      $region114: #{multvae_forward.1} parent=5 // pred_fallthru
        _
      %p4076 = scmp.le.s32.totalorder 2, %s29
      // Predicated region
      $region151: #{multvae_forward.1} parent=5 // pred_check
        %p4077 = pneg %p4076
      $region152: #{multvae_forward.1} parent=5 // pred_check_branch
        %4079 = sbr.rel (%p4077) target = $region154
      $region153: #{multvae_forward.1} parent=5 // pred_region
        %s4080 = ssub.s32 %s29, 2
        // Predicated region
        $region155: #{multvae_forward.1} parent=153 // pred_check
          %p4081 = pneg %p419
        $region156: #{multvae_forward.1} parent=153 // pred_check_branch
          %4083 = sbr.rel (%p4081) target = $region158
        $region157: #{multvae_forward.1} parent=153 // pred_region
          %s4084 = sand.u32 %s404, 1
          %s4085 = scalar_lea.sflag [#allocation8], %s4084
          %s4086 = sand.u32 %s404, 1
          %s4087 = smul.addr %s4086, 256
          %s4088 = scalar_lea.vmem [#allocation7], %s4087
          %4089 = dma.done %s4085, 4096
        $region158: #{multvae_forward.1} parent=153 // pred_fallthru
          _
        // Predicated region
        $region159: #{multvae_forward.1} parent=153 // pred_check
          %p4090 = pneg %p445
        $region160: #{multvae_forward.1} parent=153 // pred_check_branch
          %4092 = sbr.rel (%p4090) target = $region162
        $region161: #{multvae_forward.1} parent=153 // pred_region
          %s4093 = sand.u32 %s35, 1
          %s4094 = scalar_lea.sflag [#allocation10], %s4093
          %s4095 = sand.u32 %s430, 1
          %s4096 = smul.addr %s4095, 128
          %s4097 = scalar_lea.vmem [#allocation9], %s4096
          %4098 = dma.done %s4094, 2048
        $region162: #{multvae_forward.1} parent=153 // pred_fallthru
          _
        // Predicated region
        $region163: #{multvae_forward.1} parent=153 // pred_check
          %p4099 = pneg %p471
        $region164: #{multvae_forward.1} parent=153 // pred_check_branch
          %4101 = sbr.rel (%p4099) target = $region166
        $region165: #{multvae_forward.1} parent=153 // pred_region
          %s4102 = sand.u32 %s35, 1
          %s4103 = scalar_lea.sflag [#allocation10], %s4102
          %s4104 = sand.u32 %s456, 1
          %s4105 = smul.addr %s4104, 128
          %s4106 = scalar_lea.vmem [#allocation11], %s4105
          %4107 = dma.done %s4103, 2048
        $region166: #{multvae_forward.1} parent=153 // pred_fallthru
          _
      $region154: #{multvae_forward.1} parent=5 // pred_fallthru
        _
    $region6: #{multvae_forward.1} parent=1 // loop_footer
      %s33 = sadd.s32 1, %s29
    $region7: #{multvae_forward.1} parent=1 // loop_footer_branch
      %28 = sbr.rel target = $region3
    $region8: #{multvae_forward.1} parent=1 // loop_exit
      _
    %4108 = vsyncpa [#allocation8], 1
    %s4109 = scalar_lea.sflag [#allocation8], 1
    %4110 = vsyncpa %s4109, 1
    %4111 = vsyncpa [#allocation10], 1
    %s4112 = scalar_lea.sflag [#allocation10], 1
    %4113 = vsyncpa %s4112, 1

</llo_original>
